<compile_context>
chip_gen: v7x
topology: tpu7x:2x2x1
jax: 0.10.0
libtpu: 0.0.40
codegen_flags: <defaults>
</compile_context>

<pallas_src>
import functools

import jax
import jax.numpy as jnp
from jax.experimental import pallas as pl
from jax.experimental.pallas import tpu as pltpu

D = 2                    # module default
HALF = D // 2            # = 1
M = 128                  # hidden width of the s / t MLPs (lane-aligned)
M2 = 2 * M               # fused s+t hidden width
NUM_FLOWS = 4
NEG_SLOPE = 0.01         # nn.LeakyReLU default negative_slope
LOG_2PI = 1.8378770664093453
BATCH = 200              # demo batch (small; exercises >1 grid block + padding)
TB_DEFAULT = 128         # batch rows per grid block


def _leaky_relu(h):
    return jnp.where(h > 0, h, NEG_SLOPE * h)


def realnvp_kernel(x_ref, w1_ref, w2_ref, b2_ref, w3_ref, b3_ref, nll_ref,
                   *, num_flows):
    x = x_ref[...].astype(jnp.float32)                    # (TB, 2)
    tb = x.shape[0]
    a_col = x[:, 0:HALF]                                  # (TB, 1)  "xa"
    b_col = x[:, HALF:D]                                  # (TB, 1)  "xb"
    ones = jnp.ones((tb, HALF), jnp.float32)              # bias-carrier column
    log_det = jnp.zeros((tb, 1), jnp.float32)

    for i in range(num_flows):                            # flows are sequential (static unroll)
        # Fused s/t MLP: a single MXU matmul chain produces [s_pre | t].
        u = jnp.concatenate([a_col, ones], axis=1)        # (TB, 2) = [xa, 1]
        h = jnp.dot(u, w1_ref[i], preferred_element_type=jnp.float32)   # (TB, 2M), bias folded in
        h = _leaky_relu(h)
        h = jnp.dot(h, w2_ref[i], preferred_element_type=jnp.float32)   # (TB, 2M), block-diag
        h = _leaky_relu(h + b2_ref[i])
        o = jnp.dot(h, w3_ref[i], preferred_element_type=jnp.float32)   # (TB, 2)
        o = o + b3_ref[i]
        s = jnp.tanh(o[:, 0:1])                           # s-net has the final Tanh
        t = o[:, 1:2]                                     # t-net does not
        yb = (b_col - t) * jnp.exp(-s)                    # forward coupling
        # coupling output is cat(xa, yb); permute = flip(dim=1) -> (yb, xa) for D=2
        a_col, b_col = yb, a_col
        log_det = log_det - s                             # == s.sum(dim=1); s has one column

    # prior.log_prob(z) for a standard MultivariateNormal(0, I_D)
    log_pz = -0.5 * (a_col * a_col + b_col * b_col) - 0.5 * D * LOG_2PI  # (TB, 1)
    nll_ref[...] = -(log_pz + log_det)                                    # (TB, 1)


def pack_params(params):
    """Fuse per-flow s/t MLP weights into single matmul operands (all MXU)."""
    sW1, sb1, sW2, sb2, sW3, sb3, tW1, tb1, tW2, tb2, tW3, tb3 = params
    F, m = sW1.shape
    # layer 1: augmented (2, 2M): row 0 = weights applied to xa, row 1 = biases
    w_row = jnp.concatenate([sW1, tW1], axis=1)                      # (F, 2M)
    b_row = jnp.concatenate([sb1, tb1], axis=1)                      # (F, 2M)
    W1c = jnp.stack([w_row, b_row], axis=1)                          # (F, 2, 2M)
    # layer 2: block-diagonal (2M, 2M)
    z = jnp.zeros((F, m, m), jnp.float32)
    W2c = jnp.concatenate(
        [jnp.concatenate([sW2, z], axis=2),
         jnp.concatenate([z, tW2], axis=2)], axis=1)                 # (F, 2M, 2M)
    b2c = jnp.concatenate([sb2, tb2], axis=1)[:, None, :]            # (F, 1, 2M)
    # layer 3: (2M, 2): column 0 = s head, column 1 = t head
    zc = jnp.zeros_like(sW3)
    W3c = jnp.stack([jnp.concatenate([sW3, zc], axis=1),
                     jnp.concatenate([zc, tW3], axis=1)], axis=2)    # (F, 2M, 2)
    b3c = jnp.concatenate([sb3, tb3], axis=1)[:, None, :]            # (F, 1, 2)
    return W1c, W2c, b2c, W3c, b3c


def realnvp_forward(x, params, *, tb=TB_DEFAULT):
    """-(log p(z) + log|det J|).mean()   (reduction='avg')."""
    B = x.shape[0]
    tb = min(tb, -(-B // 8) * 8)
    tb = max(8, -(-tb // 8) * 8)                # multiple of 8 sublanes
    num_blocks = -(-B // tb)
    b_pad = num_blocks * tb
    x_pad = jnp.pad(x.astype(jnp.float32), ((0, b_pad - B), (0, 0)))

    W1c, W2c, b2c, W3c, b3c = pack_params(params)
    num_flows = W1c.shape[0]

    def const3(i):
        return (0, 0, 0)

    kernel = functools.partial(realnvp_kernel, num_flows=num_flows)
    nll = pl.pallas_call(
        kernel,
        out_shape=jax.ShapeDtypeStruct((b_pad, 1), jnp.float32),
        grid=(num_blocks,),
        in_specs=[
            pl.BlockSpec((tb, D), lambda i: (i, 0)),
            pl.BlockSpec(W1c.shape, const3),     # constant index maps: weights are
            pl.BlockSpec(W2c.shape, const3),     #   DMA'd once and stay VMEM-resident
            pl.BlockSpec(b2c.shape, const3),
            pl.BlockSpec(W3c.shape, const3),
            pl.BlockSpec(b3c.shape, const3),
        ],
        out_specs=pl.BlockSpec((tb, 1), lambda i: (i, 0)),
        compiler_params=pltpu.CompilerParams(
            dimension_semantics=("parallel",)),  # batch blocks are independent
    )(x_pad, W1c, W2c, b2c, W3c, b3c)

    return jnp.sum(nll[:B, 0]) / B               # padded rows sliced off; true-B mean


def init_params(key):
    """Deterministic synthetic weights, stacked over flows along axis 0."""
    ks = jax.random.split(key, 12)

    def w(k, shape, fan_in, scale=1.0):
        return (scale * jax.random.normal(k, shape, jnp.float32)
                / jnp.sqrt(jnp.float32(fan_in)))

    F = NUM_FLOWS
    sW1 = w(ks[0], (F, M), HALF)          # Linear(1, M) weight rows
    sb1 = w(ks[1], (F, M), HALF, 0.1)
    sW2 = w(ks[2], (F, M, M), M)          # Linear(M, M)
    sb2 = w(ks[3], (F, M), M, 0.1)
    sW3 = w(ks[4], (F, M), M)             # Linear(M, 1) weight rows
    sb3 = w(ks[5], (F, 1), M, 0.1)
    tW1 = w(ks[6], (F, M), HALF)
    tb1 = w(ks[7], (F, M), HALF, 0.1)
    tW2 = w(ks[8], (F, M, M), M)
    tb2 = w(ks[9], (F, M), M, 0.1)
    tW3 = w(ks[10], (F, M), M)
    tb3 = w(ks[11], (F, 1), M, 0.1)
    return (sW1, sb1, sW2, sb2, sW3, sb3, tW1, tb1, tW2, tb2, tW3, tb3)


def realnvp_ref(x, params):
    """Pure-JAX reference mirroring the PyTorch forward exactly (unfused)."""
    sW1, sb1, sW2, sb2, sW3, sb3, tW1, tb1, tW2, tb2, tW3, tb3 = params

    def mlp(i, xa, W1, b1, W2, b2, W3, b3, tanh_out):
        h = xa * W1[i][None, :] + b1[i][None, :]
        h = jnp.where(h > 0, h, NEG_SLOPE * h)
        h = h @ W2[i] + b2[i][None, :]
        h = jnp.where(h > 0, h, NEG_SLOPE * h)
        o = jnp.sum(h * W3[i][None, :], axis=1, keepdims=True) + b3[i][None, :]
        return jnp.tanh(o) if tanh_out else o

    z = x
    log_det = jnp.zeros((x.shape[0],), jnp.float32)
    for i in range(NUM_FLOWS):
        xa, xb = z[:, :HALF], z[:, HALF:]
        s = mlp(i, xa, sW1, sb1, sW2, sb2, sW3, sb3, True)
        t = mlp(i, xa, tW1, tb1, tW2, tb2, tW3, tb3, False)
        yb = (xb - t) * jnp.exp(-s)
        z = jnp.flip(jnp.concatenate([xa, yb], axis=1), axis=1)   # coupling + permute
        log_det = log_det - jnp.sum(s, axis=1)
    log_pz = -0.5 * jnp.sum(z * z, axis=1) - 0.5 * D * LOG_2PI
    return jnp.mean(-(log_pz + log_det))


if __name__ == "__main__":
    key = jax.random.PRNGKey(0)
    kx, kp = jax.random.split(key)
    x = jax.random.normal(kx, (BATCH, D), jnp.float32)
    params = init_params(kp)

    loss = jax.block_until_ready(realnvp_forward(x, params))

    ref = realnvp_ref(x, params)
    assert jnp.allclose(loss, ref, atol=1e-4, rtol=1e-4), (loss, ref)
    print("KERNEL_OK")
</pallas_src>

<mosaic_0001>
module attributes {stable_mosaic.version = 11 : i64} {
  func.func @realnvp_kernel(%arg0: i32, %arg1: memref<128x2xf32, #tpu.memory_space<vmem>>, %arg2: memref<4x2x256xf32, #tpu.memory_space<vmem>>, %arg3: memref<4x256x256xf32, #tpu.memory_space<vmem>>, %arg4: memref<4x1x256xf32, #tpu.memory_space<vmem>>, %arg5: memref<4x256x2xf32, #tpu.memory_space<vmem>>, %arg6: memref<4x1x2xf32, #tpu.memory_space<vmem>>, %arg7: memref<128x1xf32, #tpu.memory_space<vmem>>) attributes {dimension_semantics = [#tpu.dimension_semantics<parallel>], iteration_bounds = array<i64: 2>, scalar_prefetch = 0 : i64, scratch_operands = 0 : i64, tpu.core_type = #tpu.core_type<tc>, window_params = [{transform_indices = @transform_0, window_bounds = array<i64: 128, 2>}, {pipeline_mode = #tpu.pipeline_mode<synchronous>, transform_indices = @transform_1, window_bounds = array<i64: 4, 2, 256>}, {pipeline_mode = #tpu.pipeline_mode<synchronous>, transform_indices = @transform_2, window_bounds = array<i64: 4, 256, 256>}, {pipeline_mode = #tpu.pipeline_mode<synchronous>, transform_indices = @transform_3, window_bounds = array<i64: 4, 1, 256>}, {pipeline_mode = #tpu.pipeline_mode<synchronous>, transform_indices = @transform_4, window_bounds = array<i64: 4, 256, 2>}, {pipeline_mode = #tpu.pipeline_mode<synchronous>, transform_indices = @transform_5, window_bounds = array<i64: 4, 1, 2>}, {transform_indices = @transform_6, window_bounds = array<i64: 128, 1>}]} {
    %c0 = arith.constant 0 : index
    %c0_0 = arith.constant 0 : index
    %0 = vector.load %arg1[%c0, %c0_0] : memref<128x2xf32, #tpu.memory_space<vmem>>, vector<128x2xf32>
    %1 = vector.extract_strided_slice %0 {offsets = [0, 0], sizes = [128, 1], strides = [1, 1]} : vector<128x2xf32> to vector<128x1xf32>
    %2 = vector.extract_strided_slice %0 {offsets = [0, 1], sizes = [128, 1], strides = [1, 1]} : vector<128x2xf32> to vector<128x1xf32>
    %cst = arith.constant 1.000000e+00 : f32
    %3 = vector.broadcast %cst : f32 to vector<128x1xf32>
    %cst_1 = arith.constant 0.000000e+00 : f32
    %4 = vector.broadcast %cst_1 : f32 to vector<128x1xf32>
    %5 = tpu.concatenate %1, %3 in 1 : vector<128x1xf32>, vector<128x1xf32> -> vector<128x2xf32>
    %c0_2 = arith.constant 0 : index
    %c0_3 = arith.constant 0 : index
    %c0_4 = arith.constant 0 : index
    %6 = vector.load %arg2[%c0_2, %c0_3, %c0_4] : memref<4x2x256xf32, #tpu.memory_space<vmem>>, vector<1x2x256xf32>
    %7 = vector.shape_cast %6 : vector<1x2x256xf32> to vector<2x256xf32>
    %cst_5 = arith.constant dense<0.000000e+00> : vector<128x256xf32>
    %8 = tpu.matmul %5, %7, %cst_5 {dimension_numbers = #tpu.dot_dimension_numbers<[1], [0], [0], [1], [0, 0, 1, 1], [], []>} : vector<128x2xf32>, vector<2x256xf32>, vector<128x256xf32> -> vector<128x256xf32>
    %cst_6 = arith.constant 0.000000e+00 : f32
    %9 = vector.broadcast %cst_6 : f32 to vector<128x256xf32>
    %10 = arith.cmpf ogt, %8, %9 : vector<128x256xf32>
    %cst_7 = arith.constant 0.00999999977 : f32
    %11 = vector.broadcast %cst_7 : f32 to vector<128x256xf32>
    %12 = arith.mulf %11, %8 : vector<128x256xf32>
    %13 = arith.select %10, %8, %12 : vector<128x256xi1>, vector<128x256xf32>
    %c0_8 = arith.constant 0 : index
    %c0_9 = arith.constant 0 : index
    %c0_10 = arith.constant 0 : index
    %14 = vector.load %arg3[%c0_8, %c0_9, %c0_10] : memref<4x256x256xf32, #tpu.memory_space<vmem>>, vector<1x256x256xf32>
    %15 = vector.shape_cast %14 : vector<1x256x256xf32> to vector<256x256xf32>
    %cst_11 = arith.constant dense<0.000000e+00> : vector<128x256xf32>
    %16 = tpu.matmul %13, %15, %cst_11 {dimension_numbers = #tpu.dot_dimension_numbers<[1], [0], [0], [1], [0, 0, 1, 1], [], []>} : vector<128x256xf32>, vector<256x256xf32>, vector<128x256xf32> -> vector<128x256xf32>
    %c0_12 = arith.constant 0 : index
    %c0_13 = arith.constant 0 : index
    %c0_14 = arith.constant 0 : index
    %17 = vector.load %arg4[%c0_12, %c0_13, %c0_14] : memref<4x1x256xf32, #tpu.memory_space<vmem>>, vector<1x1x256xf32>
    %18 = vector.shape_cast %17 : vector<1x1x256xf32> to vector<1x256xf32>
    %19 = vector.broadcast %18 : vector<1x256xf32> to vector<128x256xf32>
    %20 = arith.addf %16, %19 : vector<128x256xf32>
    %cst_15 = arith.constant 0.000000e+00 : f32
    %21 = vector.broadcast %cst_15 : f32 to vector<128x256xf32>
    %22 = arith.cmpf ogt, %20, %21 : vector<128x256xf32>
    %cst_16 = arith.constant 0.00999999977 : f32
    %23 = vector.broadcast %cst_16 : f32 to vector<128x256xf32>
    %24 = arith.mulf %23, %20 : vector<128x256xf32>
    %25 = arith.select %22, %20, %24 : vector<128x256xi1>, vector<128x256xf32>
    %c0_17 = arith.constant 0 : index
    %c0_18 = arith.constant 0 : index
    %c0_19 = arith.constant 0 : index
    %26 = vector.load %arg5[%c0_17, %c0_18, %c0_19] : memref<4x256x2xf32, #tpu.memory_space<vmem>>, vector<1x256x2xf32>
    %27 = vector.shape_cast %26 : vector<1x256x2xf32> to vector<256x2xf32>
    %cst_20 = arith.constant dense<0.000000e+00> : vector<128x2xf32>
    %28 = tpu.matmul %25, %27, %cst_20 {dimension_numbers = #tpu.dot_dimension_numbers<[1], [0], [0], [1], [0, 0, 1, 1], [], []>} : vector<128x256xf32>, vector<256x2xf32>, vector<128x2xf32> -> vector<128x2xf32>
    %c0_21 = arith.constant 0 : index
    %c0_22 = arith.constant 0 : index
    %c0_23 = arith.constant 0 : index
    %29 = vector.load %arg6[%c0_21, %c0_22, %c0_23] : memref<4x1x2xf32, #tpu.memory_space<vmem>>, vector<1x1x2xf32>
    %30 = vector.shape_cast %29 : vector<1x1x2xf32> to vector<1x2xf32>
    %31 = vector.broadcast %30 : vector<1x2xf32> to vector<128x2xf32>
    %32 = arith.addf %28, %31 : vector<128x2xf32>
    %33 = vector.extract_strided_slice %32 {offsets = [0, 0], sizes = [128, 1], strides = [1, 1]} : vector<128x2xf32> to vector<128x1xf32>
    %34 = math.tanh %33 : vector<128x1xf32>
    %35 = vector.extract_strided_slice %32 {offsets = [0, 1], sizes = [128, 1], strides = [1, 1]} : vector<128x2xf32> to vector<128x1xf32>
    %36 = arith.subf %2, %35 : vector<128x1xf32>
    %cst_24 = arith.constant 0.000000e+00 : f32
    %37 = vector.broadcast %cst_24 : f32 to vector<128x1xf32>
    %38 = arith.subf %37, %34 : vector<128x1xf32>
    %39 = math.exp %38 : vector<128x1xf32>
    %40 = arith.mulf %36, %39 : vector<128x1xf32>
    %41 = arith.subf %4, %34 : vector<128x1xf32>
    %42 = tpu.concatenate %40, %3 in 1 : vector<128x1xf32>, vector<128x1xf32> -> vector<128x2xf32>
    %c1 = arith.constant 1 : index
    %c0_25 = arith.constant 0 : index
    %c0_26 = arith.constant 0 : index
    %43 = vector.load %arg2[%c1, %c0_25, %c0_26] : memref<4x2x256xf32, #tpu.memory_space<vmem>>, vector<1x2x256xf32>
    %44 = vector.shape_cast %43 : vector<1x2x256xf32> to vector<2x256xf32>
    %cst_27 = arith.constant dense<0.000000e+00> : vector<128x256xf32>
    %45 = tpu.matmul %42, %44, %cst_27 {dimension_numbers = #tpu.dot_dimension_numbers<[1], [0], [0], [1], [0, 0, 1, 1], [], []>} : vector<128x2xf32>, vector<2x256xf32>, vector<128x256xf32> -> vector<128x256xf32>
    %cst_28 = arith.constant 0.000000e+00 : f32
    %46 = vector.broadcast %cst_28 : f32 to vector<128x256xf32>
    %47 = arith.cmpf ogt, %45, %46 : vector<128x256xf32>
    %cst_29 = arith.constant 0.00999999977 : f32
    %48 = vector.broadcast %cst_29 : f32 to vector<128x256xf32>
    %49 = arith.mulf %48, %45 : vector<128x256xf32>
    %50 = arith.select %47, %45, %49 : vector<128x256xi1>, vector<128x256xf32>
    %c1_30 = arith.constant 1 : index
    %c0_31 = arith.constant 0 : index
    %c0_32 = arith.constant 0 : index
    %51 = vector.load %arg3[%c1_30, %c0_31, %c0_32] : memref<4x256x256xf32, #tpu.memory_space<vmem>>, vector<1x256x256xf32>
    %52 = vector.shape_cast %51 : vector<1x256x256xf32> to vector<256x256xf32>
    %cst_33 = arith.constant dense<0.000000e+00> : vector<128x256xf32>
    %53 = tpu.matmul %50, %52, %cst_33 {dimension_numbers = #tpu.dot_dimension_numbers<[1], [0], [0], [1], [0, 0, 1, 1], [], []>} : vector<128x256xf32>, vector<256x256xf32>, vector<128x256xf32> -> vector<128x256xf32>
    %c1_34 = arith.constant 1 : index
    %c0_35 = arith.constant 0 : index
    %c0_36 = arith.constant 0 : index
    %54 = vector.load %arg4[%c1_34, %c0_35, %c0_36] : memref<4x1x256xf32, #tpu.memory_space<vmem>>, vector<1x1x256xf32>
    %55 = vector.shape_cast %54 : vector<1x1x256xf32> to vector<1x256xf32>
    %56 = vector.broadcast %55 : vector<1x256xf32> to vector<128x256xf32>
    %57 = arith.addf %53, %56 : vector<128x256xf32>
    %cst_37 = arith.constant 0.000000e+00 : f32
    %58 = vector.broadcast %cst_37 : f32 to vector<128x256xf32>
    %59 = arith.cmpf ogt, %57, %58 : vector<128x256xf32>
    %cst_38 = arith.constant 0.00999999977 : f32
    %60 = vector.broadcast %cst_38 : f32 to vector<128x256xf32>
    %61 = arith.mulf %60, %57 : vector<128x256xf32>
    %62 = arith.select %59, %57, %61 : vector<128x256xi1>, vector<128x256xf32>
    %c1_39 = arith.constant 1 : index
    %c0_40 = arith.constant 0 : index
    %c0_41 = arith.constant 0 : index
    %63 = vector.load %arg5[%c1_39, %c0_40, %c0_41] : memref<4x256x2xf32, #tpu.memory_space<vmem>>, vector<1x256x2xf32>
    %64 = vector.shape_cast %63 : vector<1x256x2xf32> to vector<256x2xf32>
    %cst_42 = arith.constant dense<0.000000e+00> : vector<128x2xf32>
    %65 = tpu.matmul %62, %64, %cst_42 {dimension_numbers = #tpu.dot_dimension_numbers<[1], [0], [0], [1], [0, 0, 1, 1], [], []>} : vector<128x256xf32>, vector<256x2xf32>, vector<128x2xf32> -> vector<128x2xf32>
    %c1_43 = arith.constant 1 : index
    %c0_44 = arith.constant 0 : index
    %c0_45 = arith.constant 0 : index
    %66 = vector.load %arg6[%c1_43, %c0_44, %c0_45] : memref<4x1x2xf32, #tpu.memory_space<vmem>>, vector<1x1x2xf32>
    %67 = vector.shape_cast %66 : vector<1x1x2xf32> to vector<1x2xf32>
    %68 = vector.broadcast %67 : vector<1x2xf32> to vector<128x2xf32>
    %69 = arith.addf %65, %68 : vector<128x2xf32>
    %70 = vector.extract_strided_slice %69 {offsets = [0, 0], sizes = [128, 1], strides = [1, 1]} : vector<128x2xf32> to vector<128x1xf32>
    %71 = math.tanh %70 : vector<128x1xf32>
    %72 = vector.extract_strided_slice %69 {offsets = [0, 1], sizes = [128, 1], strides = [1, 1]} : vector<128x2xf32> to vector<128x1xf32>
    %73 = arith.subf %1, %72 : vector<128x1xf32>
    %cst_46 = arith.constant 0.000000e+00 : f32
    %74 = vector.broadcast %cst_46 : f32 to vector<128x1xf32>
    %75 = arith.subf %74, %71 : vector<128x1xf32>
    %76 = math.exp %75 : vector<128x1xf32>
    %77 = arith.mulf %73, %76 : vector<128x1xf32>
    %78 = arith.subf %41, %71 : vector<128x1xf32>
    %79 = tpu.concatenate %77, %3 in 1 : vector<128x1xf32>, vector<128x1xf32> -> vector<128x2xf32>
    %c2 = arith.constant 2 : index
    %c0_47 = arith.constant 0 : index
    %c0_48 = arith.constant 0 : index
    %80 = vector.load %arg2[%c2, %c0_47, %c0_48] : memref<4x2x256xf32, #tpu.memory_space<vmem>>, vector<1x2x256xf32>
    %81 = vector.shape_cast %80 : vector<1x2x256xf32> to vector<2x256xf32>
    %cst_49 = arith.constant dense<0.000000e+00> : vector<128x256xf32>
    %82 = tpu.matmul %79, %81, %cst_49 {dimension_numbers = #tpu.dot_dimension_numbers<[1], [0], [0], [1], [0, 0, 1, 1], [], []>} : vector<128x2xf32>, vector<2x256xf32>, vector<128x256xf32> -> vector<128x256xf32>
    %cst_50 = arith.constant 0.000000e+00 : f32
    %83 = vector.broadcast %cst_50 : f32 to vector<128x256xf32>
    %84 = arith.cmpf ogt, %82, %83 : vector<128x256xf32>
    %cst_51 = arith.constant 0.00999999977 : f32
    %85 = vector.broadcast %cst_51 : f32 to vector<128x256xf32>
    %86 = arith.mulf %85, %82 : vector<128x256xf32>
    %87 = arith.select %84, %82, %86 : vector<128x256xi1>, vector<128x256xf32>
    %c2_52 = arith.constant 2 : index
    %c0_53 = arith.constant 0 : index
    %c0_54 = arith.constant 0 : index
    %88 = vector.load %arg3[%c2_52, %c0_53, %c0_54] : memref<4x256x256xf32, #tpu.memory_space<vmem>>, vector<1x256x256xf32>
    %89 = vector.shape_cast %88 : vector<1x256x256xf32> to vector<256x256xf32>
    %cst_55 = arith.constant dense<0.000000e+00> : vector<128x256xf32>
    %90 = tpu.matmul %87, %89, %cst_55 {dimension_numbers = #tpu.dot_dimension_numbers<[1], [0], [0], [1], [0, 0, 1, 1], [], []>} : vector<128x256xf32>, vector<256x256xf32>, vector<128x256xf32> -> vector<128x256xf32>
    %c2_56 = arith.constant 2 : index
    %c0_57 = arith.constant 0 : index
    %c0_58 = arith.constant 0 : index
    %91 = vector.load %arg4[%c2_56, %c0_57, %c0_58] : memref<4x1x256xf32, #tpu.memory_space<vmem>>, vector<1x1x256xf32>
    %92 = vector.shape_cast %91 : vector<1x1x256xf32> to vector<1x256xf32>
    %93 = vector.broadcast %92 : vector<1x256xf32> to vector<128x256xf32>
    %94 = arith.addf %90, %93 : vector<128x256xf32>
    %cst_59 = arith.constant 0.000000e+00 : f32
    %95 = vector.broadcast %cst_59 : f32 to vector<128x256xf32>
    %96 = arith.cmpf ogt, %94, %95 : vector<128x256xf32>
    %cst_60 = arith.constant 0.00999999977 : f32
    %97 = vector.broadcast %cst_60 : f32 to vector<128x256xf32>
    %98 = arith.mulf %97, %94 : vector<128x256xf32>
    %99 = arith.select %96, %94, %98 : vector<128x256xi1>, vector<128x256xf32>
    %c2_61 = arith.constant 2 : index
    %c0_62 = arith.constant 0 : index
    %c0_63 = arith.constant 0 : index
    %100 = vector.load %arg5[%c2_61, %c0_62, %c0_63] : memref<4x256x2xf32, #tpu.memory_space<vmem>>, vector<1x256x2xf32>
    %101 = vector.shape_cast %100 : vector<1x256x2xf32> to vector<256x2xf32>
    %cst_64 = arith.constant dense<0.000000e+00> : vector<128x2xf32>
    %102 = tpu.matmul %99, %101, %cst_64 {dimension_numbers = #tpu.dot_dimension_numbers<[1], [0], [0], [1], [0, 0, 1, 1], [], []>} : vector<128x256xf32>, vector<256x2xf32>, vector<128x2xf32> -> vector<128x2xf32>
    %c2_65 = arith.constant 2 : index
    %c0_66 = arith.constant 0 : index
    %c0_67 = arith.constant 0 : index
    %103 = vector.load %arg6[%c2_65, %c0_66, %c0_67] : memref<4x1x2xf32, #tpu.memory_space<vmem>>, vector<1x1x2xf32>
    %104 = vector.shape_cast %103 : vector<1x1x2xf32> to vector<1x2xf32>
    %105 = vector.broadcast %104 : vector<1x2xf32> to vector<128x2xf32>
    %106 = arith.addf %102, %105 : vector<128x2xf32>
    %107 = vector.extract_strided_slice %106 {offsets = [0, 0], sizes = [128, 1], strides = [1, 1]} : vector<128x2xf32> to vector<128x1xf32>
    %108 = math.tanh %107 : vector<128x1xf32>
    %109 = vector.extract_strided_slice %106 {offsets = [0, 1], sizes = [128, 1], strides = [1, 1]} : vector<128x2xf32> to vector<128x1xf32>
    %110 = arith.subf %40, %109 : vector<128x1xf32>
    %cst_68 = arith.constant 0.000000e+00 : f32
    %111 = vector.broadcast %cst_68 : f32 to vector<128x1xf32>
    %112 = arith.subf %111, %108 : vector<128x1xf32>
    %113 = math.exp %112 : vector<128x1xf32>
    %114 = arith.mulf %110, %113 : vector<128x1xf32>
    %115 = arith.subf %78, %108 : vector<128x1xf32>
    %116 = tpu.concatenate %114, %3 in 1 : vector<128x1xf32>, vector<128x1xf32> -> vector<128x2xf32>
    %c3 = arith.constant 3 : index
    %c0_69 = arith.constant 0 : index
    %c0_70 = arith.constant 0 : index
    %117 = vector.load %arg2[%c3, %c0_69, %c0_70] : memref<4x2x256xf32, #tpu.memory_space<vmem>>, vector<1x2x256xf32>
    %118 = vector.shape_cast %117 : vector<1x2x256xf32> to vector<2x256xf32>
    %cst_71 = arith.constant dense<0.000000e+00> : vector<128x256xf32>
    %119 = tpu.matmul %116, %118, %cst_71 {dimension_numbers = #tpu.dot_dimension_numbers<[1], [0], [0], [1], [0, 0, 1, 1], [], []>} : vector<128x2xf32>, vector<2x256xf32>, vector<128x256xf32> -> vector<128x256xf32>
    %cst_72 = arith.constant 0.000000e+00 : f32
    %120 = vector.broadcast %cst_72 : f32 to vector<128x256xf32>
    %121 = arith.cmpf ogt, %119, %120 : vector<128x256xf32>
    %cst_73 = arith.constant 0.00999999977 : f32
    %122 = vector.broadcast %cst_73 : f32 to vector<128x256xf32>
    %123 = arith.mulf %122, %119 : vector<128x256xf32>
    %124 = arith.select %121, %119, %123 : vector<128x256xi1>, vector<128x256xf32>
    %c3_74 = arith.constant 3 : index
    %c0_75 = arith.constant 0 : index
    %c0_76 = arith.constant 0 : index
    %125 = vector.load %arg3[%c3_74, %c0_75, %c0_76] : memref<4x256x256xf32, #tpu.memory_space<vmem>>, vector<1x256x256xf32>
    %126 = vector.shape_cast %125 : vector<1x256x256xf32> to vector<256x256xf32>
    %cst_77 = arith.constant dense<0.000000e+00> : vector<128x256xf32>
    %127 = tpu.matmul %124, %126, %cst_77 {dimension_numbers = #tpu.dot_dimension_numbers<[1], [0], [0], [1], [0, 0, 1, 1], [], []>} : vector<128x256xf32>, vector<256x256xf32>, vector<128x256xf32> -> vector<128x256xf32>
    %c3_78 = arith.constant 3 : index
    %c0_79 = arith.constant 0 : index
    %c0_80 = arith.constant 0 : index
    %128 = vector.load %arg4[%c3_78, %c0_79, %c0_80] : memref<4x1x256xf32, #tpu.memory_space<vmem>>, vector<1x1x256xf32>
    %129 = vector.shape_cast %128 : vector<1x1x256xf32> to vector<1x256xf32>
    %130 = vector.broadcast %129 : vector<1x256xf32> to vector<128x256xf32>
    %131 = arith.addf %127, %130 : vector<128x256xf32>
    %cst_81 = arith.constant 0.000000e+00 : f32
    %132 = vector.broadcast %cst_81 : f32 to vector<128x256xf32>
    %133 = arith.cmpf ogt, %131, %132 : vector<128x256xf32>
    %cst_82 = arith.constant 0.00999999977 : f32
    %134 = vector.broadcast %cst_82 : f32 to vector<128x256xf32>
    %135 = arith.mulf %134, %131 : vector<128x256xf32>
    %136 = arith.select %133, %131, %135 : vector<128x256xi1>, vector<128x256xf32>
    %c3_83 = arith.constant 3 : index
    %c0_84 = arith.constant 0 : index
    %c0_85 = arith.constant 0 : index
    %137 = vector.load %arg5[%c3_83, %c0_84, %c0_85] : memref<4x256x2xf32, #tpu.memory_space<vmem>>, vector<1x256x2xf32>
    %138 = vector.shape_cast %137 : vector<1x256x2xf32> to vector<256x2xf32>
    %cst_86 = arith.constant dense<0.000000e+00> : vector<128x2xf32>
    %139 = tpu.matmul %136, %138, %cst_86 {dimension_numbers = #tpu.dot_dimension_numbers<[1], [0], [0], [1], [0, 0, 1, 1], [], []>} : vector<128x256xf32>, vector<256x2xf32>, vector<128x2xf32> -> vector<128x2xf32>
    %c3_87 = arith.constant 3 : index
    %c0_88 = arith.constant 0 : index
    %c0_89 = arith.constant 0 : index
    %140 = vector.load %arg6[%c3_87, %c0_88, %c0_89] : memref<4x1x2xf32, #tpu.memory_space<vmem>>, vector<1x1x2xf32>
    %141 = vector.shape_cast %140 : vector<1x1x2xf32> to vector<1x2xf32>
    %142 = vector.broadcast %141 : vector<1x2xf32> to vector<128x2xf32>
    %143 = arith.addf %139, %142 : vector<128x2xf32>
    %144 = vector.extract_strided_slice %143 {offsets = [0, 0], sizes = [128, 1], strides = [1, 1]} : vector<128x2xf32> to vector<128x1xf32>
    %145 = math.tanh %144 : vector<128x1xf32>
    %146 = vector.extract_strided_slice %143 {offsets = [0, 1], sizes = [128, 1], strides = [1, 1]} : vector<128x2xf32> to vector<128x1xf32>
    %147 = arith.subf %77, %146 : vector<128x1xf32>
    %cst_90 = arith.constant 0.000000e+00 : f32
    %148 = vector.broadcast %cst_90 : f32 to vector<128x1xf32>
    %149 = arith.subf %148, %145 : vector<128x1xf32>
    %150 = math.exp %149 : vector<128x1xf32>
    %151 = arith.mulf %147, %150 : vector<128x1xf32>
    %152 = arith.subf %115, %145 : vector<128x1xf32>
    %153 = arith.mulf %151, %151 : vector<128x1xf32>
    %154 = arith.mulf %114, %114 : vector<128x1xf32>
    %155 = arith.addf %153, %154 : vector<128x1xf32>
    %cst_91 = arith.constant -5.000000e-01 : f32
    %156 = vector.broadcast %cst_91 : f32 to vector<128x1xf32>
    %157 = arith.mulf %156, %155 : vector<128x1xf32>
    %cst_92 = arith.constant 1.83787704 : f32
    %158 = vector.broadcast %cst_92 : f32 to vector<128x1xf32>
    %159 = arith.subf %157, %158 : vector<128x1xf32>
    %160 = arith.addf %159, %152 : vector<128x1xf32>
    %cst_93 = arith.constant 0.000000e+00 : f32
    %161 = vector.broadcast %cst_93 : f32 to vector<128x1xf32>
    %162 = arith.subf %161, %160 : vector<128x1xf32>
    %c0_94 = arith.constant 0 : index
    %c0_95 = arith.constant 0 : index
    %163 = vector.load %arg7[%c0_94, %c0_95] : memref<128x1xf32, #tpu.memory_space<vmem>>, vector<128x1xf32>
    tpu.vector_store %arg7[%c0_94, %c0_95], %162 {strides = array<i32>} : memref<128x1xf32, #tpu.memory_space<vmem>>, vector<128x1xf32>,
    return
  }
  func.func @transform_0(%arg0: i32) -> (i32, i32) {
    %c0_i32 = arith.constant 0 : i32
    %c0_i32_0 = arith.constant 0 : i32
    return %arg0, %c0_i32 : i32, i32
  }
  func.func @transform_1(%arg0: i32) -> (i32, i32, i32) {
    %c0_i32 = arith.constant 0 : i32
    %c0_i32_0 = arith.constant 0 : i32
    %c0_i32_1 = arith.constant 0 : i32
    %c0_i32_2 = arith.constant 0 : i32
    return %c0_i32, %c0_i32_0, %c0_i32_1 : i32, i32, i32
  }
  func.func @transform_2(%arg0: i32) -> (i32, i32, i32) {
    %c0_i32 = arith.constant 0 : i32
    %c0_i32_0 = arith.constant 0 : i32
    %c0_i32_1 = arith.constant 0 : i32
    %c0_i32_2 = arith.constant 0 : i32
    return %c0_i32, %c0_i32_0, %c0_i32_1 : i32, i32, i32
  }
  func.func @transform_3(%arg0: i32) -> (i32, i32, i32) {
    %c0_i32 = arith.constant 0 : i32
    %c0_i32_0 = arith.constant 0 : i32
    %c0_i32_1 = arith.constant 0 : i32
    %c0_i32_2 = arith.constant 0 : i32
    return %c0_i32, %c0_i32_0, %c0_i32_1 : i32, i32, i32
  }
  func.func @transform_4(%arg0: i32) -> (i32, i32, i32) {
    %c0_i32 = arith.constant 0 : i32
    %c0_i32_0 = arith.constant 0 : i32
    %c0_i32_1 = arith.constant 0 : i32
    %c0_i32_2 = arith.constant 0 : i32
    return %c0_i32, %c0_i32_0, %c0_i32_1 : i32, i32, i32
  }
  func.func @transform_5(%arg0: i32) -> (i32, i32, i32) {
    %c0_i32 = arith.constant 0 : i32
    %c0_i32_0 = arith.constant 0 : i32
    %c0_i32_1 = arith.constant 0 : i32
    %c0_i32_2 = arith.constant 0 : i32
    return %c0_i32, %c0_i32_0, %c0_i32_1 : i32, i32, i32
  }
  func.func @transform_6(%arg0: i32) -> (i32, i32) {
    %c0_i32 = arith.constant 0 : i32
    %c0_i32_0 = arith.constant 0 : i32
    return %arg0, %c0_i32 : i32, i32
  }
}

</mosaic_0001>

<llo_original>
// kernel: tpu_custom_call.1
$region0: #{tpu_custom_call.1}
  #allocation0 [shape = 'u32[]', space=smem, size = 0x4, offset = 0x4, fixed_abs, tag = 'smem constant byte address 0x4 - core index']
  #allocation1 [shape = 'u32[144,128]{1,0:T(1,128)}', space=vmem, size = 0x12000, scoped, tag = 'internal scratch']
  %s0 = inlined_call_operand.vmem [shape: f32[256,2], index: 0, kind: input, shape index: {}]
  %s1 = inlined_call_operand.vmem [shape: f32[4,2,256], index: 1, kind: input, shape index: {}]
  %s2 = inlined_call_operand.hbm [shape: f32[4,256,256], index: 2, kind: input, shape index: {}]
  %s3 = inlined_call_operand.vmem [shape: f32[4,1,256], index: 3, kind: input, shape index: {}]
  %s4 = inlined_call_operand.vmem [shape: f32[4,256,2], index: 4, kind: input, shape index: {}]
  %s5 = inlined_call_operand.vmem [shape: f32[4,1,2], index: 5, kind: input, shape index: {}]
  %s6 = inlined_call_operand.vmem [shape: f32[256,1], index: 6, kind: output, shape index: {}]
  %s7 = sld [smem:[#allocation0]]
  $region61: #{tpu_custom_call.1} parent=0
    _
  %s9 = ssub.s32 1, %s7
  %s10 = scalar_select 0, %s9, %s7
  $region1: #{tpu_custom_call.1} parent=0
    #allocation2 [shape = 'u8[1048576]{0}', space=vmem, size = 0x100000, scoped, tag = 'input window, operand 2, single buffered']
    #allocation3 [shape = 's32[2]{0}', space=sflag, size = 0x8, scoped, tag = 'scoped memory for tpu_custom_call.1']
    %11 = vsyncpa [#allocation3], 0
    loop: start=0, step=1, limit=4
    $region2: #{tpu_custom_call.1} parent=1 // loop_pre_header
      _
    $region3: #{tpu_custom_call.1} parent=1 // loop_header
      %s13 = sphi 0, %s17
      %p14 = scmp.ge.s32.totalorder %s13, 4
      %s23 = sphi 0, %s25
      %s26 = sphi 0, %s23
      %s27 = sphi 0, %s26
      %s43 = sphi 0, %s27
      %s47 = sphi 0, %s47
      %s49 = sphi 0, %s47
      %s50 = sphi 0, %s49
      %s64 = sphi 0, %s50
      %s68 = sphi 0, %s68
      %s70 = sphi 0, %s68
      %s71 = sphi 0, %s70
      %s85 = sphi 0, %s71
      %s89 = sphi 0, %s89
      %s91 = sphi 0, %s89
      %s92 = sphi 0, %s91
      %s106 = sphi 0, %s92
      %s110 = sphi 0, %s110
      %s112 = sphi 0, %s110
      %s113 = sphi 0, %s112
      %s127 = sphi 0, %s113
      %s131 = sphi 0, %s131
      %s133 = sphi 0, %s131
      %s134 = sphi 0, %s133
      %s148 = sphi 0, %s134
      %s154 = sphi 0, %s156
      %s157 = sphi 0, %s154
      %s158 = sphi 0, %s157
      %s174 = sphi 0, %s158
    $region4: #{tpu_custom_call.1} parent=1 // loop_header_branch
      %16 = sbr.rel (%p14) target = $region8
    $region5: #{tpu_custom_call.1} parent=1 // loop_body
      %s18 = ssub.s32 %s13, 1
      %s19 = ssub.s32 %s13, 2
      %s20 = sadd.s32 %s13, 1
      %s21 = ssub.s32 %s13, %s20
      %p22 = scmp.eq.s32.totalorder %s21, 0
      %s24 = sadd.s32 %s23, 1
      %s25 = scalar_select %p22, %s23, %s24
      %p28 = pneg %p22
      %p29 = scmp.eq.s32.totalorder %s13, 1
      %p30 = por %p28, %p29
      %p31 = scmp.ne.s32.totalorder %s23, %s26
      %p32 = scmp.eq.s32.totalorder %s13, 0
      %p33 = por %p31, %p32
      %p34 = scmp.ne.s32.totalorder %s23, %s26
      %p35 = scmp.eq.s32.totalorder %s18, 1
      %p36 = por %p34, %p35
      %p37 = scmp.ne.s32.totalorder %s26, %s27
      %p38 = scmp.eq.s32.totalorder %s18, 0
      %p39 = por %p37, %p38
      %p40 = scmp.ne.s32.totalorder %s26, %s27
      %p41 = scmp.eq.s32.totalorder %s19, 1
      %p42 = por %p40, %p41
      %p44 = scmp.ne.s32.totalorder %s27, %s43
      %p45 = scmp.eq.s32.totalorder %s19, 0
      %p46 = por %p44, %p45
      %s48 = sadd.s32 %s47, 1
      %p51 = scmp.eq.s32.totalorder %s13, 1
      %p52 = scmp.ne.s32.totalorder %s47, %s49
      %p53 = scmp.eq.s32.totalorder %s13, 0
      %p54 = por %p52, %p53
      %p55 = scmp.ne.s32.totalorder %s47, %s49
      %p56 = scmp.eq.s32.totalorder %s18, 1
      %p57 = por %p55, %p56
      %p58 = scmp.ne.s32.totalorder %s49, %s50
      %p59 = scmp.eq.s32.totalorder %s18, 0
      %p60 = por %p58, %p59
      %p61 = scmp.ne.s32.totalorder %s49, %s50
      %p62 = scmp.eq.s32.totalorder %s19, 1
      %p63 = por %p61, %p62
      %p65 = scmp.ne.s32.totalorder %s50, %s64
      %p66 = scmp.eq.s32.totalorder %s19, 0
      %p67 = por %p65, %p66
      %s69 = sadd.s32 %s68, 1
      %p72 = scmp.eq.s32.totalorder %s13, 1
      %p73 = scmp.ne.s32.totalorder %s68, %s70
      %p74 = scmp.eq.s32.totalorder %s13, 0
      %p75 = por %p73, %p74
      %p76 = scmp.ne.s32.totalorder %s68, %s70
      %p77 = scmp.eq.s32.totalorder %s18, 1
      %p78 = por %p76, %p77
      %p79 = scmp.ne.s32.totalorder %s70, %s71
      %p80 = scmp.eq.s32.totalorder %s18, 0
      %p81 = por %p79, %p80
      %p82 = scmp.ne.s32.totalorder %s70, %s71
      %p83 = scmp.eq.s32.totalorder %s19, 1
      %p84 = por %p82, %p83
      %p86 = scmp.ne.s32.totalorder %s71, %s85
      %p87 = scmp.eq.s32.totalorder %s19, 0
      %p88 = por %p86, %p87
      %s90 = sadd.s32 %s89, 1
      %p93 = scmp.eq.s32.totalorder %s13, 1
      %p94 = scmp.ne.s32.totalorder %s89, %s91
      %p95 = scmp.eq.s32.totalorder %s13, 0
      %p96 = por %p94, %p95
      %p97 = scmp.ne.s32.totalorder %s89, %s91
      %p98 = scmp.eq.s32.totalorder %s18, 1
      %p99 = por %p97, %p98
      %p100 = scmp.ne.s32.totalorder %s91, %s92
      %p101 = scmp.eq.s32.totalorder %s18, 0
      %p102 = por %p100, %p101
      %p103 = scmp.ne.s32.totalorder %s91, %s92
      %p104 = scmp.eq.s32.totalorder %s19, 1
      %p105 = por %p103, %p104
      %p107 = scmp.ne.s32.totalorder %s92, %s106
      %p108 = scmp.eq.s32.totalorder %s19, 0
      %p109 = por %p107, %p108
      %s111 = sadd.s32 %s110, 1
      %p114 = scmp.eq.s32.totalorder %s13, 1
      %p115 = scmp.ne.s32.totalorder %s110, %s112
      %p116 = scmp.eq.s32.totalorder %s13, 0
      %p117 = por %p115, %p116
      %p118 = scmp.ne.s32.totalorder %s110, %s112
      %p119 = scmp.eq.s32.totalorder %s18, 1
      %p120 = por %p118, %p119
      %p121 = scmp.ne.s32.totalorder %s112, %s113
      %p122 = scmp.eq.s32.totalorder %s18, 0
      %p123 = por %p121, %p122
      %p124 = scmp.ne.s32.totalorder %s112, %s113
      %p125 = scmp.eq.s32.totalorder %s19, 1
      %p126 = por %p124, %p125
      %p128 = scmp.ne.s32.totalorder %s113, %s127
      %p129 = scmp.eq.s32.totalorder %s19, 0
      %p130 = por %p128, %p129
      %s132 = sadd.s32 %s131, 1
      %p135 = scmp.eq.s32.totalorder %s13, 1
      %p136 = scmp.ne.s32.totalorder %s131, %s133
      %p137 = scmp.eq.s32.totalorder %s13, 0
      %p138 = por %p136, %p137
      %p139 = scmp.ne.s32.totalorder %s131, %s133
      %p140 = scmp.eq.s32.totalorder %s18, 1
      %p141 = por %p139, %p140
      %p142 = scmp.ne.s32.totalorder %s133, %s134
      %p143 = scmp.eq.s32.totalorder %s18, 0
      %p144 = por %p142, %p143
      %p145 = scmp.ne.s32.totalorder %s133, %s134
      %p146 = scmp.eq.s32.totalorder %s19, 1
      %p147 = por %p145, %p146
      %p149 = scmp.ne.s32.totalorder %s134, %s148
      %p150 = scmp.eq.s32.totalorder %s19, 0
      %p151 = por %p149, %p150
      %s152 = ssub.s32 %s13, %s20
      %p153 = scmp.eq.s32.totalorder %s152, 0
      %s155 = sadd.s32 %s154, 1
      %s156 = scalar_select %p153, %s154, %s155
      %p159 = pneg %p153
      %p160 = scmp.eq.s32.totalorder %s13, 1
      %p161 = por %p159, %p160
      %p162 = scmp.ne.s32.totalorder %s154, %s157
      %p163 = scmp.eq.s32.totalorder %s13, 0
      %p164 = por %p162, %p163
      %p165 = scmp.ne.s32.totalorder %s154, %s157
      %p166 = scmp.eq.s32.totalorder %s18, 1
      %p167 = por %p165, %p166
      %p168 = scmp.ne.s32.totalorder %s157, %s158
      %p169 = scmp.eq.s32.totalorder %s18, 0
      %p170 = por %p168, %p169
      %p171 = scmp.ne.s32.totalorder %s157, %s158
      %p172 = scmp.eq.s32.totalorder %s19, 1
      %p173 = por %p171, %p172
      %p175 = scmp.ne.s32.totalorder %s158, %s174
      %p176 = scmp.eq.s32.totalorder %s19, 0
      %p177 = por %p175, %p176
      %p178 = scmp.le.s32.totalorder 1, %s13
      %p179 = scmp.lt.s32.totalorder %s13, 3
      %p180 = pnand %p178, %p179
      %p181 = pneg %p180
      // Predicated region
      $region9: #{tpu_custom_call.1} parent=5 // pred_check
        _
      $region10: #{tpu_custom_call.1} parent=5 // pred_check_branch
        %183 = sbr.rel (%p180) target = $region12
      $region11: #{tpu_custom_call.1} parent=5 // pred_region
        %s184 = ssub.s32 %s13, 1
        // Predicated region
        $region13: #{tpu_custom_call.1} parent=11 // pred_check
          %p185 = pneg %p60
        $region14: #{tpu_custom_call.1} parent=11 // pred_check_branch
          %187 = sbr.rel (%p185) target = $region16
        $region15: #{tpu_custom_call.1} parent=11 // pred_region
          _
        $region16: #{tpu_custom_call.1} parent=11 // pred_fallthru
          _
        // Predicated region
        $region17: #{tpu_custom_call.1} parent=11 // pred_check
          %p188 = pneg %p81
        $region18: #{tpu_custom_call.1} parent=11 // pred_check_branch
          %190 = sbr.rel (%p188) target = $region20
        $region19: #{tpu_custom_call.1} parent=11 // pred_region
          %s192 = ssub.s32 32768, 32768
          %193 = vsyncadd [#allocation3], %s192
          %s194 = sshll.u32 [#allocation2], 4
          %s195 = int_to_ptr.vmem [resolvable:$true] %s194
          %200 = dma.hbm_to_vmem [thread:$0]  %s2, 32768, %s195, [#allocation3], 256, 256, 16
        $region20: #{tpu_custom_call.1} parent=11 // pred_fallthru
          _
        // Predicated region
        $region21: #{tpu_custom_call.1} parent=11 // pred_check
          %p201 = pneg %p102
        $region22: #{tpu_custom_call.1} parent=11 // pred_check_branch
          %203 = sbr.rel (%p201) target = $region24
        $region23: #{tpu_custom_call.1} parent=11 // pred_region
          _
        $region24: #{tpu_custom_call.1} parent=11 // pred_fallthru
          _
        // Predicated region
        $region25: #{tpu_custom_call.1} parent=11 // pred_check
          %p204 = pneg %p123
        $region26: #{tpu_custom_call.1} parent=11 // pred_check_branch
          %206 = sbr.rel (%p204) target = $region28
        $region27: #{tpu_custom_call.1} parent=11 // pred_region
          _
        $region28: #{tpu_custom_call.1} parent=11 // pred_fallthru
          _
        // Predicated region
        $region29: #{tpu_custom_call.1} parent=11 // pred_check
          %p207 = pneg %p144
        $region30: #{tpu_custom_call.1} parent=11 // pred_check_branch
          %209 = sbr.rel (%p207) target = $region32
        $region31: #{tpu_custom_call.1} parent=11 // pred_region
          _
        $region32: #{tpu_custom_call.1} parent=11 // pred_fallthru
          _
      $region12: #{tpu_custom_call.1} parent=5 // pred_fallthru
        _
      %p210 = scmp.lt.s32.totalorder %s13, 2
      // Predicated region
      $region33: #{tpu_custom_call.1} parent=5 // pred_check
        %p211 = pneg %p210
      $region34: #{tpu_custom_call.1} parent=5 // pred_check_branch
        %213 = sbr.rel (%p211) target = $region36
      $region35: #{tpu_custom_call.1} parent=5 // pred_region
        // Predicated region
        $region37: #{tpu_custom_call.1} parent=35 // pred_check
          %p214 = pneg %p33
        $region38: #{tpu_custom_call.1} parent=35 // pred_check_branch
          %216 = sbr.rel (%p214) target = $region40
        $region39: #{tpu_custom_call.1} parent=35 // pred_region
          %s217 = smul.u32 16, %s13
          %p218 = scmp.lt.s32.totalorder %s217, 31
          %s219 = scalar_select %p218, %s217, 31
          %s220 = smul.addr %s219, 8
          %s221 = scalar_lea.vmem %s0, %s220
          %s222 = smul.u32 16, %s13
        $region40: #{tpu_custom_call.1} parent=35 // pred_fallthru
          _
      $region36: #{tpu_custom_call.1} parent=5 // pred_fallthru
        _
      %p223 = scmp.le.s32.totalorder 1, %s13
      %p224 = scmp.lt.s32.totalorder %s13, 3
      %p225 = pnand %p223, %p224
      %p226 = pneg %p225
      // Predicated region
      $region41: #{tpu_custom_call.1} parent=5 // pred_check
        _
      $region42: #{tpu_custom_call.1} parent=5 // pred_check_branch
        %228 = sbr.rel (%p225) target = $region44
      $region43: #{tpu_custom_call.1} parent=5 // pred_region
        %s229 = ssub.s32 %s13, 1
        // Predicated region
        $region45: #{tpu_custom_call.1} parent=43 // pred_check
          %p230 = pneg %p81
        $region46: #{tpu_custom_call.1} parent=43 // pred_check_branch
          %232 = sbr.rel (%p230) target = $region48
        $region47: #{tpu_custom_call.1} parent=43 // pred_region
          %233 = dma.done [#allocation3], 32768
        $region48: #{tpu_custom_call.1} parent=43 // pred_fallthru
          _
        %s234 = smul.u32 16, %s18
        %p235 = scmp.lt.s32.totalorder %s234, 31
        %s236 = scalar_select %p235, %s234, 31
        %s237 = smul.addr %s236, 8
        %s238 = scalar_lea.vmem %s0, %s237
        %p239 = pneg %p39
        %p240 = pneg %p36
        %p241 = pneg %p60
        %p242 = pneg %p57
        %p243 = pneg %p81
        %p244 = pneg %p78
        %p245 = pneg %p102
        %p246 = pneg %p99
        %p247 = pneg %p123
        %p248 = pneg %p120
        %p249 = pneg %p144
        %p250 = pneg %p141
        %p251 = pneg %p170
        %p252 = pneg %p167
        %s253 = smul.u32 16, %s18
        %p254 = scmp.lt.s32.totalorder %s253, 31
        %s255 = scalar_select %p254, %s253, 31
        %s256 = smul.addr %s255, 8
        %s257 = scalar_lea.vmem %s6, %s256
        %s258 = smul.u32 16, %s18
        %p259 = scmp.lt.s32.totalorder %s258, 31
        %s260 = scalar_select %p259, %s258, 31
        %s261 = smul.addr %s260, 8
        %s262 = scalar_lea.vmem %s0, %s261
        %s263 = smul.u32 16, %s18
        %s264 = smul.u32 16, %s18
        %p265 = scmp.lt.s32.totalorder %s264, 31
        %s266 = scalar_select %p265, %s264, 31
        %s267 = smul.addr %s266, 8
        %s268 = scalar_lea.vmem %s6, %s267
        %s269 = smul.u32 16, %s18
        %v270 = vld [vmem:[%s262] sm:$0xff]
        %v271 = vld [vmem:[%s262 + $0x8] sm:$0xff]
        %v272 = vld [vmem:[%s262 + $0x10] sm:$0xff]
        %v273 = vld [vmem:[%s262 + $0x18] sm:$0xff]
        %v274 = vld [vmem:[%s262 + $0x20] sm:$0xff]
        %v275 = vld [vmem:[%s262 + $0x28] sm:$0xff]
        %v276 = vld [vmem:[%s262 + $0x30] sm:$0xff]
        %v277 = vld [vmem:[%s262 + $0x38] sm:$0xff]
        %v278 = vld [vmem:[%s262 + $0x40] sm:$0xff]
        %v279 = vld [vmem:[%s262 + $0x48] sm:$0xff]
        %v280 = vld [vmem:[%s262 + $0x50] sm:$0xff]
        %v281 = vld [vmem:[%s262 + $0x58] sm:$0xff]
        %v282 = vld [vmem:[%s262 + $0x60] sm:$0xff]
        %v283 = vld [vmem:[%s262 + $0x68] sm:$0xff]
        %v284 = vld [vmem:[%s262 + $0x70] sm:$0xff]
        %v285 = vld [vmem:[%s262 + $0x78] sm:$0xff]
        %vm286 = vcmask 7168
        %v287 = vsel %vm286, %v270, 1.0
        %v288 = vsel %vm286, %v271, 1.0
        %v289 = vsel %vm286, %v272, 1.0
        %v290 = vsel %vm286, %v273, 1.0
        %v291 = vsel %vm286, %v274, 1.0
        %v292 = vsel %vm286, %v275, 1.0
        %v293 = vsel %vm286, %v276, 1.0
        %v294 = vsel %vm286, %v277, 1.0
        %v295 = vsel %vm286, %v278, 1.0
        %v296 = vsel %vm286, %v279, 1.0
        %v297 = vsel %vm286, %v280, 1.0
        %v298 = vsel %vm286, %v281, 1.0
        %v299 = vsel %vm286, %v282, 1.0
        %v300 = vsel %vm286, %v283, 1.0
        %v301 = vsel %vm286, %v284, 1.0
        %v302 = vsel %vm286, %v285, 1.0
        %v303 = vld [vmem:[%s1] sm:$0xf]
        %v306 = vunpack.c.l.s4 1983009808
        %v307 = vunpack.c.0.s8 %v306
        %v308 = vlaneseq
        %v309 = vshrl.u32 %v308, 7
        %v310 = vsub.s32 %v307, %v309
        %v311 = vrot.slane %v303, %v310
        %v312 = vcombine.high %v311, %v311
        %vm313 = vcmask 15360
        %v315 = vsel %vm313, %v287, 0
        %v318 = vsel %vm313, %v288, 0
        %v321 = vsel %vm313, %v289, 0
        %v324 = vsel %vm313, %v290, 0
        %v327 = vsel %vm313, %v291, 0
        %v330 = vsel %vm313, %v292, 0
        %v333 = vsel %vm313, %v293, 0
        %v336 = vsel %vm313, %v294, 0
        %v339 = vsel %vm313, %v295, 0
        %v342 = vsel %vm313, %v296, 0
        %v345 = vsel %vm313, %v297, 0
        %v348 = vsel %vm313, %v298, 0
        %v351 = vsel %vm313, %v299, 0
        %v354 = vsel %vm313, %v300, 0
        %v357 = vsel %vm313, %v301, 0
        %v360 = vsel %vm313, %v302, 0
        %vm362 = vcmask 1041408
        %v363 = vsel %vm362, %v311, 0
        %v365 = vsel %vm362, %v312, 0
        %367 = vmatprep.subr.mxu0 %v365
        %368 = vmatpush1.msra.mxu0 %v363
        %369 = vmatprep.subr.mxu0 0.0
        %370 = vmatpush1.msra.mxu0 0.0
        %371 = vmatprep.subr.mxu0 0.0
        %372 = vmatpush1.msra.mxu0 0.0
        %373 = vmatprep.subr.mxu0 0.0
        %374 = vmatpush1.msra.mxu0 0.0
        %375 = vmatprep.subr.mxu0 0.0
        %376 = vmatpush1.msra.mxu0 0.0
        %377 = vmatprep.subr.mxu0 0.0
        %378 = vmatpush1.msra.mxu0 0.0
        %379 = vmatprep.subr.mxu0 0.0
        %380 = vmatpush1.msra.mxu0 0.0
        %381 = vmatprep.subr.mxu0 0.0
        %382 = vmatpush1.msra.mxu0 0.0
        %383 = vmatprep.subr.mxu0 0.0
        %384 = vmatpush1.msra.mxu0 0.0
        %385 = vmatprep.subr.mxu0 0.0
        %386 = vmatpush1.msra.mxu0 0.0
        %387 = vmatprep.subr.mxu0 0.0
        %388 = vmatpush1.msra.mxu0 0.0
        %389 = vmatprep.subr.mxu0 0.0
        %390 = vmatpush1.msra.mxu0 0.0
        %391 = vmatprep.subr.mxu0 0.0
        %392 = vmatpush1.msra.mxu0 0.0
        %393 = vmatprep.subr.mxu0 0.0
        %394 = vmatpush1.msra.mxu0 0.0
        %395 = vmatprep.subr.mxu0 0.0
        %396 = vmatpush1.msra.mxu0 0.0
        %397 = vmatprep.subr.mxu0 0.0
        %398 = vmatpush1.msra.mxu0 0.0
        %399 = vmatprep.subr.mxu0 0.0
        %400 = vmatpush1.msra.mxu0 0.0
        %401 = vmatprep.subr.mxu0 0.0
        %402 = vmatpush1.msra.mxu0 0.0
        %403 = vmatprep.subr.mxu0 0.0
        %404 = vmatpush1.msra.mxu0 0.0
        %405 = vmatprep.subr.mxu0 0.0
        %406 = vmatpush1.msra.mxu0 0.0
        %407 = vmatprep.subr.mxu0 0.0
        %408 = vmatpush1.msra.mxu0 0.0
        %409 = vmatprep.subr.mxu0 0.0
        %410 = vmatpush1.msra.mxu0 0.0
        %411 = vmatprep.subr.mxu0 0.0
        %412 = vmatpush1.msra.mxu0 0.0
        %413 = vmatprep.subr.mxu0 0.0
        %414 = vmatpush1.msra.mxu0 0.0
        %415 = vmatprep.subr.mxu0 0.0
        %416 = vmatpush1.msra.mxu0 0.0
        %417 = vmatprep.subr.mxu0 0.0
        %418 = vmatpush1.msra.mxu0 0.0
        %419 = vmatprep.subr.mxu0 0.0
        %420 = vmatpush1.msra.mxu0 0.0
        %421 = vmatprep.subr.mxu0 0.0
        %422 = vmatpush1.msra.mxu0 0.0
        %423 = vmatprep.subr.mxu0 0.0
        %424 = vmatpush1.msra.mxu0 0.0
        %425 = vmatprep.subr.mxu0 0.0
        %426 = vmatpush1.msra.mxu0 0.0
        %427 = vmatprep.subr.mxu0 0.0
        %428 = vmatpush1.msra.mxu0 0.0
        %429 = vmatprep.subr.mxu0 0.0
        %430 = vmatpush1.msra.mxu0 0.0
        %431 = vmatprep.mubr.f32.mxu0 0.0
        %432 = vmatmul.mubr.f32.gmra.mrb[0].mxu0 %v315
        %v433 = vpop.f32.mrb[0].mxu0
        %v434 = vadd.f32 0.0, %v433
        %v435 = vpop.f32.mrb[0].mxu0
        %v436 = vadd.f32 0.0, %v435
        %437 = vmatprep.mubr.f32.mxu0 0.0
        %438 = vmatmul.mubr.f32.gmra.mrb[0].mxu0 %v318
        %v439 = vpop.f32.mrb[0].mxu0
        %v440 = vadd.f32 0.0, %v439
        %v441 = vpop.f32.mrb[0].mxu0
        %v442 = vadd.f32 0.0, %v441
        %443 = vmatprep.mubr.f32.mxu0 0.0
        %444 = vmatmul.mubr.f32.gmra.mrb[0].mxu0 %v321
        %v445 = vpop.f32.mrb[0].mxu0
        %v446 = vadd.f32 0.0, %v445
        %v447 = vpop.f32.mrb[0].mxu0
        %v448 = vadd.f32 0.0, %v447
        %449 = vmatprep.mubr.f32.mxu0 0.0
        %450 = vmatmul.mubr.f32.gmra.mrb[0].mxu0 %v324
        %v451 = vpop.f32.mrb[0].mxu0
        %v452 = vadd.f32 0.0, %v451
        %v453 = vpop.f32.mrb[0].mxu0
        %v454 = vadd.f32 0.0, %v453
        %455 = vmatprep.mubr.f32.mxu0 0.0
        %456 = vmatmul.mubr.f32.gmra.mrb[0].mxu0 %v327
        %v457 = vpop.f32.mrb[0].mxu0
        %v458 = vadd.f32 0.0, %v457
        %v459 = vpop.f32.mrb[0].mxu0
        %v460 = vadd.f32 0.0, %v459
        %461 = vmatprep.mubr.f32.mxu0 0.0
        %462 = vmatmul.mubr.f32.gmra.mrb[0].mxu0 %v330
        %v463 = vpop.f32.mrb[0].mxu0
        %v464 = vadd.f32 0.0, %v463
        %v465 = vpop.f32.mrb[0].mxu0
        %v466 = vadd.f32 0.0, %v465
        %467 = vmatprep.mubr.f32.mxu0 0.0
        %468 = vmatmul.mubr.f32.gmra.mrb[0].mxu0 %v333
        %v469 = vpop.f32.mrb[0].mxu0
        %v470 = vadd.f32 0.0, %v469
        %v471 = vpop.f32.mrb[0].mxu0
        %v472 = vadd.f32 0.0, %v471
        %473 = vmatprep.mubr.f32.mxu0 0.0
        %474 = vmatmul.mubr.f32.gmra.mrb[0].mxu0 %v336
        %v475 = vpop.f32.mrb[0].mxu0
        %v476 = vadd.f32 0.0, %v475
        %v477 = vpop.f32.mrb[0].mxu0
        %v478 = vadd.f32 0.0, %v477
        %479 = vmatprep.mubr.f32.mxu0 0.0
        %480 = vmatmul.mubr.f32.gmra.mrb[0].mxu0 %v339
        %v481 = vpop.f32.mrb[0].mxu0
        %v482 = vadd.f32 0.0, %v481
        %v483 = vpop.f32.mrb[0].mxu0
        %v484 = vadd.f32 0.0, %v483
        %485 = vmatprep.mubr.f32.mxu0 0.0
        %486 = vmatmul.mubr.f32.gmra.mrb[0].mxu0 %v342
        %v487 = vpop.f32.mrb[0].mxu0
        %v488 = vadd.f32 0.0, %v487
        %v489 = vpop.f32.mrb[0].mxu0
        %v490 = vadd.f32 0.0, %v489
        %491 = vmatprep.mubr.f32.mxu0 0.0
        %492 = vmatmul.mubr.f32.gmra.mrb[0].mxu0 %v345
        %v493 = vpop.f32.mrb[0].mxu0
        %v494 = vadd.f32 0.0, %v493
        %v495 = vpop.f32.mrb[0].mxu0
        %v496 = vadd.f32 0.0, %v495
        %497 = vmatprep.mubr.f32.mxu0 0.0
        %498 = vmatmul.mubr.f32.gmra.mrb[0].mxu0 %v348
        %v499 = vpop.f32.mrb[0].mxu0
        %v500 = vadd.f32 0.0, %v499
        %v501 = vpop.f32.mrb[0].mxu0
        %v502 = vadd.f32 0.0, %v501
        %503 = vmatprep.mubr.f32.mxu0 0.0
        %504 = vmatmul.mubr.f32.gmra.mrb[0].mxu0 %v351
        %v505 = vpop.f32.mrb[0].mxu0
        %v506 = vadd.f32 0.0, %v505
        %v507 = vpop.f32.mrb[0].mxu0
        %v508 = vadd.f32 0.0, %v507
        %509 = vmatprep.mubr.f32.mxu0 0.0
        %510 = vmatmul.mubr.f32.gmra.mrb[0].mxu0 %v354
        %v511 = vpop.f32.mrb[0].mxu0
        %v512 = vadd.f32 0.0, %v511
        %v513 = vpop.f32.mrb[0].mxu0
        %v514 = vadd.f32 0.0, %v513
        %515 = vmatprep.mubr.f32.mxu0 0.0
        %516 = vmatmul.mubr.f32.gmra.mrb[0].mxu0 %v357
        %v517 = vpop.f32.mrb[0].mxu0
        %v518 = vadd.f32 0.0, %v517
        %v519 = vpop.f32.mrb[0].mxu0
        %v520 = vadd.f32 0.0, %v519
        %521 = vmatprep.mubr.f32.mxu0 0.0
        %522 = vmatmul.mubr.f32.gmra.mrb[0].mxu0 %v360
        %v523 = vpop.f32.mrb[0].mxu0
        %v524 = vadd.f32 0.0, %v523
        %v525 = vpop.f32.mrb[0].mxu0
        %v526 = vadd.f32 0.0, %v525
        %527 = vdwg.mxu0
        %vm528 = vcmp.gt.f32.partialorder %v434, 0.0
        %vm529 = vcmp.gt.f32.partialorder %v436, 0.0
        %vm530 = vcmp.gt.f32.partialorder %v440, 0.0
        %vm531 = vcmp.gt.f32.partialorder %v442, 0.0
        %vm532 = vcmp.gt.f32.partialorder %v446, 0.0
        %vm533 = vcmp.gt.f32.partialorder %v448, 0.0
        %vm534 = vcmp.gt.f32.partialorder %v452, 0.0
        %vm535 = vcmp.gt.f32.partialorder %v454, 0.0
        %vm536 = vcmp.gt.f32.partialorder %v458, 0.0
        %vm537 = vcmp.gt.f32.partialorder %v460, 0.0
        %vm538 = vcmp.gt.f32.partialorder %v464, 0.0
        %vm539 = vcmp.gt.f32.partialorder %v466, 0.0
        %vm540 = vcmp.gt.f32.partialorder %v470, 0.0
        %vm541 = vcmp.gt.f32.partialorder %v472, 0.0
        %vm542 = vcmp.gt.f32.partialorder %v476, 0.0
        %vm543 = vcmp.gt.f32.partialorder %v478, 0.0
        %vm544 = vcmp.gt.f32.partialorder %v482, 0.0
        %vm545 = vcmp.gt.f32.partialorder %v484, 0.0
        %vm546 = vcmp.gt.f32.partialorder %v488, 0.0
        %vm547 = vcmp.gt.f32.partialorder %v490, 0.0
        %vm548 = vcmp.gt.f32.partialorder %v494, 0.0
        %vm549 = vcmp.gt.f32.partialorder %v496, 0.0
        %vm550 = vcmp.gt.f32.partialorder %v500, 0.0
        %vm551 = vcmp.gt.f32.partialorder %v502, 0.0
        %vm552 = vcmp.gt.f32.partialorder %v506, 0.0
        %vm553 = vcmp.gt.f32.partialorder %v508, 0.0
        %vm554 = vcmp.gt.f32.partialorder %v512, 0.0
        %vm555 = vcmp.gt.f32.partialorder %v514, 0.0
        %vm556 = vcmp.gt.f32.partialorder %v518, 0.0
        %vm557 = vcmp.gt.f32.partialorder %v520, 0.0
        %vm558 = vcmp.gt.f32.partialorder %v524, 0.0
        %vm559 = vcmp.gt.f32.partialorder %v526, 0.0
        %v560 = vmul.f32 %v434, 0.01
        %v561 = vmul.f32 %v436, 0.01
        %v562 = vmul.f32 %v440, 0.01
        %v563 = vmul.f32 %v442, 0.01
        %v564 = vmul.f32 %v446, 0.01
        %v565 = vmul.f32 %v448, 0.01
        %v566 = vmul.f32 %v452, 0.01
        %v567 = vmul.f32 %v454, 0.01
        %v568 = vmul.f32 %v458, 0.01
        %v569 = vmul.f32 %v460, 0.01
        %v570 = vmul.f32 %v464, 0.01
        %v571 = vmul.f32 %v466, 0.01
        %v572 = vmul.f32 %v470, 0.01
        %v573 = vmul.f32 %v472, 0.01
        %v574 = vmul.f32 %v476, 0.01
        %v575 = vmul.f32 %v478, 0.01
        %v576 = vmul.f32 %v482, 0.01
        %v577 = vmul.f32 %v484, 0.01
        %v578 = vmul.f32 %v488, 0.01
        %v579 = vmul.f32 %v490, 0.01
        %v580 = vmul.f32 %v494, 0.01
        %v581 = vmul.f32 %v496, 0.01
        %v582 = vmul.f32 %v500, 0.01
        %v583 = vmul.f32 %v502, 0.01
        %v584 = vmul.f32 %v506, 0.01
        %v585 = vmul.f32 %v508, 0.01
        %v586 = vmul.f32 %v512, 0.01
        %v587 = vmul.f32 %v514, 0.01
        %v588 = vmul.f32 %v518, 0.01
        %v589 = vmul.f32 %v520, 0.01
        %v590 = vmul.f32 %v524, 0.01
        %v591 = vmul.f32 %v526, 0.01
        %v592 = vsel %vm528, %v434, %v560
        %v593 = vsel %vm529, %v436, %v561
        %v594 = vsel %vm530, %v440, %v562
        %v595 = vsel %vm531, %v442, %v563
        %v596 = vsel %vm532, %v446, %v564
        %v597 = vsel %vm533, %v448, %v565
        %v598 = vsel %vm534, %v452, %v566
        %v599 = vsel %vm535, %v454, %v567
        %v600 = vsel %vm536, %v458, %v568
        %v601 = vsel %vm537, %v460, %v569
        %v602 = vsel %vm538, %v464, %v570
        %v603 = vsel %vm539, %v466, %v571
        %v604 = vsel %vm540, %v470, %v572
        %v605 = vsel %vm541, %v472, %v573
        %v606 = vsel %vm542, %v476, %v574
        %v607 = vsel %vm543, %v478, %v575
        %v608 = vsel %vm544, %v482, %v576
        %v609 = vsel %vm545, %v484, %v577
        %v610 = vsel %vm546, %v488, %v578
        %v611 = vsel %vm547, %v490, %v579
        %v612 = vsel %vm548, %v494, %v580
        %v613 = vsel %vm549, %v496, %v581
        %v614 = vsel %vm550, %v500, %v582
        %v615 = vsel %vm551, %v502, %v583
        %v616 = vsel %vm552, %v506, %v584
        %v617 = vsel %vm553, %v508, %v585
        %v618 = vsel %vm554, %v512, %v586
        %v619 = vsel %vm555, %v514, %v587
        %v620 = vsel %vm556, %v518, %v588
        %v621 = vsel %vm557, %v520, %v589
        %v622 = vsel %vm558, %v524, %v590
        %v623 = vsel %vm559, %v526, %v591
        %v624 = vld [vmem:[#allocation2] sm:$0xff]
        %v625 = vld [vmem:[#allocation2 + $0x8] sm:$0xff]
        %v626 = vld [vmem:[#allocation2 + $0x10] sm:$0xff]
        %v627 = vld [vmem:[#allocation2 + $0x18] sm:$0xff]
        %v628 = vld [vmem:[#allocation2 + $0x20] sm:$0xff]
        %v629 = vld [vmem:[#allocation2 + $0x28] sm:$0xff]
        %v630 = vld [vmem:[#allocation2 + $0x30] sm:$0xff]
        %v631 = vld [vmem:[#allocation2 + $0x38] sm:$0xff]
        %v632 = vld [vmem:[#allocation2 + $0x40] sm:$0xff]
        %v633 = vld [vmem:[#allocation2 + $0x48] sm:$0xff]
        %v634 = vld [vmem:[#allocation2 + $0x50] sm:$0xff]
        %v635 = vld [vmem:[#allocation2 + $0x58] sm:$0xff]
        %v636 = vld [vmem:[#allocation2 + $0x60] sm:$0xff]
        %v637 = vld [vmem:[#allocation2 + $0x68] sm:$0xff]
        %v638 = vld [vmem:[#allocation2 + $0x70] sm:$0xff]
        %v639 = vld [vmem:[#allocation2 + $0x78] sm:$0xff]
        %v640 = vld [vmem:[#allocation2 + $0x80] sm:$0xff]
        %v641 = vld [vmem:[#allocation2 + $0x88] sm:$0xff]
        %v642 = vld [vmem:[#allocation2 + $0x90] sm:$0xff]
        %v643 = vld [vmem:[#allocation2 + $0x98] sm:$0xff]
        %v644 = vld [vmem:[#allocation2 + $0xa0] sm:$0xff]
        %v645 = vld [vmem:[#allocation2 + $0xa8] sm:$0xff]
        %v646 = vld [vmem:[#allocation2 + $0xb0] sm:$0xff]
        %v647 = vld [vmem:[#allocation2 + $0xb8] sm:$0xff]
        %v648 = vld [vmem:[#allocation2 + $0xc0] sm:$0xff]
        %v649 = vld [vmem:[#allocation2 + $0xc8] sm:$0xff]
        %v650 = vld [vmem:[#allocation2 + $0xd0] sm:$0xff]
        %v651 = vld [vmem:[#allocation2 + $0xd8] sm:$0xff]
        %v652 = vld [vmem:[#allocation2 + $0xe0] sm:$0xff]
        %v653 = vld [vmem:[#allocation2 + $0xe8] sm:$0xff]
        %v654 = vld [vmem:[#allocation2 + $0xf0] sm:$0xff]
        %v655 = vld [vmem:[#allocation2 + $0xf8] sm:$0xff]
        %v656 = vld [vmem:[#allocation2 + $0x100] sm:$0xff]
        %v657 = vld [vmem:[#allocation2 + $0x108] sm:$0xff]
        %v658 = vld [vmem:[#allocation2 + $0x110] sm:$0xff]
        %v659 = vld [vmem:[#allocation2 + $0x118] sm:$0xff]
        %v660 = vld [vmem:[#allocation2 + $0x120] sm:$0xff]
        %v661 = vld [vmem:[#allocation2 + $0x128] sm:$0xff]
        %v662 = vld [vmem:[#allocation2 + $0x130] sm:$0xff]
        %v663 = vld [vmem:[#allocation2 + $0x138] sm:$0xff]
        %v664 = vld [vmem:[#allocation2 + $0x140] sm:$0xff]
        %v665 = vld [vmem:[#allocation2 + $0x148] sm:$0xff]
        %v666 = vld [vmem:[#allocation2 + $0x150] sm:$0xff]
        %v667 = vld [vmem:[#allocation2 + $0x158] sm:$0xff]
        %v668 = vld [vmem:[#allocation2 + $0x160] sm:$0xff]
        %v669 = vld [vmem:[#allocation2 + $0x168] sm:$0xff]
        %v670 = vld [vmem:[#allocation2 + $0x170] sm:$0xff]
        %v671 = vld [vmem:[#allocation2 + $0x178] sm:$0xff]
        %v672 = vld [vmem:[#allocation2 + $0x180] sm:$0xff]
        %v673 = vld [vmem:[#allocation2 + $0x188] sm:$0xff]
        %v674 = vld [vmem:[#allocation2 + $0x190] sm:$0xff]
        %v675 = vld [vmem:[#allocation2 + $0x198] sm:$0xff]
        %v676 = vld [vmem:[#allocation2 + $0x1a0] sm:$0xff]
        %v677 = vld [vmem:[#allocation2 + $0x1a8] sm:$0xff]
        %v678 = vld [vmem:[#allocation2 + $0x1b0] sm:$0xff]
        %v679 = vld [vmem:[#allocation2 + $0x1b8] sm:$0xff]
        %v680 = vld [vmem:[#allocation2 + $0x1c0] sm:$0xff]
        %v681 = vld [vmem:[#allocation2 + $0x1c8] sm:$0xff]
        %v682 = vld [vmem:[#allocation2 + $0x1d0] sm:$0xff]
        %v683 = vld [vmem:[#allocation2 + $0x1d8] sm:$0xff]
        %v684 = vld [vmem:[#allocation2 + $0x1e0] sm:$0xff]
        %v685 = vld [vmem:[#allocation2 + $0x1e8] sm:$0xff]
        %v686 = vld [vmem:[#allocation2 + $0x1f0] sm:$0xff]
        %v687 = vld [vmem:[#allocation2 + $0x1f8] sm:$0xff]
        %v688 = vld [vmem:[%s3] sm:$0x3]
        %v690 = vlaneseq
        %v691 = vshrl.u32 %v690, 7
        %v692 = vsub.s32 0, %v691
        %v693 = vrot.slane %v688, %v692
        %v694 = vlaneseq
        %v695 = vshrl.u32 %v694, 7
        %v696 = vsub.s32 1, %v695
        %v697 = vrot.slane %v688, %v696
        %700 = vmatprep.subr.mxu0 %v625
        %701 = vmatpush1.msra.mxu0 %v624
        %702 = vmatprep.subr.mxu0 %v627
        %703 = vmatpush1.msra.mxu0 %v626
        %704 = vmatprep.subr.mxu0 %v629
        %705 = vmatpush1.msra.mxu0 %v628
        %706 = vmatprep.subr.mxu0 %v631
        %707 = vmatpush1.msra.mxu0 %v630
        %708 = vmatprep.subr.mxu0 %v633
        %709 = vmatpush1.msra.mxu0 %v632
        %710 = vmatprep.subr.mxu0 %v635
        %711 = vmatpush1.msra.mxu0 %v634
        %712 = vmatprep.subr.mxu0 %v637
        %713 = vmatpush1.msra.mxu0 %v636
        %714 = vmatprep.subr.mxu0 %v639
        %715 = vmatpush1.msra.mxu0 %v638
        %716 = vmatprep.subr.mxu0 %v641
        %717 = vmatpush1.msra.mxu0 %v640
        %718 = vmatprep.subr.mxu0 %v643
        %719 = vmatpush1.msra.mxu0 %v642
        %720 = vmatprep.subr.mxu0 %v645
        %721 = vmatpush1.msra.mxu0 %v644
        %722 = vmatprep.subr.mxu0 %v647
        %723 = vmatpush1.msra.mxu0 %v646
        %724 = vmatprep.subr.mxu0 %v649
        %725 = vmatpush1.msra.mxu0 %v648
        %726 = vmatprep.subr.mxu0 %v651
        %727 = vmatpush1.msra.mxu0 %v650
        %728 = vmatprep.subr.mxu0 %v653
        %729 = vmatpush1.msra.mxu0 %v652
        %730 = vmatprep.subr.mxu0 %v655
        %731 = vmatpush1.msra.mxu0 %v654
        %732 = vmatprep.subr.mxu0 %v657
        %733 = vmatpush1.msra.mxu0 %v656
        %734 = vmatprep.subr.mxu0 %v659
        %735 = vmatpush1.msra.mxu0 %v658
        %736 = vmatprep.subr.mxu0 %v661
        %737 = vmatpush1.msra.mxu0 %v660
        %738 = vmatprep.subr.mxu0 %v663
        %739 = vmatpush1.msra.mxu0 %v662
        %740 = vmatprep.subr.mxu0 %v665
        %741 = vmatpush1.msra.mxu0 %v664
        %742 = vmatprep.subr.mxu0 %v667
        %743 = vmatpush1.msra.mxu0 %v666
        %744 = vmatprep.subr.mxu0 %v669
        %745 = vmatpush1.msra.mxu0 %v668
        %746 = vmatprep.subr.mxu0 %v671
        %747 = vmatpush1.msra.mxu0 %v670
        %748 = vmatprep.subr.mxu0 %v673
        %749 = vmatpush1.msra.mxu0 %v672
        %750 = vmatprep.subr.mxu0 %v675
        %751 = vmatpush1.msra.mxu0 %v674
        %752 = vmatprep.subr.mxu0 %v677
        %753 = vmatpush1.msra.mxu0 %v676
        %754 = vmatprep.subr.mxu0 %v679
        %755 = vmatpush1.msra.mxu0 %v678
        %756 = vmatprep.subr.mxu0 %v681
        %757 = vmatpush1.msra.mxu0 %v680
        %758 = vmatprep.subr.mxu0 %v683
        %759 = vmatpush1.msra.mxu0 %v682
        %760 = vmatprep.subr.mxu0 %v685
        %761 = vmatpush1.msra.mxu0 %v684
        %762 = vmatprep.subr.mxu0 %v687
        %763 = vmatpush1.msra.mxu0 %v686
        %764 = vmatprep.mubr.f32.mxu0 %v593
        %765 = vmatmul.mubr.f32.gmra.mrb[0].mxu0 %v592
        %v766 = vpop.f32.mrb[0].mxu0
        %v767 = vadd.f32 %v693, %v766
        %v768 = vpop.f32.mrb[0].mxu0
        %v769 = vadd.f32 %v697, %v768
        %770 = vmatprep.mubr.f32.mxu0 %v595
        %771 = vmatmul.mubr.f32.gmra.mrb[0].mxu0 %v594
        %v772 = vpop.f32.mrb[0].mxu0
        %v773 = vadd.f32 %v693, %v772
        %v774 = vpop.f32.mrb[0].mxu0
        %v775 = vadd.f32 %v697, %v774
        %776 = vmatprep.mubr.f32.mxu0 %v597
        %777 = vmatmul.mubr.f32.gmra.mrb[0].mxu0 %v596
        %v778 = vpop.f32.mrb[0].mxu0
        %v779 = vadd.f32 %v693, %v778
        %v780 = vpop.f32.mrb[0].mxu0
        %v781 = vadd.f32 %v697, %v780
        %782 = vmatprep.mubr.f32.mxu0 %v599
        %783 = vmatmul.mubr.f32.gmra.mrb[0].mxu0 %v598
        %v784 = vpop.f32.mrb[0].mxu0
        %v785 = vadd.f32 %v693, %v784
        %v786 = vpop.f32.mrb[0].mxu0
        %v787 = vadd.f32 %v697, %v786
        %788 = vmatprep.mubr.f32.mxu0 %v601
        %789 = vmatmul.mubr.f32.gmra.mrb[0].mxu0 %v600
        %v790 = vpop.f32.mrb[0].mxu0
        %v791 = vadd.f32 %v693, %v790
        %v792 = vpop.f32.mrb[0].mxu0
        %v793 = vadd.f32 %v697, %v792
        %794 = vmatprep.mubr.f32.mxu0 %v603
        %795 = vmatmul.mubr.f32.gmra.mrb[0].mxu0 %v602
        %v796 = vpop.f32.mrb[0].mxu0
        %v797 = vadd.f32 %v693, %v796
        %v798 = vpop.f32.mrb[0].mxu0
        %v799 = vadd.f32 %v697, %v798
        %800 = vmatprep.mubr.f32.mxu0 %v605
        %801 = vmatmul.mubr.f32.gmra.mrb[0].mxu0 %v604
        %v802 = vpop.f32.mrb[0].mxu0
        %v803 = vadd.f32 %v693, %v802
        %v804 = vpop.f32.mrb[0].mxu0
        %v805 = vadd.f32 %v697, %v804
        %806 = vmatprep.mubr.f32.mxu0 %v607
        %807 = vmatmul.mubr.f32.gmra.mrb[0].mxu0 %v606
        %v808 = vpop.f32.mrb[0].mxu0
        %v809 = vadd.f32 %v693, %v808
        %v810 = vpop.f32.mrb[0].mxu0
        %v811 = vadd.f32 %v697, %v810
        %812 = vmatprep.mubr.f32.mxu0 %v609
        %813 = vmatmul.mubr.f32.gmra.mrb[0].mxu0 %v608
        %v814 = vpop.f32.mrb[0].mxu0
        %v815 = vadd.f32 %v693, %v814
        %v816 = vpop.f32.mrb[0].mxu0
        %v817 = vadd.f32 %v697, %v816
        %818 = vmatprep.mubr.f32.mxu0 %v611
        %819 = vmatmul.mubr.f32.gmra.mrb[0].mxu0 %v610
        %v820 = vpop.f32.mrb[0].mxu0
        %v821 = vadd.f32 %v693, %v820
        %v822 = vpop.f32.mrb[0].mxu0
        %v823 = vadd.f32 %v697, %v822
        %824 = vmatprep.mubr.f32.mxu0 %v613
        %825 = vmatmul.mubr.f32.gmra.mrb[0].mxu0 %v612
        %v826 = vpop.f32.mrb[0].mxu0
        %v827 = vadd.f32 %v693, %v826
        %v828 = vpop.f32.mrb[0].mxu0
        %v829 = vadd.f32 %v697, %v828
        %830 = vmatprep.mubr.f32.mxu0 %v615
        %831 = vmatmul.mubr.f32.gmra.mrb[0].mxu0 %v614
        %v832 = vpop.f32.mrb[0].mxu0
        %v833 = vadd.f32 %v693, %v832
        %v834 = vpop.f32.mrb[0].mxu0
        %v835 = vadd.f32 %v697, %v834
        %836 = vmatprep.mubr.f32.mxu0 %v617
        %837 = vmatmul.mubr.f32.gmra.mrb[0].mxu0 %v616
        %v838 = vpop.f32.mrb[0].mxu0
        %v839 = vadd.f32 %v693, %v838
        %v840 = vpop.f32.mrb[0].mxu0
        %v841 = vadd.f32 %v697, %v840
        %842 = vmatprep.mubr.f32.mxu0 %v619
        %843 = vmatmul.mubr.f32.gmra.mrb[0].mxu0 %v618
        %v844 = vpop.f32.mrb[0].mxu0
        %v845 = vadd.f32 %v693, %v844
        %v846 = vpop.f32.mrb[0].mxu0
        %v847 = vadd.f32 %v697, %v846
        %848 = vmatprep.mubr.f32.mxu0 %v621
        %849 = vmatmul.mubr.f32.gmra.mrb[0].mxu0 %v620
        %v850 = vpop.f32.mrb[0].mxu0
        %v851 = vadd.f32 %v693, %v850
        %v852 = vpop.f32.mrb[0].mxu0
        %v853 = vadd.f32 %v697, %v852
        %854 = vmatprep.mubr.f32.mxu0 %v623
        %855 = vmatmul.mubr.f32.gmra.mrb[0].mxu0 %v622
        %v856 = vpop.f32.mrb[0].mxu0
        %v857 = vadd.f32 %v693, %v856
        %v858 = vpop.f32.mrb[0].mxu0
        %v859 = vadd.f32 %v697, %v858
        %860 = vdwg.mxu0
        %vm861 = vcmp.gt.f32.partialorder %v767, 0.0
        %vm862 = vcmp.gt.f32.partialorder %v769, 0.0
        %vm863 = vcmp.gt.f32.partialorder %v773, 0.0
        %vm864 = vcmp.gt.f32.partialorder %v775, 0.0
        %vm865 = vcmp.gt.f32.partialorder %v779, 0.0
        %vm866 = vcmp.gt.f32.partialorder %v781, 0.0
        %vm867 = vcmp.gt.f32.partialorder %v785, 0.0
        %vm868 = vcmp.gt.f32.partialorder %v787, 0.0
        %vm869 = vcmp.gt.f32.partialorder %v791, 0.0
        %vm870 = vcmp.gt.f32.partialorder %v793, 0.0
        %vm871 = vcmp.gt.f32.partialorder %v797, 0.0
        %vm872 = vcmp.gt.f32.partialorder %v799, 0.0
        %vm873 = vcmp.gt.f32.partialorder %v803, 0.0
        %vm874 = vcmp.gt.f32.partialorder %v805, 0.0
        %vm875 = vcmp.gt.f32.partialorder %v809, 0.0
        %vm876 = vcmp.gt.f32.partialorder %v811, 0.0
        %vm877 = vcmp.gt.f32.partialorder %v815, 0.0
        %vm878 = vcmp.gt.f32.partialorder %v817, 0.0
        %vm879 = vcmp.gt.f32.partialorder %v821, 0.0
        %vm880 = vcmp.gt.f32.partialorder %v823, 0.0
        %vm881 = vcmp.gt.f32.partialorder %v827, 0.0
        %vm882 = vcmp.gt.f32.partialorder %v829, 0.0
        %vm883 = vcmp.gt.f32.partialorder %v833, 0.0
        %vm884 = vcmp.gt.f32.partialorder %v835, 0.0
        %vm885 = vcmp.gt.f32.partialorder %v839, 0.0
        %vm886 = vcmp.gt.f32.partialorder %v841, 0.0
        %vm887 = vcmp.gt.f32.partialorder %v845, 0.0
        %vm888 = vcmp.gt.f32.partialorder %v847, 0.0
        %vm889 = vcmp.gt.f32.partialorder %v851, 0.0
        %vm890 = vcmp.gt.f32.partialorder %v853, 0.0
        %vm891 = vcmp.gt.f32.partialorder %v857, 0.0
        %vm892 = vcmp.gt.f32.partialorder %v859, 0.0
        %v893 = vmul.f32 %v767, 0.01
        %v894 = vmul.f32 %v769, 0.01
        %v895 = vmul.f32 %v773, 0.01
        %v896 = vmul.f32 %v775, 0.01
        %v897 = vmul.f32 %v779, 0.01
        %v898 = vmul.f32 %v781, 0.01
        %v899 = vmul.f32 %v785, 0.01
        %v900 = vmul.f32 %v787, 0.01
        %v901 = vmul.f32 %v791, 0.01
        %v902 = vmul.f32 %v793, 0.01
        %v903 = vmul.f32 %v797, 0.01
        %v904 = vmul.f32 %v799, 0.01
        %v905 = vmul.f32 %v803, 0.01
        %v906 = vmul.f32 %v805, 0.01
        %v907 = vmul.f32 %v809, 0.01
        %v908 = vmul.f32 %v811, 0.01
        %v909 = vmul.f32 %v815, 0.01
        %v910 = vmul.f32 %v817, 0.01
        %v911 = vmul.f32 %v821, 0.01
        %v912 = vmul.f32 %v823, 0.01
        %v913 = vmul.f32 %v827, 0.01
        %v914 = vmul.f32 %v829, 0.01
        %v915 = vmul.f32 %v833, 0.01
        %v916 = vmul.f32 %v835, 0.01
        %v917 = vmul.f32 %v839, 0.01
        %v918 = vmul.f32 %v841, 0.01
        %v919 = vmul.f32 %v845, 0.01
        %v920 = vmul.f32 %v847, 0.01
        %v921 = vmul.f32 %v851, 0.01
        %v922 = vmul.f32 %v853, 0.01
        %v923 = vmul.f32 %v857, 0.01
        %v924 = vmul.f32 %v859, 0.01
        %v925 = vsel %vm861, %v767, %v893
        %v926 = vsel %vm862, %v769, %v894
        %v927 = vsel %vm863, %v773, %v895
        %v928 = vsel %vm864, %v775, %v896
        %v929 = vsel %vm865, %v779, %v897
        %v930 = vsel %vm866, %v781, %v898
        %v931 = vsel %vm867, %v785, %v899
        %v932 = vsel %vm868, %v787, %v900
        %v933 = vsel %vm869, %v791, %v901
        %v934 = vsel %vm870, %v793, %v902
        %v935 = vsel %vm871, %v797, %v903
        %v936 = vsel %vm872, %v799, %v904
        %v937 = vsel %vm873, %v803, %v905
        %v938 = vsel %vm874, %v805, %v906
        %v939 = vsel %vm875, %v809, %v907
        %v940 = vsel %vm876, %v811, %v908
        %v941 = vsel %vm877, %v815, %v909
        %v942 = vsel %vm878, %v817, %v910
        %v943 = vsel %vm879, %v821, %v911
        %v944 = vsel %vm880, %v823, %v912
        %v945 = vsel %vm881, %v827, %v913
        %v946 = vsel %vm882, %v829, %v914
        %v947 = vsel %vm883, %v833, %v915
        %v948 = vsel %vm884, %v835, %v916
        %v949 = vsel %vm885, %v839, %v917
        %v950 = vsel %vm886, %v841, %v918
        %v951 = vsel %vm887, %v845, %v919
        %v952 = vsel %vm888, %v847, %v920
        %v953 = vsel %vm889, %v851, %v921
        %v954 = vsel %vm890, %v853, %v922
        %v955 = vsel %vm891, %v857, %v923
        %v956 = vsel %vm892, %v859, %v924
        %v957 = vld [vmem:[%s4] sm:$0xff]
        %v958 = vld [vmem:[%s4 + $0x8] sm:$0xff]
        %v959 = vld [vmem:[%s4 + $0x10] sm:$0xff]
        %v960 = vld [vmem:[%s4 + $0x18] sm:$0xff]
        %v961 = vld [vmem:[%s4 + $0x20] sm:$0xff]
        %v962 = vld [vmem:[%s4 + $0x28] sm:$0xff]
        %v963 = vld [vmem:[%s4 + $0x30] sm:$0xff]
        %v964 = vld [vmem:[%s4 + $0x38] sm:$0xff]
        %v965 = vld [vmem:[%s4 + $0x40] sm:$0xff]
        %v966 = vld [vmem:[%s4 + $0x48] sm:$0xff]
        %v967 = vld [vmem:[%s4 + $0x50] sm:$0xff]
        %v968 = vld [vmem:[%s4 + $0x58] sm:$0xff]
        %v969 = vld [vmem:[%s4 + $0x60] sm:$0xff]
        %v970 = vld [vmem:[%s4 + $0x68] sm:$0xff]
        %v971 = vld [vmem:[%s4 + $0x70] sm:$0xff]
        %v972 = vld [vmem:[%s4 + $0x78] sm:$0xff]
        %v973 = vld [vmem:[%s4 + $0x80] sm:$0xff]
        %v974 = vld [vmem:[%s4 + $0x88] sm:$0xff]
        %v975 = vld [vmem:[%s4 + $0x90] sm:$0xff]
        %v976 = vld [vmem:[%s4 + $0x98] sm:$0xff]
        %v977 = vld [vmem:[%s4 + $0xa0] sm:$0xff]
        %v978 = vld [vmem:[%s4 + $0xa8] sm:$0xff]
        %v979 = vld [vmem:[%s4 + $0xb0] sm:$0xff]
        %v980 = vld [vmem:[%s4 + $0xb8] sm:$0xff]
        %v981 = vld [vmem:[%s4 + $0xc0] sm:$0xff]
        %v982 = vld [vmem:[%s4 + $0xc8] sm:$0xff]
        %v983 = vld [vmem:[%s4 + $0xd0] sm:$0xff]
        %v984 = vld [vmem:[%s4 + $0xd8] sm:$0xff]
        %v985 = vld [vmem:[%s4 + $0xe0] sm:$0xff]
        %v986 = vld [vmem:[%s4 + $0xe8] sm:$0xff]
        %v987 = vld [vmem:[%s4 + $0xf0] sm:$0xff]
        %v988 = vld [vmem:[%s4 + $0xf8] sm:$0xff]
        %v989 = vld [vmem:[%s5] sm:$0x1]
        %v991 = vlaneseq
        %v992 = vshrl.u32 %v991, 7
        %v993 = vsub.s32 0, %v992
        %v994 = vrot.slane %v989, %v993
        %996 = vmatprep.subr.mxu0 0.0
        %997 = vmatpush1.msra.mxu0 %v957
        %998 = vmatprep.subr.mxu0 0.0
        %999 = vmatpush1.msra.mxu0 %v958
        %1000 = vmatprep.subr.mxu0 0.0
        %1001 = vmatpush1.msra.mxu0 %v959
        %1002 = vmatprep.subr.mxu0 0.0
        %1003 = vmatpush1.msra.mxu0 %v960
        %1004 = vmatprep.subr.mxu0 0.0
        %1005 = vmatpush1.msra.mxu0 %v961
        %1006 = vmatprep.subr.mxu0 0.0
        %1007 = vmatpush1.msra.mxu0 %v962
        %1008 = vmatprep.subr.mxu0 0.0
        %1009 = vmatpush1.msra.mxu0 %v963
        %1010 = vmatprep.subr.mxu0 0.0
        %1011 = vmatpush1.msra.mxu0 %v964
        %1012 = vmatprep.subr.mxu0 0.0
        %1013 = vmatpush1.msra.mxu0 %v965
        %1014 = vmatprep.subr.mxu0 0.0
        %1015 = vmatpush1.msra.mxu0 %v966
        %1016 = vmatprep.subr.mxu0 0.0
        %1017 = vmatpush1.msra.mxu0 %v967
        %1018 = vmatprep.subr.mxu0 0.0
        %1019 = vmatpush1.msra.mxu0 %v968
        %1020 = vmatprep.subr.mxu0 0.0
        %1021 = vmatpush1.msra.mxu0 %v969
        %1022 = vmatprep.subr.mxu0 0.0
        %1023 = vmatpush1.msra.mxu0 %v970
        %1024 = vmatprep.subr.mxu0 0.0
        %1025 = vmatpush1.msra.mxu0 %v971
        %1026 = vmatprep.subr.mxu0 0.0
        %1027 = vmatpush1.msra.mxu0 %v972
        %1028 = vmatprep.subr.mxu0 0.0
        %1029 = vmatpush1.msra.mxu0 %v973
        %1030 = vmatprep.subr.mxu0 0.0
        %1031 = vmatpush1.msra.mxu0 %v974
        %1032 = vmatprep.subr.mxu0 0.0
        %1033 = vmatpush1.msra.mxu0 %v975
        %1034 = vmatprep.subr.mxu0 0.0
        %1035 = vmatpush1.msra.mxu0 %v976
        %1036 = vmatprep.subr.mxu0 0.0
        %1037 = vmatpush1.msra.mxu0 %v977
        %1038 = vmatprep.subr.mxu0 0.0
        %1039 = vmatpush1.msra.mxu0 %v978
        %1040 = vmatprep.subr.mxu0 0.0
        %1041 = vmatpush1.msra.mxu0 %v979
        %1042 = vmatprep.subr.mxu0 0.0
        %1043 = vmatpush1.msra.mxu0 %v980
        %1044 = vmatprep.subr.mxu0 0.0
        %1045 = vmatpush1.msra.mxu0 %v981
        %1046 = vmatprep.subr.mxu0 0.0
        %1047 = vmatpush1.msra.mxu0 %v982
        %1048 = vmatprep.subr.mxu0 0.0
        %1049 = vmatpush1.msra.mxu0 %v983
        %1050 = vmatprep.subr.mxu0 0.0
        %1051 = vmatpush1.msra.mxu0 %v984
        %1052 = vmatprep.subr.mxu0 0.0
        %1053 = vmatpush1.msra.mxu0 %v985
        %1054 = vmatprep.subr.mxu0 0.0
        %1055 = vmatpush1.msra.mxu0 %v986
        %1056 = vmatprep.subr.mxu0 0.0
        %1057 = vmatpush1.msra.mxu0 %v987
        %1058 = vmatprep.subr.mxu0 0.0
        %1059 = vmatpush1.msra.mxu0 %v988
        %1060 = vmatprep.mubr.f32.mxu0 %v926
        %1061 = vmatmul.mubr.f32.gmra.mrb[0].mxu0 %v925
        %v1062 = vpop.f32.mrb[0].mxu0
        %v1063 = vadd.f32 %v994, %v1062
        %v1064 = vpop.f32.mrb[0].mxu0
        %1065 = vmatprep.mubr.f32.mxu0 %v928
        %1066 = vmatmul.mubr.f32.gmra.mrb[0].mxu0 %v927
        %v1067 = vpop.f32.mrb[0].mxu0
        %v1068 = vadd.f32 %v994, %v1067
        %v1069 = vpop.f32.mrb[0].mxu0
        %1070 = vmatprep.mubr.f32.mxu0 %v930
        %1071 = vmatmul.mubr.f32.gmra.mrb[0].mxu0 %v929
        %v1072 = vpop.f32.mrb[0].mxu0
        %v1073 = vadd.f32 %v994, %v1072
        %v1074 = vpop.f32.mrb[0].mxu0
        %1075 = vmatprep.mubr.f32.mxu0 %v932
        %1076 = vmatmul.mubr.f32.gmra.mrb[0].mxu0 %v931
        %v1077 = vpop.f32.mrb[0].mxu0
        %v1078 = vadd.f32 %v994, %v1077
        %v1079 = vpop.f32.mrb[0].mxu0
        %1080 = vmatprep.mubr.f32.mxu0 %v934
        %1081 = vmatmul.mubr.f32.gmra.mrb[0].mxu0 %v933
        %v1082 = vpop.f32.mrb[0].mxu0
        %v1083 = vadd.f32 %v994, %v1082
        %v1084 = vpop.f32.mrb[0].mxu0
        %1085 = vmatprep.mubr.f32.mxu0 %v936
        %1086 = vmatmul.mubr.f32.gmra.mrb[0].mxu0 %v935
        %v1087 = vpop.f32.mrb[0].mxu0
        %v1088 = vadd.f32 %v994, %v1087
        %v1089 = vpop.f32.mrb[0].mxu0
        %1090 = vmatprep.mubr.f32.mxu0 %v938
        %1091 = vmatmul.mubr.f32.gmra.mrb[0].mxu0 %v937
        %v1092 = vpop.f32.mrb[0].mxu0
        %v1093 = vadd.f32 %v994, %v1092
        %v1094 = vpop.f32.mrb[0].mxu0
        %1095 = vmatprep.mubr.f32.mxu0 %v940
        %1096 = vmatmul.mubr.f32.gmra.mrb[0].mxu0 %v939
        %v1097 = vpop.f32.mrb[0].mxu0
        %v1098 = vadd.f32 %v994, %v1097
        %v1099 = vpop.f32.mrb[0].mxu0
        %1100 = vmatprep.mubr.f32.mxu0 %v942
        %1101 = vmatmul.mubr.f32.gmra.mrb[0].mxu0 %v941
        %v1102 = vpop.f32.mrb[0].mxu0
        %v1103 = vadd.f32 %v994, %v1102
        %v1104 = vpop.f32.mrb[0].mxu0
        %1105 = vmatprep.mubr.f32.mxu0 %v944
        %1106 = vmatmul.mubr.f32.gmra.mrb[0].mxu0 %v943
        %v1107 = vpop.f32.mrb[0].mxu0
        %v1108 = vadd.f32 %v994, %v1107
        %v1109 = vpop.f32.mrb[0].mxu0
        %1110 = vmatprep.mubr.f32.mxu0 %v946
        %1111 = vmatmul.mubr.f32.gmra.mrb[0].mxu0 %v945
        %v1112 = vpop.f32.mrb[0].mxu0
        %v1113 = vadd.f32 %v994, %v1112
        %v1114 = vpop.f32.mrb[0].mxu0
        %1115 = vmatprep.mubr.f32.mxu0 %v948
        %1116 = vmatmul.mubr.f32.gmra.mrb[0].mxu0 %v947
        %v1117 = vpop.f32.mrb[0].mxu0
        %v1118 = vadd.f32 %v994, %v1117
        %v1119 = vpop.f32.mrb[0].mxu0
        %1120 = vmatprep.mubr.f32.mxu0 %v950
        %1121 = vmatmul.mubr.f32.gmra.mrb[0].mxu0 %v949
        %v1122 = vpop.f32.mrb[0].mxu0
        %v1123 = vadd.f32 %v994, %v1122
        %v1124 = vpop.f32.mrb[0].mxu0
        %1125 = vmatprep.mubr.f32.mxu0 %v952
        %1126 = vmatmul.mubr.f32.gmra.mrb[0].mxu0 %v951
        %v1127 = vpop.f32.mrb[0].mxu0
        %v1128 = vadd.f32 %v994, %v1127
        %v1129 = vpop.f32.mrb[0].mxu0
        %1130 = vmatprep.mubr.f32.mxu0 %v954
        %1131 = vmatmul.mubr.f32.gmra.mrb[0].mxu0 %v953
        %v1132 = vpop.f32.mrb[0].mxu0
        %v1133 = vadd.f32 %v994, %v1132
        %v1134 = vpop.f32.mrb[0].mxu0
        %1135 = vmatprep.mubr.f32.mxu0 %v956
        %1136 = vmatmul.mubr.f32.gmra.mrb[0].mxu0 %v955
        %v1137 = vpop.f32.mrb[0].mxu0
        %v1138 = vadd.f32 %v994, %v1137
        %v1139 = vpop.f32.mrb[0].mxu0
        %1140 = vdwg.mxu0
        %v1141 = vtanh.pop %v1063
        %v1142 = vtanh.pop %v1068
        %v1143 = vtanh.pop %v1073
        %v1144 = vtanh.pop %v1078
        %v1145 = vtanh.pop %v1083
        %v1146 = vtanh.pop %v1088
        %v1147 = vtanh.pop %v1093
        %v1148 = vtanh.pop %v1098
        %v1149 = vtanh.pop %v1103
        %v1150 = vtanh.pop %v1108
        %v1151 = vtanh.pop %v1113
        %v1152 = vtanh.pop %v1118
        %v1153 = vtanh.pop %v1123
        %v1154 = vtanh.pop %v1128
        %v1155 = vtanh.pop %v1133
        %v1156 = vtanh.pop %v1138
        %v1157 = vsub.f32 %v270, %v1063
        %v1158 = vsub.f32 %v271, %v1068
        %v1159 = vsub.f32 %v272, %v1073
        %v1160 = vsub.f32 %v273, %v1078
        %v1161 = vsub.f32 %v274, %v1083
        %v1162 = vsub.f32 %v275, %v1088
        %v1163 = vsub.f32 %v276, %v1093
        %v1164 = vsub.f32 %v277, %v1098
        %v1165 = vsub.f32 %v278, %v1103
        %v1166 = vsub.f32 %v279, %v1108
        %v1167 = vsub.f32 %v280, %v1113
        %v1168 = vsub.f32 %v281, %v1118
        %v1169 = vsub.f32 %v282, %v1123
        %v1170 = vsub.f32 %v283, %v1128
        %v1171 = vsub.f32 %v284, %v1133
        %v1172 = vsub.f32 %v285, %v1138
        %v1173 = vsub.f32 0.0, %v1141
        %v1174 = vsub.f32 0.0, %v1142
        %v1175 = vsub.f32 0.0, %v1143
        %v1176 = vsub.f32 0.0, %v1144
        %v1177 = vsub.f32 0.0, %v1145
        %v1178 = vsub.f32 0.0, %v1146
        %v1179 = vsub.f32 0.0, %v1147
        %v1180 = vsub.f32 0.0, %v1148
        %v1181 = vsub.f32 0.0, %v1149
        %v1182 = vsub.f32 0.0, %v1150
        %v1183 = vsub.f32 0.0, %v1151
        %v1184 = vsub.f32 0.0, %v1152
        %v1185 = vsub.f32 0.0, %v1153
        %v1186 = vsub.f32 0.0, %v1154
        %v1187 = vsub.f32 0.0, %v1155
        %v1188 = vsub.f32 0.0, %v1156
        %v1189 = vmul.f32 %v1173, 1.442695
        %v1190 = vpow.pop %v1189
        %v1191 = vmul.f32 %v1174, 1.442695
        %v1192 = vpow.pop %v1191
        %v1193 = vmul.f32 %v1175, 1.442695
        %v1194 = vpow.pop %v1193
        %v1195 = vmul.f32 %v1176, 1.442695
        %v1196 = vpow.pop %v1195
        %v1197 = vmul.f32 %v1177, 1.442695
        %v1198 = vpow.pop %v1197
        %v1199 = vmul.f32 %v1178, 1.442695
        %v1200 = vpow.pop %v1199
        %v1201 = vmul.f32 %v1179, 1.442695
        %v1202 = vpow.pop %v1201
        %v1203 = vmul.f32 %v1180, 1.442695
        %v1204 = vpow.pop %v1203
        %v1205 = vmul.f32 %v1181, 1.442695
        %v1206 = vpow.pop %v1205
        %v1207 = vmul.f32 %v1182, 1.442695
        %v1208 = vpow.pop %v1207
        %v1209 = vmul.f32 %v1183, 1.442695
        %v1210 = vpow.pop %v1209
        %v1211 = vmul.f32 %v1184, 1.442695
        %v1212 = vpow.pop %v1211
        %v1213 = vmul.f32 %v1185, 1.442695
        %v1214 = vpow.pop %v1213
        %v1215 = vmul.f32 %v1186, 1.442695
        %v1216 = vpow.pop %v1215
        %v1217 = vmul.f32 %v1187, 1.442695
        %v1218 = vpow.pop %v1217
        %v1219 = vmul.f32 %v1188, 1.442695
        %v1220 = vpow.pop %v1219
        %1237 = vrot.lane.b32.xlu0 %v1190, 1
        %v1238 = vpop.permute.xlu0 %1237
        %1239 = vrot.lane.b32.xlu0 %v1192, 1
        %v1240 = vpop.permute.xlu0 %1239
        %1241 = vrot.lane.b32.xlu0 %v1194, 1
        %v1242 = vpop.permute.xlu0 %1241
        %1243 = vrot.lane.b32.xlu0 %v1196, 1
        %v1244 = vpop.permute.xlu0 %1243
        %1245 = vrot.lane.b32.xlu0 %v1198, 1
        %v1246 = vpop.permute.xlu0 %1245
        %1247 = vrot.lane.b32.xlu0 %v1200, 1
        %v1248 = vpop.permute.xlu0 %1247
        %1249 = vrot.lane.b32.xlu0 %v1202, 1
        %v1250 = vpop.permute.xlu0 %1249
        %1251 = vrot.lane.b32.xlu0 %v1204, 1
        %v1252 = vpop.permute.xlu0 %1251
        %1253 = vrot.lane.b32.xlu0 %v1206, 1
        %v1254 = vpop.permute.xlu0 %1253
        %1255 = vrot.lane.b32.xlu0 %v1208, 1
        %v1256 = vpop.permute.xlu0 %1255
        %1257 = vrot.lane.b32.xlu0 %v1210, 1
        %v1258 = vpop.permute.xlu0 %1257
        %1259 = vrot.lane.b32.xlu0 %v1212, 1
        %v1260 = vpop.permute.xlu0 %1259
        %1261 = vrot.lane.b32.xlu0 %v1214, 1
        %v1262 = vpop.permute.xlu0 %1261
        %1263 = vrot.lane.b32.xlu0 %v1216, 1
        %v1264 = vpop.permute.xlu0 %1263
        %1265 = vrot.lane.b32.xlu0 %v1218, 1
        %v1266 = vpop.permute.xlu0 %1265
        %1267 = vrot.lane.b32.xlu0 %v1220, 1
        %v1268 = vpop.permute.xlu0 %1267
        %v1285 = vmul.f32 %v1157, %v1238
        %v1286 = vmul.f32 %v1158, %v1240
        %v1287 = vmul.f32 %v1159, %v1242
        %v1288 = vmul.f32 %v1160, %v1244
        %v1289 = vmul.f32 %v1161, %v1246
        %v1290 = vmul.f32 %v1162, %v1248
        %v1291 = vmul.f32 %v1163, %v1250
        %v1292 = vmul.f32 %v1164, %v1252
        %v1293 = vmul.f32 %v1165, %v1254
        %v1294 = vmul.f32 %v1166, %v1256
        %v1295 = vmul.f32 %v1167, %v1258
        %v1296 = vmul.f32 %v1168, %v1260
        %v1297 = vmul.f32 %v1169, %v1262
        %v1298 = vmul.f32 %v1170, %v1264
        %v1299 = vmul.f32 %v1171, %v1266
        %v1300 = vmul.f32 %v1172, %v1268
        %1317 = vrot.lane.b32.xlu0 %v1285, 127
        %v1318 = vpop.permute.xlu0 %1317
        %1319 = vrot.lane.b32.xlu0 %v1286, 127
        %v1320 = vpop.permute.xlu0 %1319
        %1321 = vrot.lane.b32.xlu0 %v1287, 127
        %v1322 = vpop.permute.xlu0 %1321
        %1323 = vrot.lane.b32.xlu0 %v1288, 127
        %v1324 = vpop.permute.xlu0 %1323
        %1325 = vrot.lane.b32.xlu0 %v1289, 127
        %v1326 = vpop.permute.xlu0 %1325
        %1327 = vrot.lane.b32.xlu0 %v1290, 127
        %v1328 = vpop.permute.xlu0 %1327
        %1329 = vrot.lane.b32.xlu0 %v1291, 127
        %v1330 = vpop.permute.xlu0 %1329
        %1331 = vrot.lane.b32.xlu0 %v1292, 127
        %v1332 = vpop.permute.xlu0 %1331
        %1333 = vrot.lane.b32.xlu0 %v1293, 127
        %v1334 = vpop.permute.xlu0 %1333
        %1335 = vrot.lane.b32.xlu0 %v1294, 127
        %v1336 = vpop.permute.xlu0 %1335
        %1337 = vrot.lane.b32.xlu0 %v1295, 127
        %v1338 = vpop.permute.xlu0 %1337
        %1339 = vrot.lane.b32.xlu0 %v1296, 127
        %v1340 = vpop.permute.xlu0 %1339
        %1341 = vrot.lane.b32.xlu0 %v1297, 127
        %v1342 = vpop.permute.xlu0 %1341
        %1343 = vrot.lane.b32.xlu0 %v1298, 127
        %v1344 = vpop.permute.xlu0 %1343
        %1345 = vrot.lane.b32.xlu0 %v1299, 127
        %v1346 = vpop.permute.xlu0 %1345
        %1347 = vrot.lane.b32.xlu0 %v1300, 127
        %v1348 = vpop.permute.xlu0 %1347
        %v1365 = vsel %vm286, %v1318, 1.0
        %v1366 = vsel %vm286, %v1320, 1.0
        %v1367 = vsel %vm286, %v1322, 1.0
        %v1368 = vsel %vm286, %v1324, 1.0
        %v1369 = vsel %vm286, %v1326, 1.0
        %v1370 = vsel %vm286, %v1328, 1.0
        %v1371 = vsel %vm286, %v1330, 1.0
        %v1372 = vsel %vm286, %v1332, 1.0
        %v1373 = vsel %vm286, %v1334, 1.0
        %v1374 = vsel %vm286, %v1336, 1.0
        %v1375 = vsel %vm286, %v1338, 1.0
        %v1376 = vsel %vm286, %v1340, 1.0
        %v1377 = vsel %vm286, %v1342, 1.0
        %v1378 = vsel %vm286, %v1344, 1.0
        %v1379 = vsel %vm286, %v1346, 1.0
        %v1380 = vsel %vm286, %v1348, 1.0
        %s1381 = scalar_lea.vmem %s1, 4
        %v1382 = vld [vmem:[%s1381] sm:$0xf]
        %v1385 = vunpack.c.l.s4 1983009808
        %v1386 = vunpack.c.0.s8 %v1385
        %v1387 = vlaneseq
        %v1388 = vshrl.u32 %v1387, 7
        %v1389 = vsub.s32 %v1386, %v1388
        %v1390 = vrot.slane %v1382, %v1389
        %v1391 = vcombine.high %v1390, %v1390
        %v1393 = vsel %vm313, %v1365, 0
        %v1396 = vsel %vm313, %v1366, 0
        %v1399 = vsel %vm313, %v1367, 0
        %v1402 = vsel %vm313, %v1368, 0
        %v1405 = vsel %vm313, %v1369, 0
        %v1408 = vsel %vm313, %v1370, 0
        %v1411 = vsel %vm313, %v1371, 0
        %v1414 = vsel %vm313, %v1372, 0
        %v1417 = vsel %vm313, %v1373, 0
        %v1420 = vsel %vm313, %v1374, 0
        %v1423 = vsel %vm313, %v1375, 0
        %v1426 = vsel %vm313, %v1376, 0
        %v1429 = vsel %vm313, %v1377, 0
        %v1432 = vsel %vm313, %v1378, 0
        %v1435 = vsel %vm313, %v1379, 0
        %v1438 = vsel %vm313, %v1380, 0
        %v1440 = vsel %vm362, %v1390, 0
        %v1442 = vsel %vm362, %v1391, 0
        %1444 = vmatprep.subr.mxu0 %v1442
        %1445 = vmatpush1.msra.mxu0 %v1440
        %1446 = vmatprep.subr.mxu0 0.0
        %1447 = vmatpush1.msra.mxu0 0.0
        %1448 = vmatprep.subr.mxu0 0.0
        %1449 = vmatpush1.msra.mxu0 0.0
        %1450 = vmatprep.subr.mxu0 0.0
        %1451 = vmatpush1.msra.mxu0 0.0
        %1452 = vmatprep.subr.mxu0 0.0
        %1453 = vmatpush1.msra.mxu0 0.0
        %1454 = vmatprep.subr.mxu0 0.0
        %1455 = vmatpush1.msra.mxu0 0.0
        %1456 = vmatprep.subr.mxu0 0.0
        %1457 = vmatpush1.msra.mxu0 0.0
        %1458 = vmatprep.subr.mxu0 0.0
        %1459 = vmatpush1.msra.mxu0 0.0
        %1460 = vmatprep.subr.mxu0 0.0
        %1461 = vmatpush1.msra.mxu0 0.0
        %1462 = vmatprep.subr.mxu0 0.0
        %1463 = vmatpush1.msra.mxu0 0.0
        %1464 = vmatprep.subr.mxu0 0.0
        %1465 = vmatpush1.msra.mxu0 0.0
        %1466 = vmatprep.subr.mxu0 0.0
        %1467 = vmatpush1.msra.mxu0 0.0
        %1468 = vmatprep.subr.mxu0 0.0
        %1469 = vmatpush1.msra.mxu0 0.0
        %1470 = vmatprep.subr.mxu0 0.0
        %1471 = vmatpush1.msra.mxu0 0.0
        %1472 = vmatprep.subr.mxu0 0.0
        %1473 = vmatpush1.msra.mxu0 0.0
        %1474 = vmatprep.subr.mxu0 0.0
        %1475 = vmatpush1.msra.mxu0 0.0
        %1476 = vmatprep.subr.mxu0 0.0
        %1477 = vmatpush1.msra.mxu0 0.0
        %1478 = vmatprep.subr.mxu0 0.0
        %1479 = vmatpush1.msra.mxu0 0.0
        %1480 = vmatprep.subr.mxu0 0.0
        %1481 = vmatpush1.msra.mxu0 0.0
        %1482 = vmatprep.subr.mxu0 0.0
        %1483 = vmatpush1.msra.mxu0 0.0
        %1484 = vmatprep.subr.mxu0 0.0
        %1485 = vmatpush1.msra.mxu0 0.0
        %1486 = vmatprep.subr.mxu0 0.0
        %1487 = vmatpush1.msra.mxu0 0.0
        %1488 = vmatprep.subr.mxu0 0.0
        %1489 = vmatpush1.msra.mxu0 0.0
        %1490 = vmatprep.subr.mxu0 0.0
        %1491 = vmatpush1.msra.mxu0 0.0
        %1492 = vmatprep.subr.mxu0 0.0
        %1493 = vmatpush1.msra.mxu0 0.0
        %1494 = vmatprep.subr.mxu0 0.0
        %1495 = vmatpush1.msra.mxu0 0.0
        %1496 = vmatprep.subr.mxu0 0.0
        %1497 = vmatpush1.msra.mxu0 0.0
        %1498 = vmatprep.subr.mxu0 0.0
        %1499 = vmatpush1.msra.mxu0 0.0
        %1500 = vmatprep.subr.mxu0 0.0
        %1501 = vmatpush1.msra.mxu0 0.0
        %1502 = vmatprep.subr.mxu0 0.0
        %1503 = vmatpush1.msra.mxu0 0.0
        %1504 = vmatprep.subr.mxu0 0.0
        %1505 = vmatpush1.msra.mxu0 0.0
        %1506 = vmatprep.subr.mxu0 0.0
        %1507 = vmatpush1.msra.mxu0 0.0
        %1508 = vmatprep.mubr.f32.mxu0 0.0
        %1509 = vmatmul.mubr.f32.gmra.mrb[0].mxu0 %v1393
        %v1510 = vpop.f32.mrb[0].mxu0
        %v1511 = vadd.f32 0.0, %v1510
        %v1512 = vpop.f32.mrb[0].mxu0
        %v1513 = vadd.f32 0.0, %v1512
        %1514 = vmatprep.mubr.f32.mxu0 0.0
        %1515 = vmatmul.mubr.f32.gmra.mrb[0].mxu0 %v1396
        %v1516 = vpop.f32.mrb[0].mxu0
        %v1517 = vadd.f32 0.0, %v1516
        %v1518 = vpop.f32.mrb[0].mxu0
        %v1519 = vadd.f32 0.0, %v1518
        %1520 = vmatprep.mubr.f32.mxu0 0.0
        %1521 = vmatmul.mubr.f32.gmra.mrb[0].mxu0 %v1399
        %v1522 = vpop.f32.mrb[0].mxu0
        %v1523 = vadd.f32 0.0, %v1522
        %v1524 = vpop.f32.mrb[0].mxu0
        %v1525 = vadd.f32 0.0, %v1524
        %1526 = vmatprep.mubr.f32.mxu0 0.0
        %1527 = vmatmul.mubr.f32.gmra.mrb[0].mxu0 %v1402
        %v1528 = vpop.f32.mrb[0].mxu0
        %v1529 = vadd.f32 0.0, %v1528
        %v1530 = vpop.f32.mrb[0].mxu0
        %v1531 = vadd.f32 0.0, %v1530
        %1532 = vmatprep.mubr.f32.mxu0 0.0
        %1533 = vmatmul.mubr.f32.gmra.mrb[0].mxu0 %v1405
        %v1534 = vpop.f32.mrb[0].mxu0
        %v1535 = vadd.f32 0.0, %v1534
        %v1536 = vpop.f32.mrb[0].mxu0
        %v1537 = vadd.f32 0.0, %v1536
        %1538 = vmatprep.mubr.f32.mxu0 0.0
        %1539 = vmatmul.mubr.f32.gmra.mrb[0].mxu0 %v1408
        %v1540 = vpop.f32.mrb[0].mxu0
        %v1541 = vadd.f32 0.0, %v1540
        %v1542 = vpop.f32.mrb[0].mxu0
        %v1543 = vadd.f32 0.0, %v1542
        %1544 = vmatprep.mubr.f32.mxu0 0.0
        %1545 = vmatmul.mubr.f32.gmra.mrb[0].mxu0 %v1411
        %v1546 = vpop.f32.mrb[0].mxu0
        %v1547 = vadd.f32 0.0, %v1546
        %v1548 = vpop.f32.mrb[0].mxu0
        %v1549 = vadd.f32 0.0, %v1548
        %1550 = vmatprep.mubr.f32.mxu0 0.0
        %1551 = vmatmul.mubr.f32.gmra.mrb[0].mxu0 %v1414
        %v1552 = vpop.f32.mrb[0].mxu0
        %v1553 = vadd.f32 0.0, %v1552
        %v1554 = vpop.f32.mrb[0].mxu0
        %v1555 = vadd.f32 0.0, %v1554
        %1556 = vmatprep.mubr.f32.mxu0 0.0
        %1557 = vmatmul.mubr.f32.gmra.mrb[0].mxu0 %v1417
        %v1558 = vpop.f32.mrb[0].mxu0
        %v1559 = vadd.f32 0.0, %v1558
        %v1560 = vpop.f32.mrb[0].mxu0
        %v1561 = vadd.f32 0.0, %v1560
        %1562 = vmatprep.mubr.f32.mxu0 0.0
        %1563 = vmatmul.mubr.f32.gmra.mrb[0].mxu0 %v1420
        %v1564 = vpop.f32.mrb[0].mxu0
        %v1565 = vadd.f32 0.0, %v1564
        %v1566 = vpop.f32.mrb[0].mxu0
        %v1567 = vadd.f32 0.0, %v1566
        %1568 = vmatprep.mubr.f32.mxu0 0.0
        %1569 = vmatmul.mubr.f32.gmra.mrb[0].mxu0 %v1423
        %v1570 = vpop.f32.mrb[0].mxu0
        %v1571 = vadd.f32 0.0, %v1570
        %v1572 = vpop.f32.mrb[0].mxu0
        %v1573 = vadd.f32 0.0, %v1572
        %1574 = vmatprep.mubr.f32.mxu0 0.0
        %1575 = vmatmul.mubr.f32.gmra.mrb[0].mxu0 %v1426
        %v1576 = vpop.f32.mrb[0].mxu0
        %v1577 = vadd.f32 0.0, %v1576
        %v1578 = vpop.f32.mrb[0].mxu0
        %v1579 = vadd.f32 0.0, %v1578
        %1580 = vmatprep.mubr.f32.mxu0 0.0
        %1581 = vmatmul.mubr.f32.gmra.mrb[0].mxu0 %v1429
        %v1582 = vpop.f32.mrb[0].mxu0
        %v1583 = vadd.f32 0.0, %v1582
        %v1584 = vpop.f32.mrb[0].mxu0
        %v1585 = vadd.f32 0.0, %v1584
        %1586 = vmatprep.mubr.f32.mxu0 0.0
        %1587 = vmatmul.mubr.f32.gmra.mrb[0].mxu0 %v1432
        %v1588 = vpop.f32.mrb[0].mxu0
        %v1589 = vadd.f32 0.0, %v1588
        %v1590 = vpop.f32.mrb[0].mxu0
        %v1591 = vadd.f32 0.0, %v1590
        %1592 = vmatprep.mubr.f32.mxu0 0.0
        %1593 = vmatmul.mubr.f32.gmra.mrb[0].mxu0 %v1435
        %v1594 = vpop.f32.mrb[0].mxu0
        %v1595 = vadd.f32 0.0, %v1594
        %v1596 = vpop.f32.mrb[0].mxu0
        %v1597 = vadd.f32 0.0, %v1596
        %1598 = vmatprep.mubr.f32.mxu0 0.0
        %1599 = vmatmul.mubr.f32.gmra.mrb[0].mxu0 %v1438
        %v1600 = vpop.f32.mrb[0].mxu0
        %v1601 = vadd.f32 0.0, %v1600
        %v1602 = vpop.f32.mrb[0].mxu0
        %v1603 = vadd.f32 0.0, %v1602
        %1604 = vdwg.mxu0
        %vm1605 = vcmp.gt.f32.partialorder %v1511, 0.0
        %vm1606 = vcmp.gt.f32.partialorder %v1513, 0.0
        %vm1607 = vcmp.gt.f32.partialorder %v1517, 0.0
        %vm1608 = vcmp.gt.f32.partialorder %v1519, 0.0
        %vm1609 = vcmp.gt.f32.partialorder %v1523, 0.0
        %vm1610 = vcmp.gt.f32.partialorder %v1525, 0.0
        %vm1611 = vcmp.gt.f32.partialorder %v1529, 0.0
        %vm1612 = vcmp.gt.f32.partialorder %v1531, 0.0
        %vm1613 = vcmp.gt.f32.partialorder %v1535, 0.0
        %vm1614 = vcmp.gt.f32.partialorder %v1537, 0.0
        %vm1615 = vcmp.gt.f32.partialorder %v1541, 0.0
        %vm1616 = vcmp.gt.f32.partialorder %v1543, 0.0
        %vm1617 = vcmp.gt.f32.partialorder %v1547, 0.0
        %vm1618 = vcmp.gt.f32.partialorder %v1549, 0.0
        %vm1619 = vcmp.gt.f32.partialorder %v1553, 0.0
        %vm1620 = vcmp.gt.f32.partialorder %v1555, 0.0
        %vm1621 = vcmp.gt.f32.partialorder %v1559, 0.0
        %vm1622 = vcmp.gt.f32.partialorder %v1561, 0.0
        %vm1623 = vcmp.gt.f32.partialorder %v1565, 0.0
        %vm1624 = vcmp.gt.f32.partialorder %v1567, 0.0
        %vm1625 = vcmp.gt.f32.partialorder %v1571, 0.0
        %vm1626 = vcmp.gt.f32.partialorder %v1573, 0.0
        %vm1627 = vcmp.gt.f32.partialorder %v1577, 0.0
        %vm1628 = vcmp.gt.f32.partialorder %v1579, 0.0
        %vm1629 = vcmp.gt.f32.partialorder %v1583, 0.0
        %vm1630 = vcmp.gt.f32.partialorder %v1585, 0.0
        %vm1631 = vcmp.gt.f32.partialorder %v1589, 0.0
        %vm1632 = vcmp.gt.f32.partialorder %v1591, 0.0
        %vm1633 = vcmp.gt.f32.partialorder %v1595, 0.0
        %vm1634 = vcmp.gt.f32.partialorder %v1597, 0.0
        %vm1635 = vcmp.gt.f32.partialorder %v1601, 0.0
        %vm1636 = vcmp.gt.f32.partialorder %v1603, 0.0
        %v1637 = vmul.f32 %v1511, 0.01
        %v1638 = vmul.f32 %v1513, 0.01
        %v1639 = vmul.f32 %v1517, 0.01
        %v1640 = vmul.f32 %v1519, 0.01
        %v1641 = vmul.f32 %v1523, 0.01
        %v1642 = vmul.f32 %v1525, 0.01
        %v1643 = vmul.f32 %v1529, 0.01
        %v1644 = vmul.f32 %v1531, 0.01
        %v1645 = vmul.f32 %v1535, 0.01
        %v1646 = vmul.f32 %v1537, 0.01
        %v1647 = vmul.f32 %v1541, 0.01
        %v1648 = vmul.f32 %v1543, 0.01
        %v1649 = vmul.f32 %v1547, 0.01
        %v1650 = vmul.f32 %v1549, 0.01
        %v1651 = vmul.f32 %v1553, 0.01
        %v1652 = vmul.f32 %v1555, 0.01
        %v1653 = vmul.f32 %v1559, 0.01
        %v1654 = vmul.f32 %v1561, 0.01
        %v1655 = vmul.f32 %v1565, 0.01
        %v1656 = vmul.f32 %v1567, 0.01
        %v1657 = vmul.f32 %v1571, 0.01
        %v1658 = vmul.f32 %v1573, 0.01
        %v1659 = vmul.f32 %v1577, 0.01
        %v1660 = vmul.f32 %v1579, 0.01
        %v1661 = vmul.f32 %v1583, 0.01
        %v1662 = vmul.f32 %v1585, 0.01
        %v1663 = vmul.f32 %v1589, 0.01
        %v1664 = vmul.f32 %v1591, 0.01
        %v1665 = vmul.f32 %v1595, 0.01
        %v1666 = vmul.f32 %v1597, 0.01
        %v1667 = vmul.f32 %v1601, 0.01
        %v1668 = vmul.f32 %v1603, 0.01
        %v1669 = vsel %vm1605, %v1511, %v1637
        %v1670 = vsel %vm1606, %v1513, %v1638
        %v1671 = vsel %vm1607, %v1517, %v1639
        %v1672 = vsel %vm1608, %v1519, %v1640
        %v1673 = vsel %vm1609, %v1523, %v1641
        %v1674 = vsel %vm1610, %v1525, %v1642
        %v1675 = vsel %vm1611, %v1529, %v1643
        %v1676 = vsel %vm1612, %v1531, %v1644
        %v1677 = vsel %vm1613, %v1535, %v1645
        %v1678 = vsel %vm1614, %v1537, %v1646
        %v1679 = vsel %vm1615, %v1541, %v1647
        %v1680 = vsel %vm1616, %v1543, %v1648
        %v1681 = vsel %vm1617, %v1547, %v1649
        %v1682 = vsel %vm1618, %v1549, %v1650
        %v1683 = vsel %vm1619, %v1553, %v1651
        %v1684 = vsel %vm1620, %v1555, %v1652
        %v1685 = vsel %vm1621, %v1559, %v1653
        %v1686 = vsel %vm1622, %v1561, %v1654
        %v1687 = vsel %vm1623, %v1565, %v1655
        %v1688 = vsel %vm1624, %v1567, %v1656
        %v1689 = vsel %vm1625, %v1571, %v1657
        %v1690 = vsel %vm1626, %v1573, %v1658
        %v1691 = vsel %vm1627, %v1577, %v1659
        %v1692 = vsel %vm1628, %v1579, %v1660
        %v1693 = vsel %vm1629, %v1583, %v1661
        %v1694 = vsel %vm1630, %v1585, %v1662
        %v1695 = vsel %vm1631, %v1589, %v1663
        %v1696 = vsel %vm1632, %v1591, %v1664
        %v1697 = vsel %vm1633, %v1595, %v1665
        %v1698 = vsel %vm1634, %v1597, %v1666
        %v1699 = vsel %vm1635, %v1601, %v1667
        %v1700 = vsel %vm1636, %v1603, %v1668
        %s1701 = scalar_lea.vmem [#allocation2], 512
        %v1702 = vld [vmem:[%s1701] sm:$0xff]
        %v1703 = vld [vmem:[%s1701 + $0x8] sm:$0xff]
        %v1704 = vld [vmem:[%s1701 + $0x10] sm:$0xff]
        %v1705 = vld [vmem:[%s1701 + $0x18] sm:$0xff]
        %v1706 = vld [vmem:[%s1701 + $0x20] sm:$0xff]
        %v1707 = vld [vmem:[%s1701 + $0x28] sm:$0xff]
        %v1708 = vld [vmem:[%s1701 + $0x30] sm:$0xff]
        %v1709 = vld [vmem:[%s1701 + $0x38] sm:$0xff]
        %v1710 = vld [vmem:[%s1701 + $0x40] sm:$0xff]
        %v1711 = vld [vmem:[%s1701 + $0x48] sm:$0xff]
        %v1712 = vld [vmem:[%s1701 + $0x50] sm:$0xff]
        %v1713 = vld [vmem:[%s1701 + $0x58] sm:$0xff]
        %v1714 = vld [vmem:[%s1701 + $0x60] sm:$0xff]
        %v1715 = vld [vmem:[%s1701 + $0x68] sm:$0xff]
        %v1716 = vld [vmem:[%s1701 + $0x70] sm:$0xff]
        %v1717 = vld [vmem:[%s1701 + $0x78] sm:$0xff]
        %v1718 = vld [vmem:[%s1701 + $0x80] sm:$0xff]
        %v1719 = vld [vmem:[%s1701 + $0x88] sm:$0xff]
        %v1720 = vld [vmem:[%s1701 + $0x90] sm:$0xff]
        %v1721 = vld [vmem:[%s1701 + $0x98] sm:$0xff]
        %v1722 = vld [vmem:[%s1701 + $0xa0] sm:$0xff]
        %v1723 = vld [vmem:[%s1701 + $0xa8] sm:$0xff]
        %v1724 = vld [vmem:[%s1701 + $0xb0] sm:$0xff]
        %v1725 = vld [vmem:[%s1701 + $0xb8] sm:$0xff]
        %v1726 = vld [vmem:[%s1701 + $0xc0] sm:$0xff]
        %v1727 = vld [vmem:[%s1701 + $0xc8] sm:$0xff]
        %v1728 = vld [vmem:[%s1701 + $0xd0] sm:$0xff]
        %v1729 = vld [vmem:[%s1701 + $0xd8] sm:$0xff]
        %v1730 = vld [vmem:[%s1701 + $0xe0] sm:$0xff]
        %v1731 = vld [vmem:[%s1701 + $0xe8] sm:$0xff]
        %v1732 = vld [vmem:[%s1701 + $0xf0] sm:$0xff]
        %v1733 = vld [vmem:[%s1701 + $0xf8] sm:$0xff]
        %v1734 = vld [vmem:[%s1701 + $0x100] sm:$0xff]
        %v1735 = vld [vmem:[%s1701 + $0x108] sm:$0xff]
        %v1736 = vld [vmem:[%s1701 + $0x110] sm:$0xff]
        %v1737 = vld [vmem:[%s1701 + $0x118] sm:$0xff]
        %v1738 = vld [vmem:[%s1701 + $0x120] sm:$0xff]
        %v1739 = vld [vmem:[%s1701 + $0x128] sm:$0xff]
        %v1740 = vld [vmem:[%s1701 + $0x130] sm:$0xff]
        %v1741 = vld [vmem:[%s1701 + $0x138] sm:$0xff]
        %v1742 = vld [vmem:[%s1701 + $0x140] sm:$0xff]
        %v1743 = vld [vmem:[%s1701 + $0x148] sm:$0xff]
        %v1744 = vld [vmem:[%s1701 + $0x150] sm:$0xff]
        %v1745 = vld [vmem:[%s1701 + $0x158] sm:$0xff]
        %v1746 = vld [vmem:[%s1701 + $0x160] sm:$0xff]
        %v1747 = vld [vmem:[%s1701 + $0x168] sm:$0xff]
        %v1748 = vld [vmem:[%s1701 + $0x170] sm:$0xff]
        %v1749 = vld [vmem:[%s1701 + $0x178] sm:$0xff]
        %v1750 = vld [vmem:[%s1701 + $0x180] sm:$0xff]
        %v1751 = vld [vmem:[%s1701 + $0x188] sm:$0xff]
        %v1752 = vld [vmem:[%s1701 + $0x190] sm:$0xff]
        %v1753 = vld [vmem:[%s1701 + $0x198] sm:$0xff]
        %v1754 = vld [vmem:[%s1701 + $0x1a0] sm:$0xff]
        %v1755 = vld [vmem:[%s1701 + $0x1a8] sm:$0xff]
        %v1756 = vld [vmem:[%s1701 + $0x1b0] sm:$0xff]
        %v1757 = vld [vmem:[%s1701 + $0x1b8] sm:$0xff]
        %v1758 = vld [vmem:[%s1701 + $0x1c0] sm:$0xff]
        %v1759 = vld [vmem:[%s1701 + $0x1c8] sm:$0xff]
        %v1760 = vld [vmem:[%s1701 + $0x1d0] sm:$0xff]
        %v1761 = vld [vmem:[%s1701 + $0x1d8] sm:$0xff]
        %v1762 = vld [vmem:[%s1701 + $0x1e0] sm:$0xff]
        %v1763 = vld [vmem:[%s1701 + $0x1e8] sm:$0xff]
        %v1764 = vld [vmem:[%s1701 + $0x1f0] sm:$0xff]
        %v1765 = vld [vmem:[%s1701 + $0x1f8] sm:$0xff]
        %s1766 = scalar_lea.vmem %s3, 2
        %v1767 = vld [vmem:[%s1766] sm:$0x3]
        %v1769 = vlaneseq
        %v1770 = vshrl.u32 %v1769, 7
        %v1771 = vsub.s32 0, %v1770
        %v1772 = vrot.slane %v1767, %v1771
        %v1773 = vlaneseq
        %v1774 = vshrl.u32 %v1773, 7
        %v1775 = vsub.s32 1, %v1774
        %v1776 = vrot.slane %v1767, %v1775
        %1779 = vmatprep.subr.mxu0 %v1703
        %1780 = vmatpush1.msra.mxu0 %v1702
        %1781 = vmatprep.subr.mxu0 %v1705
        %1782 = vmatpush1.msra.mxu0 %v1704
        %1783 = vmatprep.subr.mxu0 %v1707
        %1784 = vmatpush1.msra.mxu0 %v1706
        %1785 = vmatprep.subr.mxu0 %v1709
        %1786 = vmatpush1.msra.mxu0 %v1708
        %1787 = vmatprep.subr.mxu0 %v1711
        %1788 = vmatpush1.msra.mxu0 %v1710
        %1789 = vmatprep.subr.mxu0 %v1713
        %1790 = vmatpush1.msra.mxu0 %v1712
        %1791 = vmatprep.subr.mxu0 %v1715
        %1792 = vmatpush1.msra.mxu0 %v1714
        %1793 = vmatprep.subr.mxu0 %v1717
        %1794 = vmatpush1.msra.mxu0 %v1716
        %1795 = vmatprep.subr.mxu0 %v1719
        %1796 = vmatpush1.msra.mxu0 %v1718
        %1797 = vmatprep.subr.mxu0 %v1721
        %1798 = vmatpush1.msra.mxu0 %v1720
        %1799 = vmatprep.subr.mxu0 %v1723
        %1800 = vmatpush1.msra.mxu0 %v1722
        %1801 = vmatprep.subr.mxu0 %v1725
        %1802 = vmatpush1.msra.mxu0 %v1724
        %1803 = vmatprep.subr.mxu0 %v1727
        %1804 = vmatpush1.msra.mxu0 %v1726
        %1805 = vmatprep.subr.mxu0 %v1729
        %1806 = vmatpush1.msra.mxu0 %v1728
        %1807 = vmatprep.subr.mxu0 %v1731
        %1808 = vmatpush1.msra.mxu0 %v1730
        %1809 = vmatprep.subr.mxu0 %v1733
        %1810 = vmatpush1.msra.mxu0 %v1732
        %1811 = vmatprep.subr.mxu0 %v1735
        %1812 = vmatpush1.msra.mxu0 %v1734
        %1813 = vmatprep.subr.mxu0 %v1737
        %1814 = vmatpush1.msra.mxu0 %v1736
        %1815 = vmatprep.subr.mxu0 %v1739
        %1816 = vmatpush1.msra.mxu0 %v1738
        %1817 = vmatprep.subr.mxu0 %v1741
        %1818 = vmatpush1.msra.mxu0 %v1740
        %1819 = vmatprep.subr.mxu0 %v1743
        %1820 = vmatpush1.msra.mxu0 %v1742
        %1821 = vmatprep.subr.mxu0 %v1745
        %1822 = vmatpush1.msra.mxu0 %v1744
        %1823 = vmatprep.subr.mxu0 %v1747
        %1824 = vmatpush1.msra.mxu0 %v1746
        %1825 = vmatprep.subr.mxu0 %v1749
        %1826 = vmatpush1.msra.mxu0 %v1748
        %1827 = vmatprep.subr.mxu0 %v1751
        %1828 = vmatpush1.msra.mxu0 %v1750
        %1829 = vmatprep.subr.mxu0 %v1753
        %1830 = vmatpush1.msra.mxu0 %v1752
        %1831 = vmatprep.subr.mxu0 %v1755
        %1832 = vmatpush1.msra.mxu0 %v1754
        %1833 = vmatprep.subr.mxu0 %v1757
        %1834 = vmatpush1.msra.mxu0 %v1756
        %1835 = vmatprep.subr.mxu0 %v1759
        %1836 = vmatpush1.msra.mxu0 %v1758
        %1837 = vmatprep.subr.mxu0 %v1761
        %1838 = vmatpush1.msra.mxu0 %v1760
        %1839 = vmatprep.subr.mxu0 %v1763
        %1840 = vmatpush1.msra.mxu0 %v1762
        %1841 = vmatprep.subr.mxu0 %v1765
        %1842 = vmatpush1.msra.mxu0 %v1764
        %1843 = vmatprep.mubr.f32.mxu0 %v1670
        %1844 = vmatmul.mubr.f32.gmra.mrb[0].mxu0 %v1669
        %v1845 = vpop.f32.mrb[0].mxu0
        %v1846 = vadd.f32 %v1772, %v1845
        %v1847 = vpop.f32.mrb[0].mxu0
        %v1848 = vadd.f32 %v1776, %v1847
        %1849 = vmatprep.mubr.f32.mxu0 %v1672
        %1850 = vmatmul.mubr.f32.gmra.mrb[0].mxu0 %v1671
        %v1851 = vpop.f32.mrb[0].mxu0
        %v1852 = vadd.f32 %v1772, %v1851
        %v1853 = vpop.f32.mrb[0].mxu0
        %v1854 = vadd.f32 %v1776, %v1853
        %1855 = vmatprep.mubr.f32.mxu0 %v1674
        %1856 = vmatmul.mubr.f32.gmra.mrb[0].mxu0 %v1673
        %v1857 = vpop.f32.mrb[0].mxu0
        %v1858 = vadd.f32 %v1772, %v1857
        %v1859 = vpop.f32.mrb[0].mxu0
        %v1860 = vadd.f32 %v1776, %v1859
        %1861 = vmatprep.mubr.f32.mxu0 %v1676
        %1862 = vmatmul.mubr.f32.gmra.mrb[0].mxu0 %v1675
        %v1863 = vpop.f32.mrb[0].mxu0
        %v1864 = vadd.f32 %v1772, %v1863
        %v1865 = vpop.f32.mrb[0].mxu0
        %v1866 = vadd.f32 %v1776, %v1865
        %1867 = vmatprep.mubr.f32.mxu0 %v1678
        %1868 = vmatmul.mubr.f32.gmra.mrb[0].mxu0 %v1677
        %v1869 = vpop.f32.mrb[0].mxu0
        %v1870 = vadd.f32 %v1772, %v1869
        %v1871 = vpop.f32.mrb[0].mxu0
        %v1872 = vadd.f32 %v1776, %v1871
        %1873 = vmatprep.mubr.f32.mxu0 %v1680
        %1874 = vmatmul.mubr.f32.gmra.mrb[0].mxu0 %v1679
        %v1875 = vpop.f32.mrb[0].mxu0
        %v1876 = vadd.f32 %v1772, %v1875
        %v1877 = vpop.f32.mrb[0].mxu0
        %v1878 = vadd.f32 %v1776, %v1877
        %1879 = vmatprep.mubr.f32.mxu0 %v1682
        %1880 = vmatmul.mubr.f32.gmra.mrb[0].mxu0 %v1681
        %v1881 = vpop.f32.mrb[0].mxu0
        %v1882 = vadd.f32 %v1772, %v1881
        %v1883 = vpop.f32.mrb[0].mxu0
        %v1884 = vadd.f32 %v1776, %v1883
        %1885 = vmatprep.mubr.f32.mxu0 %v1684
        %1886 = vmatmul.mubr.f32.gmra.mrb[0].mxu0 %v1683
        %v1887 = vpop.f32.mrb[0].mxu0
        %v1888 = vadd.f32 %v1772, %v1887
        %v1889 = vpop.f32.mrb[0].mxu0
        %v1890 = vadd.f32 %v1776, %v1889
        %1891 = vmatprep.mubr.f32.mxu0 %v1686
        %1892 = vmatmul.mubr.f32.gmra.mrb[0].mxu0 %v1685
        %v1893 = vpop.f32.mrb[0].mxu0
        %v1894 = vadd.f32 %v1772, %v1893
        %v1895 = vpop.f32.mrb[0].mxu0
        %v1896 = vadd.f32 %v1776, %v1895
        %1897 = vmatprep.mubr.f32.mxu0 %v1688
        %1898 = vmatmul.mubr.f32.gmra.mrb[0].mxu0 %v1687
        %v1899 = vpop.f32.mrb[0].mxu0
        %v1900 = vadd.f32 %v1772, %v1899
        %v1901 = vpop.f32.mrb[0].mxu0
        %v1902 = vadd.f32 %v1776, %v1901
        %1903 = vmatprep.mubr.f32.mxu0 %v1690
        %1904 = vmatmul.mubr.f32.gmra.mrb[0].mxu0 %v1689
        %v1905 = vpop.f32.mrb[0].mxu0
        %v1906 = vadd.f32 %v1772, %v1905
        %v1907 = vpop.f32.mrb[0].mxu0
        %v1908 = vadd.f32 %v1776, %v1907
        %1909 = vmatprep.mubr.f32.mxu0 %v1692
        %1910 = vmatmul.mubr.f32.gmra.mrb[0].mxu0 %v1691
        %v1911 = vpop.f32.mrb[0].mxu0
        %v1912 = vadd.f32 %v1772, %v1911
        %v1913 = vpop.f32.mrb[0].mxu0
        %v1914 = vadd.f32 %v1776, %v1913
        %1915 = vmatprep.mubr.f32.mxu0 %v1694
        %1916 = vmatmul.mubr.f32.gmra.mrb[0].mxu0 %v1693
        %v1917 = vpop.f32.mrb[0].mxu0
        %v1918 = vadd.f32 %v1772, %v1917
        %v1919 = vpop.f32.mrb[0].mxu0
        %v1920 = vadd.f32 %v1776, %v1919
        %1921 = vmatprep.mubr.f32.mxu0 %v1696
        %1922 = vmatmul.mubr.f32.gmra.mrb[0].mxu0 %v1695
        %v1923 = vpop.f32.mrb[0].mxu0
        %v1924 = vadd.f32 %v1772, %v1923
        %v1925 = vpop.f32.mrb[0].mxu0
        %v1926 = vadd.f32 %v1776, %v1925
        %1927 = vmatprep.mubr.f32.mxu0 %v1698
        %1928 = vmatmul.mubr.f32.gmra.mrb[0].mxu0 %v1697
        %v1929 = vpop.f32.mrb[0].mxu0
        %v1930 = vadd.f32 %v1772, %v1929
        %v1931 = vpop.f32.mrb[0].mxu0
        %v1932 = vadd.f32 %v1776, %v1931
        %1933 = vmatprep.mubr.f32.mxu0 %v1700
        %1934 = vmatmul.mubr.f32.gmra.mrb[0].mxu0 %v1699
        %v1935 = vpop.f32.mrb[0].mxu0
        %v1936 = vadd.f32 %v1772, %v1935
        %v1937 = vpop.f32.mrb[0].mxu0
        %v1938 = vadd.f32 %v1776, %v1937
        %1939 = vdwg.mxu0
        %vm1940 = vcmp.gt.f32.partialorder %v1846, 0.0
        %vm1941 = vcmp.gt.f32.partialorder %v1848, 0.0
        %vm1942 = vcmp.gt.f32.partialorder %v1852, 0.0
        %vm1943 = vcmp.gt.f32.partialorder %v1854, 0.0
        %vm1944 = vcmp.gt.f32.partialorder %v1858, 0.0
        %vm1945 = vcmp.gt.f32.partialorder %v1860, 0.0
        %vm1946 = vcmp.gt.f32.partialorder %v1864, 0.0
        %vm1947 = vcmp.gt.f32.partialorder %v1866, 0.0
        %vm1948 = vcmp.gt.f32.partialorder %v1870, 0.0
        %vm1949 = vcmp.gt.f32.partialorder %v1872, 0.0
        %vm1950 = vcmp.gt.f32.partialorder %v1876, 0.0
        %vm1951 = vcmp.gt.f32.partialorder %v1878, 0.0
        %vm1952 = vcmp.gt.f32.partialorder %v1882, 0.0
        %vm1953 = vcmp.gt.f32.partialorder %v1884, 0.0
        %vm1954 = vcmp.gt.f32.partialorder %v1888, 0.0
        %vm1955 = vcmp.gt.f32.partialorder %v1890, 0.0
        %vm1956 = vcmp.gt.f32.partialorder %v1894, 0.0
        %vm1957 = vcmp.gt.f32.partialorder %v1896, 0.0
        %vm1958 = vcmp.gt.f32.partialorder %v1900, 0.0
        %vm1959 = vcmp.gt.f32.partialorder %v1902, 0.0
        %vm1960 = vcmp.gt.f32.partialorder %v1906, 0.0
        %vm1961 = vcmp.gt.f32.partialorder %v1908, 0.0
        %vm1962 = vcmp.gt.f32.partialorder %v1912, 0.0
        %vm1963 = vcmp.gt.f32.partialorder %v1914, 0.0
        %vm1964 = vcmp.gt.f32.partialorder %v1918, 0.0
        %vm1965 = vcmp.gt.f32.partialorder %v1920, 0.0
        %vm1966 = vcmp.gt.f32.partialorder %v1924, 0.0
        %vm1967 = vcmp.gt.f32.partialorder %v1926, 0.0
        %vm1968 = vcmp.gt.f32.partialorder %v1930, 0.0
        %vm1969 = vcmp.gt.f32.partialorder %v1932, 0.0
        %vm1970 = vcmp.gt.f32.partialorder %v1936, 0.0
        %vm1971 = vcmp.gt.f32.partialorder %v1938, 0.0
        %v1972 = vmul.f32 %v1846, 0.01
        %v1973 = vmul.f32 %v1848, 0.01
        %v1974 = vmul.f32 %v1852, 0.01
        %v1975 = vmul.f32 %v1854, 0.01
        %v1976 = vmul.f32 %v1858, 0.01
        %v1977 = vmul.f32 %v1860, 0.01
        %v1978 = vmul.f32 %v1864, 0.01
        %v1979 = vmul.f32 %v1866, 0.01
        %v1980 = vmul.f32 %v1870, 0.01
        %v1981 = vmul.f32 %v1872, 0.01
        %v1982 = vmul.f32 %v1876, 0.01
        %v1983 = vmul.f32 %v1878, 0.01
        %v1984 = vmul.f32 %v1882, 0.01
        %v1985 = vmul.f32 %v1884, 0.01
        %v1986 = vmul.f32 %v1888, 0.01
        %v1987 = vmul.f32 %v1890, 0.01
        %v1988 = vmul.f32 %v1894, 0.01
        %v1989 = vmul.f32 %v1896, 0.01
        %v1990 = vmul.f32 %v1900, 0.01
        %v1991 = vmul.f32 %v1902, 0.01
        %v1992 = vmul.f32 %v1906, 0.01
        %v1993 = vmul.f32 %v1908, 0.01
        %v1994 = vmul.f32 %v1912, 0.01
        %v1995 = vmul.f32 %v1914, 0.01
        %v1996 = vmul.f32 %v1918, 0.01
        %v1997 = vmul.f32 %v1920, 0.01
        %v1998 = vmul.f32 %v1924, 0.01
        %v1999 = vmul.f32 %v1926, 0.01
        %v2000 = vmul.f32 %v1930, 0.01
        %v2001 = vmul.f32 %v1932, 0.01
        %v2002 = vmul.f32 %v1936, 0.01
        %v2003 = vmul.f32 %v1938, 0.01
        %v2004 = vsel %vm1940, %v1846, %v1972
        %v2005 = vsel %vm1941, %v1848, %v1973
        %v2006 = vsel %vm1942, %v1852, %v1974
        %v2007 = vsel %vm1943, %v1854, %v1975
        %v2008 = vsel %vm1944, %v1858, %v1976
        %v2009 = vsel %vm1945, %v1860, %v1977
        %v2010 = vsel %vm1946, %v1864, %v1978
        %v2011 = vsel %vm1947, %v1866, %v1979
        %v2012 = vsel %vm1948, %v1870, %v1980
        %v2013 = vsel %vm1949, %v1872, %v1981
        %v2014 = vsel %vm1950, %v1876, %v1982
        %v2015 = vsel %vm1951, %v1878, %v1983
        %v2016 = vsel %vm1952, %v1882, %v1984
        %v2017 = vsel %vm1953, %v1884, %v1985
        %v2018 = vsel %vm1954, %v1888, %v1986
        %v2019 = vsel %vm1955, %v1890, %v1987
        %v2020 = vsel %vm1956, %v1894, %v1988
        %v2021 = vsel %vm1957, %v1896, %v1989
        %v2022 = vsel %vm1958, %v1900, %v1990
        %v2023 = vsel %vm1959, %v1902, %v1991
        %v2024 = vsel %vm1960, %v1906, %v1992
        %v2025 = vsel %vm1961, %v1908, %v1993
        %v2026 = vsel %vm1962, %v1912, %v1994
        %v2027 = vsel %vm1963, %v1914, %v1995
        %v2028 = vsel %vm1964, %v1918, %v1996
        %v2029 = vsel %vm1965, %v1920, %v1997
        %v2030 = vsel %vm1966, %v1924, %v1998
        %v2031 = vsel %vm1967, %v1926, %v1999
        %v2032 = vsel %vm1968, %v1930, %v2000
        %v2033 = vsel %vm1969, %v1932, %v2001
        %v2034 = vsel %vm1970, %v1936, %v2002
        %v2035 = vsel %vm1971, %v1938, %v2003
        %s2036 = scalar_lea.vmem %s4, 256
        %v2037 = vld [vmem:[%s2036] sm:$0xff]
        %v2038 = vld [vmem:[%s2036 + $0x8] sm:$0xff]
        %v2039 = vld [vmem:[%s2036 + $0x10] sm:$0xff]
        %v2040 = vld [vmem:[%s2036 + $0x18] sm:$0xff]
        %v2041 = vld [vmem:[%s2036 + $0x20] sm:$0xff]
        %v2042 = vld [vmem:[%s2036 + $0x28] sm:$0xff]
        %v2043 = vld [vmem:[%s2036 + $0x30] sm:$0xff]
        %v2044 = vld [vmem:[%s2036 + $0x38] sm:$0xff]
        %v2045 = vld [vmem:[%s2036 + $0x40] sm:$0xff]
        %v2046 = vld [vmem:[%s2036 + $0x48] sm:$0xff]
        %v2047 = vld [vmem:[%s2036 + $0x50] sm:$0xff]
        %v2048 = vld [vmem:[%s2036 + $0x58] sm:$0xff]
        %v2049 = vld [vmem:[%s2036 + $0x60] sm:$0xff]
        %v2050 = vld [vmem:[%s2036 + $0x68] sm:$0xff]
        %v2051 = vld [vmem:[%s2036 + $0x70] sm:$0xff]
        %v2052 = vld [vmem:[%s2036 + $0x78] sm:$0xff]
        %v2053 = vld [vmem:[%s2036 + $0x80] sm:$0xff]
        %v2054 = vld [vmem:[%s2036 + $0x88] sm:$0xff]
        %v2055 = vld [vmem:[%s2036 + $0x90] sm:$0xff]
        %v2056 = vld [vmem:[%s2036 + $0x98] sm:$0xff]
        %v2057 = vld [vmem:[%s2036 + $0xa0] sm:$0xff]
        %v2058 = vld [vmem:[%s2036 + $0xa8] sm:$0xff]
        %v2059 = vld [vmem:[%s2036 + $0xb0] sm:$0xff]
        %v2060 = vld [vmem:[%s2036 + $0xb8] sm:$0xff]
        %v2061 = vld [vmem:[%s2036 + $0xc0] sm:$0xff]
        %v2062 = vld [vmem:[%s2036 + $0xc8] sm:$0xff]
        %v2063 = vld [vmem:[%s2036 + $0xd0] sm:$0xff]
        %v2064 = vld [vmem:[%s2036 + $0xd8] sm:$0xff]
        %v2065 = vld [vmem:[%s2036 + $0xe0] sm:$0xff]
        %v2066 = vld [vmem:[%s2036 + $0xe8] sm:$0xff]
        %v2067 = vld [vmem:[%s2036 + $0xf0] sm:$0xff]
        %v2068 = vld [vmem:[%s2036 + $0xf8] sm:$0xff]
        %s2069 = scalar_lea.vmem %s5, 1
        %v2070 = vld [vmem:[%s2069] sm:$0x1]
        %v2072 = vlaneseq
        %v2073 = vshrl.u32 %v2072, 7
        %v2074 = vsub.s32 0, %v2073
        %v2075 = vrot.slane %v2070, %v2074
        %2077 = vmatprep.subr.mxu0 0.0
        %2078 = vmatpush1.msra.mxu0 %v2037
        %2079 = vmatprep.subr.mxu0 0.0
        %2080 = vmatpush1.msra.mxu0 %v2038
        %2081 = vmatprep.subr.mxu0 0.0
        %2082 = vmatpush1.msra.mxu0 %v2039
        %2083 = vmatprep.subr.mxu0 0.0
        %2084 = vmatpush1.msra.mxu0 %v2040
        %2085 = vmatprep.subr.mxu0 0.0
        %2086 = vmatpush1.msra.mxu0 %v2041
        %2087 = vmatprep.subr.mxu0 0.0
        %2088 = vmatpush1.msra.mxu0 %v2042
        %2089 = vmatprep.subr.mxu0 0.0
        %2090 = vmatpush1.msra.mxu0 %v2043
        %2091 = vmatprep.subr.mxu0 0.0
        %2092 = vmatpush1.msra.mxu0 %v2044
        %2093 = vmatprep.subr.mxu0 0.0
        %2094 = vmatpush1.msra.mxu0 %v2045
        %2095 = vmatprep.subr.mxu0 0.0
        %2096 = vmatpush1.msra.mxu0 %v2046
        %2097 = vmatprep.subr.mxu0 0.0
        %2098 = vmatpush1.msra.mxu0 %v2047
        %2099 = vmatprep.subr.mxu0 0.0
        %2100 = vmatpush1.msra.mxu0 %v2048
        %2101 = vmatprep.subr.mxu0 0.0
        %2102 = vmatpush1.msra.mxu0 %v2049
        %2103 = vmatprep.subr.mxu0 0.0
        %2104 = vmatpush1.msra.mxu0 %v2050
        %2105 = vmatprep.subr.mxu0 0.0
        %2106 = vmatpush1.msra.mxu0 %v2051
        %2107 = vmatprep.subr.mxu0 0.0
        %2108 = vmatpush1.msra.mxu0 %v2052
        %2109 = vmatprep.subr.mxu0 0.0
        %2110 = vmatpush1.msra.mxu0 %v2053
        %2111 = vmatprep.subr.mxu0 0.0
        %2112 = vmatpush1.msra.mxu0 %v2054
        %2113 = vmatprep.subr.mxu0 0.0
        %2114 = vmatpush1.msra.mxu0 %v2055
        %2115 = vmatprep.subr.mxu0 0.0
        %2116 = vmatpush1.msra.mxu0 %v2056
        %2117 = vmatprep.subr.mxu0 0.0
        %2118 = vmatpush1.msra.mxu0 %v2057
        %2119 = vmatprep.subr.mxu0 0.0
        %2120 = vmatpush1.msra.mxu0 %v2058
        %2121 = vmatprep.subr.mxu0 0.0
        %2122 = vmatpush1.msra.mxu0 %v2059
        %2123 = vmatprep.subr.mxu0 0.0
        %2124 = vmatpush1.msra.mxu0 %v2060
        %2125 = vmatprep.subr.mxu0 0.0
        %2126 = vmatpush1.msra.mxu0 %v2061
        %2127 = vmatprep.subr.mxu0 0.0
        %2128 = vmatpush1.msra.mxu0 %v2062
        %2129 = vmatprep.subr.mxu0 0.0
        %2130 = vmatpush1.msra.mxu0 %v2063
        %2131 = vmatprep.subr.mxu0 0.0
        %2132 = vmatpush1.msra.mxu0 %v2064
        %2133 = vmatprep.subr.mxu0 0.0
        %2134 = vmatpush1.msra.mxu0 %v2065
        %2135 = vmatprep.subr.mxu0 0.0
        %2136 = vmatpush1.msra.mxu0 %v2066
        %2137 = vmatprep.subr.mxu0 0.0
        %2138 = vmatpush1.msra.mxu0 %v2067
        %2139 = vmatprep.subr.mxu0 0.0
        %2140 = vmatpush1.msra.mxu0 %v2068
        %2141 = vmatprep.mubr.f32.mxu0 %v2005
        %2142 = vmatmul.mubr.f32.gmra.mrb[0].mxu0 %v2004
        %v2143 = vpop.f32.mrb[0].mxu0
        %v2144 = vadd.f32 %v2075, %v2143
        %v2145 = vpop.f32.mrb[0].mxu0
        %2146 = vmatprep.mubr.f32.mxu0 %v2007
        %2147 = vmatmul.mubr.f32.gmra.mrb[0].mxu0 %v2006
        %v2148 = vpop.f32.mrb[0].mxu0
        %v2149 = vadd.f32 %v2075, %v2148
        %v2150 = vpop.f32.mrb[0].mxu0
        %2151 = vmatprep.mubr.f32.mxu0 %v2009
        %2152 = vmatmul.mubr.f32.gmra.mrb[0].mxu0 %v2008
        %v2153 = vpop.f32.mrb[0].mxu0
        %v2154 = vadd.f32 %v2075, %v2153
        %v2155 = vpop.f32.mrb[0].mxu0
        %2156 = vmatprep.mubr.f32.mxu0 %v2011
        %2157 = vmatmul.mubr.f32.gmra.mrb[0].mxu0 %v2010
        %v2158 = vpop.f32.mrb[0].mxu0
        %v2159 = vadd.f32 %v2075, %v2158
        %v2160 = vpop.f32.mrb[0].mxu0
        %2161 = vmatprep.mubr.f32.mxu0 %v2013
        %2162 = vmatmul.mubr.f32.gmra.mrb[0].mxu0 %v2012
        %v2163 = vpop.f32.mrb[0].mxu0
        %v2164 = vadd.f32 %v2075, %v2163
        %v2165 = vpop.f32.mrb[0].mxu0
        %2166 = vmatprep.mubr.f32.mxu0 %v2015
        %2167 = vmatmul.mubr.f32.gmra.mrb[0].mxu0 %v2014
        %v2168 = vpop.f32.mrb[0].mxu0
        %v2169 = vadd.f32 %v2075, %v2168
        %v2170 = vpop.f32.mrb[0].mxu0
        %2171 = vmatprep.mubr.f32.mxu0 %v2017
        %2172 = vmatmul.mubr.f32.gmra.mrb[0].mxu0 %v2016
        %v2173 = vpop.f32.mrb[0].mxu0
        %v2174 = vadd.f32 %v2075, %v2173
        %v2175 = vpop.f32.mrb[0].mxu0
        %2176 = vmatprep.mubr.f32.mxu0 %v2019
        %2177 = vmatmul.mubr.f32.gmra.mrb[0].mxu0 %v2018
        %v2178 = vpop.f32.mrb[0].mxu0
        %v2179 = vadd.f32 %v2075, %v2178
        %v2180 = vpop.f32.mrb[0].mxu0
        %2181 = vmatprep.mubr.f32.mxu0 %v2021
        %2182 = vmatmul.mubr.f32.gmra.mrb[0].mxu0 %v2020
        %v2183 = vpop.f32.mrb[0].mxu0
        %v2184 = vadd.f32 %v2075, %v2183
        %v2185 = vpop.f32.mrb[0].mxu0
        %2186 = vmatprep.mubr.f32.mxu0 %v2023
        %2187 = vmatmul.mubr.f32.gmra.mrb[0].mxu0 %v2022
        %v2188 = vpop.f32.mrb[0].mxu0
        %v2189 = vadd.f32 %v2075, %v2188
        %v2190 = vpop.f32.mrb[0].mxu0
        %2191 = vmatprep.mubr.f32.mxu0 %v2025
        %2192 = vmatmul.mubr.f32.gmra.mrb[0].mxu0 %v2024
        %v2193 = vpop.f32.mrb[0].mxu0
        %v2194 = vadd.f32 %v2075, %v2193
        %v2195 = vpop.f32.mrb[0].mxu0
        %2196 = vmatprep.mubr.f32.mxu0 %v2027
        %2197 = vmatmul.mubr.f32.gmra.mrb[0].mxu0 %v2026
        %v2198 = vpop.f32.mrb[0].mxu0
        %v2199 = vadd.f32 %v2075, %v2198
        %v2200 = vpop.f32.mrb[0].mxu0
        %2201 = vmatprep.mubr.f32.mxu0 %v2029
        %2202 = vmatmul.mubr.f32.gmra.mrb[0].mxu0 %v2028
        %v2203 = vpop.f32.mrb[0].mxu0
        %v2204 = vadd.f32 %v2075, %v2203
        %v2205 = vpop.f32.mrb[0].mxu0
        %2206 = vmatprep.mubr.f32.mxu0 %v2031
        %2207 = vmatmul.mubr.f32.gmra.mrb[0].mxu0 %v2030
        %v2208 = vpop.f32.mrb[0].mxu0
        %v2209 = vadd.f32 %v2075, %v2208
        %v2210 = vpop.f32.mrb[0].mxu0
        %2211 = vmatprep.mubr.f32.mxu0 %v2033
        %2212 = vmatmul.mubr.f32.gmra.mrb[0].mxu0 %v2032
        %v2213 = vpop.f32.mrb[0].mxu0
        %v2214 = vadd.f32 %v2075, %v2213
        %v2215 = vpop.f32.mrb[0].mxu0
        %2216 = vmatprep.mubr.f32.mxu0 %v2035
        %2217 = vmatmul.mubr.f32.gmra.mrb[0].mxu0 %v2034
        %v2218 = vpop.f32.mrb[0].mxu0
        %v2219 = vadd.f32 %v2075, %v2218
        %v2220 = vpop.f32.mrb[0].mxu0
        %2221 = vdwg.mxu0
        %v2222 = vtanh.pop %v2144
        %v2223 = vtanh.pop %v2149
        %v2224 = vtanh.pop %v2154
        %v2225 = vtanh.pop %v2159
        %v2226 = vtanh.pop %v2164
        %v2227 = vtanh.pop %v2169
        %v2228 = vtanh.pop %v2174
        %v2229 = vtanh.pop %v2179
        %v2230 = vtanh.pop %v2184
        %v2231 = vtanh.pop %v2189
        %v2232 = vtanh.pop %v2194
        %v2233 = vtanh.pop %v2199
        %v2234 = vtanh.pop %v2204
        %v2235 = vtanh.pop %v2209
        %v2236 = vtanh.pop %v2214
        %v2237 = vtanh.pop %v2219
        %2254 = vrot.lane.b32.xlu0 %v2144, 127
        %v2255 = vpop.permute.xlu0 %2254
        %2256 = vrot.lane.b32.xlu0 %v2149, 127
        %v2257 = vpop.permute.xlu0 %2256
        %2258 = vrot.lane.b32.xlu0 %v2154, 127
        %v2259 = vpop.permute.xlu0 %2258
        %2260 = vrot.lane.b32.xlu0 %v2159, 127
        %v2261 = vpop.permute.xlu0 %2260
        %2262 = vrot.lane.b32.xlu0 %v2164, 127
        %v2263 = vpop.permute.xlu0 %2262
        %2264 = vrot.lane.b32.xlu0 %v2169, 127
        %v2265 = vpop.permute.xlu0 %2264
        %2266 = vrot.lane.b32.xlu0 %v2174, 127
        %v2267 = vpop.permute.xlu0 %2266
        %2268 = vrot.lane.b32.xlu0 %v2179, 127
        %v2269 = vpop.permute.xlu0 %2268
        %2270 = vrot.lane.b32.xlu0 %v2184, 127
        %v2271 = vpop.permute.xlu0 %2270
        %2272 = vrot.lane.b32.xlu0 %v2189, 127
        %v2273 = vpop.permute.xlu0 %2272
        %2274 = vrot.lane.b32.xlu0 %v2194, 127
        %v2275 = vpop.permute.xlu0 %2274
        %2276 = vrot.lane.b32.xlu0 %v2199, 127
        %v2277 = vpop.permute.xlu0 %2276
        %2278 = vrot.lane.b32.xlu0 %v2204, 127
        %v2279 = vpop.permute.xlu0 %2278
        %2280 = vrot.lane.b32.xlu0 %v2209, 127
        %v2281 = vpop.permute.xlu0 %2280
        %2282 = vrot.lane.b32.xlu0 %v2214, 127
        %v2283 = vpop.permute.xlu0 %2282
        %2284 = vrot.lane.b32.xlu0 %v2219, 127
        %v2285 = vpop.permute.xlu0 %2284
        %v2302 = vsub.f32 %v270, %v2255
        %v2303 = vsub.f32 %v271, %v2257
        %v2304 = vsub.f32 %v272, %v2259
        %v2305 = vsub.f32 %v273, %v2261
        %v2306 = vsub.f32 %v274, %v2263
        %v2307 = vsub.f32 %v275, %v2265
        %v2308 = vsub.f32 %v276, %v2267
        %v2309 = vsub.f32 %v277, %v2269
        %v2310 = vsub.f32 %v278, %v2271
        %v2311 = vsub.f32 %v279, %v2273
        %v2312 = vsub.f32 %v280, %v2275
        %v2313 = vsub.f32 %v281, %v2277
        %v2314 = vsub.f32 %v282, %v2279
        %v2315 = vsub.f32 %v283, %v2281
        %v2316 = vsub.f32 %v284, %v2283
        %v2317 = vsub.f32 %v285, %v2285
        %v2318 = vsub.f32 0.0, %v2222
        %v2319 = vsub.f32 0.0, %v2223
        %v2320 = vsub.f32 0.0, %v2224
        %v2321 = vsub.f32 0.0, %v2225
        %v2322 = vsub.f32 0.0, %v2226
        %v2323 = vsub.f32 0.0, %v2227
        %v2324 = vsub.f32 0.0, %v2228
        %v2325 = vsub.f32 0.0, %v2229
        %v2326 = vsub.f32 0.0, %v2230
        %v2327 = vsub.f32 0.0, %v2231
        %v2328 = vsub.f32 0.0, %v2232
        %v2329 = vsub.f32 0.0, %v2233
        %v2330 = vsub.f32 0.0, %v2234
        %v2331 = vsub.f32 0.0, %v2235
        %v2332 = vsub.f32 0.0, %v2236
        %v2333 = vsub.f32 0.0, %v2237
        %v2334 = vmul.f32 %v2318, 1.442695
        %v2335 = vpow.pop %v2334
        %v2336 = vmul.f32 %v2319, 1.442695
        %v2337 = vpow.pop %v2336
        %v2338 = vmul.f32 %v2320, 1.442695
        %v2339 = vpow.pop %v2338
        %v2340 = vmul.f32 %v2321, 1.442695
        %v2341 = vpow.pop %v2340
        %v2342 = vmul.f32 %v2322, 1.442695
        %v2343 = vpow.pop %v2342
        %v2344 = vmul.f32 %v2323, 1.442695
        %v2345 = vpow.pop %v2344
        %v2346 = vmul.f32 %v2324, 1.442695
        %v2347 = vpow.pop %v2346
        %v2348 = vmul.f32 %v2325, 1.442695
        %v2349 = vpow.pop %v2348
        %v2350 = vmul.f32 %v2326, 1.442695
        %v2351 = vpow.pop %v2350
        %v2352 = vmul.f32 %v2327, 1.442695
        %v2353 = vpow.pop %v2352
        %v2354 = vmul.f32 %v2328, 1.442695
        %v2355 = vpow.pop %v2354
        %v2356 = vmul.f32 %v2329, 1.442695
        %v2357 = vpow.pop %v2356
        %v2358 = vmul.f32 %v2330, 1.442695
        %v2359 = vpow.pop %v2358
        %v2360 = vmul.f32 %v2331, 1.442695
        %v2361 = vpow.pop %v2360
        %v2362 = vmul.f32 %v2332, 1.442695
        %v2363 = vpow.pop %v2362
        %v2364 = vmul.f32 %v2333, 1.442695
        %v2365 = vpow.pop %v2364
        %v2366 = vmul.f32 %v2302, %v2335
        %v2367 = vmul.f32 %v2303, %v2337
        %v2368 = vmul.f32 %v2304, %v2339
        %v2369 = vmul.f32 %v2305, %v2341
        %v2370 = vmul.f32 %v2306, %v2343
        %v2371 = vmul.f32 %v2307, %v2345
        %v2372 = vmul.f32 %v2308, %v2347
        %v2373 = vmul.f32 %v2309, %v2349
        %v2374 = vmul.f32 %v2310, %v2351
        %v2375 = vmul.f32 %v2311, %v2353
        %v2376 = vmul.f32 %v2312, %v2355
        %v2377 = vmul.f32 %v2313, %v2357
        %v2378 = vmul.f32 %v2314, %v2359
        %v2379 = vmul.f32 %v2315, %v2361
        %v2380 = vmul.f32 %v2316, %v2363
        %v2381 = vmul.f32 %v2317, %v2365
        %v2382 = vsub.f32 %v1173, %v2222
        %v2383 = vsub.f32 %v1174, %v2223
        %v2384 = vsub.f32 %v1175, %v2224
        %v2385 = vsub.f32 %v1176, %v2225
        %v2386 = vsub.f32 %v1177, %v2226
        %v2387 = vsub.f32 %v1178, %v2227
        %v2388 = vsub.f32 %v1179, %v2228
        %v2389 = vsub.f32 %v1180, %v2229
        %v2390 = vsub.f32 %v1181, %v2230
        %v2391 = vsub.f32 %v1182, %v2231
        %v2392 = vsub.f32 %v1183, %v2232
        %v2393 = vsub.f32 %v1184, %v2233
        %v2394 = vsub.f32 %v1185, %v2234
        %v2395 = vsub.f32 %v1186, %v2235
        %v2396 = vsub.f32 %v1187, %v2236
        %v2397 = vsub.f32 %v1188, %v2237
        %v2398 = vsel %vm286, %v2366, 1.0
        %v2399 = vsel %vm286, %v2367, 1.0
        %v2400 = vsel %vm286, %v2368, 1.0
        %v2401 = vsel %vm286, %v2369, 1.0
        %v2402 = vsel %vm286, %v2370, 1.0
        %v2403 = vsel %vm286, %v2371, 1.0
        %v2404 = vsel %vm286, %v2372, 1.0
        %v2405 = vsel %vm286, %v2373, 1.0
        %v2406 = vsel %vm286, %v2374, 1.0
        %v2407 = vsel %vm286, %v2375, 1.0
        %v2408 = vsel %vm286, %v2376, 1.0
        %v2409 = vsel %vm286, %v2377, 1.0
        %v2410 = vsel %vm286, %v2378, 1.0
        %v2411 = vsel %vm286, %v2379, 1.0
        %v2412 = vsel %vm286, %v2380, 1.0
        %v2413 = vsel %vm286, %v2381, 1.0
        %s2414 = scalar_lea.vmem %s1, 8
        %v2415 = vld [vmem:[%s2414] sm:$0xf]
        %v2418 = vunpack.c.l.s4 1983009808
        %v2419 = vunpack.c.0.s8 %v2418
        %v2420 = vlaneseq
        %v2421 = vshrl.u32 %v2420, 7
        %v2422 = vsub.s32 %v2419, %v2421
        %v2423 = vrot.slane %v2415, %v2422
        %v2424 = vcombine.high %v2423, %v2423
        %v2426 = vsel %vm313, %v2398, 0
        %v2429 = vsel %vm313, %v2399, 0
        %v2432 = vsel %vm313, %v2400, 0
        %v2435 = vsel %vm313, %v2401, 0
        %v2438 = vsel %vm313, %v2402, 0
        %v2441 = vsel %vm313, %v2403, 0
        %v2444 = vsel %vm313, %v2404, 0
        %v2447 = vsel %vm313, %v2405, 0
        %v2450 = vsel %vm313, %v2406, 0
        %v2453 = vsel %vm313, %v2407, 0
        %v2456 = vsel %vm313, %v2408, 0
        %v2459 = vsel %vm313, %v2409, 0
        %v2462 = vsel %vm313, %v2410, 0
        %v2465 = vsel %vm313, %v2411, 0
        %v2468 = vsel %vm313, %v2412, 0
        %v2471 = vsel %vm313, %v2413, 0
        %v2473 = vsel %vm362, %v2423, 0
        %v2475 = vsel %vm362, %v2424, 0
        %2477 = vmatprep.subr.mxu0 %v2475
        %2478 = vmatpush1.msra.mxu0 %v2473
        %2479 = vmatprep.subr.mxu0 0.0
        %2480 = vmatpush1.msra.mxu0 0.0
        %2481 = vmatprep.subr.mxu0 0.0
        %2482 = vmatpush1.msra.mxu0 0.0
        %2483 = vmatprep.subr.mxu0 0.0
        %2484 = vmatpush1.msra.mxu0 0.0
        %2485 = vmatprep.subr.mxu0 0.0
        %2486 = vmatpush1.msra.mxu0 0.0
        %2487 = vmatprep.subr.mxu0 0.0
        %2488 = vmatpush1.msra.mxu0 0.0
        %2489 = vmatprep.subr.mxu0 0.0
        %2490 = vmatpush1.msra.mxu0 0.0
        %2491 = vmatprep.subr.mxu0 0.0
        %2492 = vmatpush1.msra.mxu0 0.0
        %2493 = vmatprep.subr.mxu0 0.0
        %2494 = vmatpush1.msra.mxu0 0.0
        %2495 = vmatprep.subr.mxu0 0.0
        %2496 = vmatpush1.msra.mxu0 0.0
        %2497 = vmatprep.subr.mxu0 0.0
        %2498 = vmatpush1.msra.mxu0 0.0
        %2499 = vmatprep.subr.mxu0 0.0
        %2500 = vmatpush1.msra.mxu0 0.0
        %2501 = vmatprep.subr.mxu0 0.0
        %2502 = vmatpush1.msra.mxu0 0.0
        %2503 = vmatprep.subr.mxu0 0.0
        %2504 = vmatpush1.msra.mxu0 0.0
        %2505 = vmatprep.subr.mxu0 0.0
        %2506 = vmatpush1.msra.mxu0 0.0
        %2507 = vmatprep.subr.mxu0 0.0
        %2508 = vmatpush1.msra.mxu0 0.0
        %2509 = vmatprep.subr.mxu0 0.0
        %2510 = vmatpush1.msra.mxu0 0.0
        %2511 = vmatprep.subr.mxu0 0.0
        %2512 = vmatpush1.msra.mxu0 0.0
        %2513 = vmatprep.subr.mxu0 0.0
        %2514 = vmatpush1.msra.mxu0 0.0
        %2515 = vmatprep.subr.mxu0 0.0
        %2516 = vmatpush1.msra.mxu0 0.0
        %2517 = vmatprep.subr.mxu0 0.0
        %2518 = vmatpush1.msra.mxu0 0.0
        %2519 = vmatprep.subr.mxu0 0.0
        %2520 = vmatpush1.msra.mxu0 0.0
        %2521 = vmatprep.subr.mxu0 0.0
        %2522 = vmatpush1.msra.mxu0 0.0
        %2523 = vmatprep.subr.mxu0 0.0
        %2524 = vmatpush1.msra.mxu0 0.0
        %2525 = vmatprep.subr.mxu0 0.0
        %2526 = vmatpush1.msra.mxu0 0.0
        %2527 = vmatprep.subr.mxu0 0.0
        %2528 = vmatpush1.msra.mxu0 0.0
        %2529 = vmatprep.subr.mxu0 0.0
        %2530 = vmatpush1.msra.mxu0 0.0
        %2531 = vmatprep.subr.mxu0 0.0
        %2532 = vmatpush1.msra.mxu0 0.0
        %2533 = vmatprep.subr.mxu0 0.0
        %2534 = vmatpush1.msra.mxu0 0.0
        %2535 = vmatprep.subr.mxu0 0.0
        %2536 = vmatpush1.msra.mxu0 0.0
        %2537 = vmatprep.subr.mxu0 0.0
        %2538 = vmatpush1.msra.mxu0 0.0
        %2539 = vmatprep.subr.mxu0 0.0
        %2540 = vmatpush1.msra.mxu0 0.0
        %2541 = vmatprep.mubr.f32.mxu0 0.0
        %2542 = vmatmul.mubr.f32.gmra.mrb[0].mxu0 %v2426
        %v2543 = vpop.f32.mrb[0].mxu0
        %v2544 = vadd.f32 0.0, %v2543
        %v2545 = vpop.f32.mrb[0].mxu0
        %v2546 = vadd.f32 0.0, %v2545
        %2547 = vmatprep.mubr.f32.mxu0 0.0
        %2548 = vmatmul.mubr.f32.gmra.mrb[0].mxu0 %v2429
        %v2549 = vpop.f32.mrb[0].mxu0
        %v2550 = vadd.f32 0.0, %v2549
        %v2551 = vpop.f32.mrb[0].mxu0
        %v2552 = vadd.f32 0.0, %v2551
        %2553 = vmatprep.mubr.f32.mxu0 0.0
        %2554 = vmatmul.mubr.f32.gmra.mrb[0].mxu0 %v2432
        %v2555 = vpop.f32.mrb[0].mxu0
        %v2556 = vadd.f32 0.0, %v2555
        %v2557 = vpop.f32.mrb[0].mxu0
        %v2558 = vadd.f32 0.0, %v2557
        %2559 = vmatprep.mubr.f32.mxu0 0.0
        %2560 = vmatmul.mubr.f32.gmra.mrb[0].mxu0 %v2435
        %v2561 = vpop.f32.mrb[0].mxu0
        %v2562 = vadd.f32 0.0, %v2561
        %v2563 = vpop.f32.mrb[0].mxu0
        %v2564 = vadd.f32 0.0, %v2563
        %2565 = vmatprep.mubr.f32.mxu0 0.0
        %2566 = vmatmul.mubr.f32.gmra.mrb[0].mxu0 %v2438
        %v2567 = vpop.f32.mrb[0].mxu0
        %v2568 = vadd.f32 0.0, %v2567
        %v2569 = vpop.f32.mrb[0].mxu0
        %v2570 = vadd.f32 0.0, %v2569
        %2571 = vmatprep.mubr.f32.mxu0 0.0
        %2572 = vmatmul.mubr.f32.gmra.mrb[0].mxu0 %v2441
        %v2573 = vpop.f32.mrb[0].mxu0
        %v2574 = vadd.f32 0.0, %v2573
        %v2575 = vpop.f32.mrb[0].mxu0
        %v2576 = vadd.f32 0.0, %v2575
        %2577 = vmatprep.mubr.f32.mxu0 0.0
        %2578 = vmatmul.mubr.f32.gmra.mrb[0].mxu0 %v2444
        %v2579 = vpop.f32.mrb[0].mxu0
        %v2580 = vadd.f32 0.0, %v2579
        %v2581 = vpop.f32.mrb[0].mxu0
        %v2582 = vadd.f32 0.0, %v2581
        %2583 = vmatprep.mubr.f32.mxu0 0.0
        %2584 = vmatmul.mubr.f32.gmra.mrb[0].mxu0 %v2447
        %v2585 = vpop.f32.mrb[0].mxu0
        %v2586 = vadd.f32 0.0, %v2585
        %v2587 = vpop.f32.mrb[0].mxu0
        %v2588 = vadd.f32 0.0, %v2587
        %2589 = vmatprep.mubr.f32.mxu0 0.0
        %2590 = vmatmul.mubr.f32.gmra.mrb[0].mxu0 %v2450
        %v2591 = vpop.f32.mrb[0].mxu0
        %v2592 = vadd.f32 0.0, %v2591
        %v2593 = vpop.f32.mrb[0].mxu0
        %v2594 = vadd.f32 0.0, %v2593
        %2595 = vmatprep.mubr.f32.mxu0 0.0
        %2596 = vmatmul.mubr.f32.gmra.mrb[0].mxu0 %v2453
        %v2597 = vpop.f32.mrb[0].mxu0
        %v2598 = vadd.f32 0.0, %v2597
        %v2599 = vpop.f32.mrb[0].mxu0
        %v2600 = vadd.f32 0.0, %v2599
        %2601 = vmatprep.mubr.f32.mxu0 0.0
        %2602 = vmatmul.mubr.f32.gmra.mrb[0].mxu0 %v2456
        %v2603 = vpop.f32.mrb[0].mxu0
        %v2604 = vadd.f32 0.0, %v2603
        %v2605 = vpop.f32.mrb[0].mxu0
        %v2606 = vadd.f32 0.0, %v2605
        %2607 = vmatprep.mubr.f32.mxu0 0.0
        %2608 = vmatmul.mubr.f32.gmra.mrb[0].mxu0 %v2459
        %v2609 = vpop.f32.mrb[0].mxu0
        %v2610 = vadd.f32 0.0, %v2609
        %v2611 = vpop.f32.mrb[0].mxu0
        %v2612 = vadd.f32 0.0, %v2611
        %2613 = vmatprep.mubr.f32.mxu0 0.0
        %2614 = vmatmul.mubr.f32.gmra.mrb[0].mxu0 %v2462
        %v2615 = vpop.f32.mrb[0].mxu0
        %v2616 = vadd.f32 0.0, %v2615
        %v2617 = vpop.f32.mrb[0].mxu0
        %v2618 = vadd.f32 0.0, %v2617
        %2619 = vmatprep.mubr.f32.mxu0 0.0
        %2620 = vmatmul.mubr.f32.gmra.mrb[0].mxu0 %v2465
        %v2621 = vpop.f32.mrb[0].mxu0
        %v2622 = vadd.f32 0.0, %v2621
        %v2623 = vpop.f32.mrb[0].mxu0
        %v2624 = vadd.f32 0.0, %v2623
        %2625 = vmatprep.mubr.f32.mxu0 0.0
        %2626 = vmatmul.mubr.f32.gmra.mrb[0].mxu0 %v2468
        %v2627 = vpop.f32.mrb[0].mxu0
        %v2628 = vadd.f32 0.0, %v2627
        %v2629 = vpop.f32.mrb[0].mxu0
        %v2630 = vadd.f32 0.0, %v2629
        %2631 = vmatprep.mubr.f32.mxu0 0.0
        %2632 = vmatmul.mubr.f32.gmra.mrb[0].mxu0 %v2471
        %v2633 = vpop.f32.mrb[0].mxu0
        %v2634 = vadd.f32 0.0, %v2633
        %v2635 = vpop.f32.mrb[0].mxu0
        %v2636 = vadd.f32 0.0, %v2635
        %2637 = vdwg.mxu0
        %vm2638 = vcmp.gt.f32.partialorder %v2544, 0.0
        %vm2639 = vcmp.gt.f32.partialorder %v2546, 0.0
        %vm2640 = vcmp.gt.f32.partialorder %v2550, 0.0
        %vm2641 = vcmp.gt.f32.partialorder %v2552, 0.0
        %vm2642 = vcmp.gt.f32.partialorder %v2556, 0.0
        %vm2643 = vcmp.gt.f32.partialorder %v2558, 0.0
        %vm2644 = vcmp.gt.f32.partialorder %v2562, 0.0
        %vm2645 = vcmp.gt.f32.partialorder %v2564, 0.0
        %vm2646 = vcmp.gt.f32.partialorder %v2568, 0.0
        %vm2647 = vcmp.gt.f32.partialorder %v2570, 0.0
        %vm2648 = vcmp.gt.f32.partialorder %v2574, 0.0
        %vm2649 = vcmp.gt.f32.partialorder %v2576, 0.0
        %vm2650 = vcmp.gt.f32.partialorder %v2580, 0.0
        %vm2651 = vcmp.gt.f32.partialorder %v2582, 0.0
        %vm2652 = vcmp.gt.f32.partialorder %v2586, 0.0
        %vm2653 = vcmp.gt.f32.partialorder %v2588, 0.0
        %vm2654 = vcmp.gt.f32.partialorder %v2592, 0.0
        %vm2655 = vcmp.gt.f32.partialorder %v2594, 0.0
        %vm2656 = vcmp.gt.f32.partialorder %v2598, 0.0
        %vm2657 = vcmp.gt.f32.partialorder %v2600, 0.0
        %vm2658 = vcmp.gt.f32.partialorder %v2604, 0.0
        %vm2659 = vcmp.gt.f32.partialorder %v2606, 0.0
        %vm2660 = vcmp.gt.f32.partialorder %v2610, 0.0
        %vm2661 = vcmp.gt.f32.partialorder %v2612, 0.0
        %vm2662 = vcmp.gt.f32.partialorder %v2616, 0.0
        %vm2663 = vcmp.gt.f32.partialorder %v2618, 0.0
        %vm2664 = vcmp.gt.f32.partialorder %v2622, 0.0
        %vm2665 = vcmp.gt.f32.partialorder %v2624, 0.0
        %vm2666 = vcmp.gt.f32.partialorder %v2628, 0.0
        %vm2667 = vcmp.gt.f32.partialorder %v2630, 0.0
        %vm2668 = vcmp.gt.f32.partialorder %v2634, 0.0
        %vm2669 = vcmp.gt.f32.partialorder %v2636, 0.0
        %v2670 = vmul.f32 %v2544, 0.01
        %v2671 = vmul.f32 %v2546, 0.01
        %v2672 = vmul.f32 %v2550, 0.01
        %v2673 = vmul.f32 %v2552, 0.01
        %v2674 = vmul.f32 %v2556, 0.01
        %v2675 = vmul.f32 %v2558, 0.01
        %v2676 = vmul.f32 %v2562, 0.01
        %v2677 = vmul.f32 %v2564, 0.01
        %v2678 = vmul.f32 %v2568, 0.01
        %v2679 = vmul.f32 %v2570, 0.01
        %v2680 = vmul.f32 %v2574, 0.01
        %v2681 = vmul.f32 %v2576, 0.01
        %v2682 = vmul.f32 %v2580, 0.01
        %v2683 = vmul.f32 %v2582, 0.01
        %v2684 = vmul.f32 %v2586, 0.01
        %v2685 = vmul.f32 %v2588, 0.01
        %v2686 = vmul.f32 %v2592, 0.01
        %v2687 = vmul.f32 %v2594, 0.01
        %v2688 = vmul.f32 %v2598, 0.01
        %v2689 = vmul.f32 %v2600, 0.01
        %v2690 = vmul.f32 %v2604, 0.01
        %v2691 = vmul.f32 %v2606, 0.01
        %v2692 = vmul.f32 %v2610, 0.01
        %v2693 = vmul.f32 %v2612, 0.01
        %v2694 = vmul.f32 %v2616, 0.01
        %v2695 = vmul.f32 %v2618, 0.01
        %v2696 = vmul.f32 %v2622, 0.01
        %v2697 = vmul.f32 %v2624, 0.01
        %v2698 = vmul.f32 %v2628, 0.01
        %v2699 = vmul.f32 %v2630, 0.01
        %v2700 = vmul.f32 %v2634, 0.01
        %v2701 = vmul.f32 %v2636, 0.01
        %v2702 = vsel %vm2638, %v2544, %v2670
        %v2703 = vsel %vm2639, %v2546, %v2671
        %v2704 = vsel %vm2640, %v2550, %v2672
        %v2705 = vsel %vm2641, %v2552, %v2673
        %v2706 = vsel %vm2642, %v2556, %v2674
        %v2707 = vsel %vm2643, %v2558, %v2675
        %v2708 = vsel %vm2644, %v2562, %v2676
        %v2709 = vsel %vm2645, %v2564, %v2677
        %v2710 = vsel %vm2646, %v2568, %v2678
        %v2711 = vsel %vm2647, %v2570, %v2679
        %v2712 = vsel %vm2648, %v2574, %v2680
        %v2713 = vsel %vm2649, %v2576, %v2681
        %v2714 = vsel %vm2650, %v2580, %v2682
        %v2715 = vsel %vm2651, %v2582, %v2683
        %v2716 = vsel %vm2652, %v2586, %v2684
        %v2717 = vsel %vm2653, %v2588, %v2685
        %v2718 = vsel %vm2654, %v2592, %v2686
        %v2719 = vsel %vm2655, %v2594, %v2687
        %v2720 = vsel %vm2656, %v2598, %v2688
        %v2721 = vsel %vm2657, %v2600, %v2689
        %v2722 = vsel %vm2658, %v2604, %v2690
        %v2723 = vsel %vm2659, %v2606, %v2691
        %v2724 = vsel %vm2660, %v2610, %v2692
        %v2725 = vsel %vm2661, %v2612, %v2693
        %v2726 = vsel %vm2662, %v2616, %v2694
        %v2727 = vsel %vm2663, %v2618, %v2695
        %v2728 = vsel %vm2664, %v2622, %v2696
        %v2729 = vsel %vm2665, %v2624, %v2697
        %v2730 = vsel %vm2666, %v2628, %v2698
        %v2731 = vsel %vm2667, %v2630, %v2699
        %v2732 = vsel %vm2668, %v2634, %v2700
        %v2733 = vsel %vm2669, %v2636, %v2701
        %s2734 = scalar_lea.vmem [#allocation2], 1024
        %v2735 = vld [vmem:[%s2734] sm:$0xff]
        %v2736 = vld [vmem:[%s2734 + $0x8] sm:$0xff]
        %v2737 = vld [vmem:[%s2734 + $0x10] sm:$0xff]
        %v2738 = vld [vmem:[%s2734 + $0x18] sm:$0xff]
        %v2739 = vld [vmem:[%s2734 + $0x20] sm:$0xff]
        %v2740 = vld [vmem:[%s2734 + $0x28] sm:$0xff]
        %v2741 = vld [vmem:[%s2734 + $0x30] sm:$0xff]
        %v2742 = vld [vmem:[%s2734 + $0x38] sm:$0xff]
        %v2743 = vld [vmem:[%s2734 + $0x40] sm:$0xff]
        %v2744 = vld [vmem:[%s2734 + $0x48] sm:$0xff]
        %v2745 = vld [vmem:[%s2734 + $0x50] sm:$0xff]
        %v2746 = vld [vmem:[%s2734 + $0x58] sm:$0xff]
        %v2747 = vld [vmem:[%s2734 + $0x60] sm:$0xff]
        %v2748 = vld [vmem:[%s2734 + $0x68] sm:$0xff]
        %v2749 = vld [vmem:[%s2734 + $0x70] sm:$0xff]
        %v2750 = vld [vmem:[%s2734 + $0x78] sm:$0xff]
        %v2751 = vld [vmem:[%s2734 + $0x80] sm:$0xff]
        %v2752 = vld [vmem:[%s2734 + $0x88] sm:$0xff]
        %v2753 = vld [vmem:[%s2734 + $0x90] sm:$0xff]
        %v2754 = vld [vmem:[%s2734 + $0x98] sm:$0xff]
        %v2755 = vld [vmem:[%s2734 + $0xa0] sm:$0xff]
        %v2756 = vld [vmem:[%s2734 + $0xa8] sm:$0xff]
        %v2757 = vld [vmem:[%s2734 + $0xb0] sm:$0xff]
        %v2758 = vld [vmem:[%s2734 + $0xb8] sm:$0xff]
        %v2759 = vld [vmem:[%s2734 + $0xc0] sm:$0xff]
        %v2760 = vld [vmem:[%s2734 + $0xc8] sm:$0xff]
        %v2761 = vld [vmem:[%s2734 + $0xd0] sm:$0xff]
        %v2762 = vld [vmem:[%s2734 + $0xd8] sm:$0xff]
        %v2763 = vld [vmem:[%s2734 + $0xe0] sm:$0xff]
        %v2764 = vld [vmem:[%s2734 + $0xe8] sm:$0xff]
        %v2765 = vld [vmem:[%s2734 + $0xf0] sm:$0xff]
        %v2766 = vld [vmem:[%s2734 + $0xf8] sm:$0xff]
        %v2767 = vld [vmem:[%s2734 + $0x100] sm:$0xff]
        %v2768 = vld [vmem:[%s2734 + $0x108] sm:$0xff]
        %v2769 = vld [vmem:[%s2734 + $0x110] sm:$0xff]
        %v2770 = vld [vmem:[%s2734 + $0x118] sm:$0xff]
        %v2771 = vld [vmem:[%s2734 + $0x120] sm:$0xff]
        %v2772 = vld [vmem:[%s2734 + $0x128] sm:$0xff]
        %v2773 = vld [vmem:[%s2734 + $0x130] sm:$0xff]
        %v2774 = vld [vmem:[%s2734 + $0x138] sm:$0xff]
        %v2775 = vld [vmem:[%s2734 + $0x140] sm:$0xff]
        %v2776 = vld [vmem:[%s2734 + $0x148] sm:$0xff]
        %v2777 = vld [vmem:[%s2734 + $0x150] sm:$0xff]
        %v2778 = vld [vmem:[%s2734 + $0x158] sm:$0xff]
        %v2779 = vld [vmem:[%s2734 + $0x160] sm:$0xff]
        %v2780 = vld [vmem:[%s2734 + $0x168] sm:$0xff]
        %v2781 = vld [vmem:[%s2734 + $0x170] sm:$0xff]
        %v2782 = vld [vmem:[%s2734 + $0x178] sm:$0xff]
        %v2783 = vld [vmem:[%s2734 + $0x180] sm:$0xff]
        %v2784 = vld [vmem:[%s2734 + $0x188] sm:$0xff]
        %v2785 = vld [vmem:[%s2734 + $0x190] sm:$0xff]
        %v2786 = vld [vmem:[%s2734 + $0x198] sm:$0xff]
        %v2787 = vld [vmem:[%s2734 + $0x1a0] sm:$0xff]
        %v2788 = vld [vmem:[%s2734 + $0x1a8] sm:$0xff]
        %v2789 = vld [vmem:[%s2734 + $0x1b0] sm:$0xff]
        %v2790 = vld [vmem:[%s2734 + $0x1b8] sm:$0xff]
        %v2791 = vld [vmem:[%s2734 + $0x1c0] sm:$0xff]
        %v2792 = vld [vmem:[%s2734 + $0x1c8] sm:$0xff]
        %v2793 = vld [vmem:[%s2734 + $0x1d0] sm:$0xff]
        %v2794 = vld [vmem:[%s2734 + $0x1d8] sm:$0xff]
        %v2795 = vld [vmem:[%s2734 + $0x1e0] sm:$0xff]
        %v2796 = vld [vmem:[%s2734 + $0x1e8] sm:$0xff]
        %v2797 = vld [vmem:[%s2734 + $0x1f0] sm:$0xff]
        %v2798 = vld [vmem:[%s2734 + $0x1f8] sm:$0xff]
        %s2799 = scalar_lea.vmem %s3, 4
        %v2800 = vld [vmem:[%s2799] sm:$0x3]
        %v2802 = vlaneseq
        %v2803 = vshrl.u32 %v2802, 7
        %v2804 = vsub.s32 0, %v2803
        %v2805 = vrot.slane %v2800, %v2804
        %v2806 = vlaneseq
        %v2807 = vshrl.u32 %v2806, 7
        %v2808 = vsub.s32 1, %v2807
        %v2809 = vrot.slane %v2800, %v2808
        %2812 = vmatprep.subr.mxu0 %v2736
        %2813 = vmatpush1.msra.mxu0 %v2735
        %2814 = vmatprep.subr.mxu0 %v2738
        %2815 = vmatpush1.msra.mxu0 %v2737
        %2816 = vmatprep.subr.mxu0 %v2740
        %2817 = vmatpush1.msra.mxu0 %v2739
        %2818 = vmatprep.subr.mxu0 %v2742
        %2819 = vmatpush1.msra.mxu0 %v2741
        %2820 = vmatprep.subr.mxu0 %v2744
        %2821 = vmatpush1.msra.mxu0 %v2743
        %2822 = vmatprep.subr.mxu0 %v2746
        %2823 = vmatpush1.msra.mxu0 %v2745
        %2824 = vmatprep.subr.mxu0 %v2748
        %2825 = vmatpush1.msra.mxu0 %v2747
        %2826 = vmatprep.subr.mxu0 %v2750
        %2827 = vmatpush1.msra.mxu0 %v2749
        %2828 = vmatprep.subr.mxu0 %v2752
        %2829 = vmatpush1.msra.mxu0 %v2751
        %2830 = vmatprep.subr.mxu0 %v2754
        %2831 = vmatpush1.msra.mxu0 %v2753
        %2832 = vmatprep.subr.mxu0 %v2756
        %2833 = vmatpush1.msra.mxu0 %v2755
        %2834 = vmatprep.subr.mxu0 %v2758
        %2835 = vmatpush1.msra.mxu0 %v2757
        %2836 = vmatprep.subr.mxu0 %v2760
        %2837 = vmatpush1.msra.mxu0 %v2759
        %2838 = vmatprep.subr.mxu0 %v2762
        %2839 = vmatpush1.msra.mxu0 %v2761
        %2840 = vmatprep.subr.mxu0 %v2764
        %2841 = vmatpush1.msra.mxu0 %v2763
        %2842 = vmatprep.subr.mxu0 %v2766
        %2843 = vmatpush1.msra.mxu0 %v2765
        %2844 = vmatprep.subr.mxu0 %v2768
        %2845 = vmatpush1.msra.mxu0 %v2767
        %2846 = vmatprep.subr.mxu0 %v2770
        %2847 = vmatpush1.msra.mxu0 %v2769
        %2848 = vmatprep.subr.mxu0 %v2772
        %2849 = vmatpush1.msra.mxu0 %v2771
        %2850 = vmatprep.subr.mxu0 %v2774
        %2851 = vmatpush1.msra.mxu0 %v2773
        %2852 = vmatprep.subr.mxu0 %v2776
        %2853 = vmatpush1.msra.mxu0 %v2775
        %2854 = vmatprep.subr.mxu0 %v2778
        %2855 = vmatpush1.msra.mxu0 %v2777
        %2856 = vmatprep.subr.mxu0 %v2780
        %2857 = vmatpush1.msra.mxu0 %v2779
        %2858 = vmatprep.subr.mxu0 %v2782
        %2859 = vmatpush1.msra.mxu0 %v2781
        %2860 = vmatprep.subr.mxu0 %v2784
        %2861 = vmatpush1.msra.mxu0 %v2783
        %2862 = vmatprep.subr.mxu0 %v2786
        %2863 = vmatpush1.msra.mxu0 %v2785
        %2864 = vmatprep.subr.mxu0 %v2788
        %2865 = vmatpush1.msra.mxu0 %v2787
        %2866 = vmatprep.subr.mxu0 %v2790
        %2867 = vmatpush1.msra.mxu0 %v2789
        %2868 = vmatprep.subr.mxu0 %v2792
        %2869 = vmatpush1.msra.mxu0 %v2791
        %2870 = vmatprep.subr.mxu0 %v2794
        %2871 = vmatpush1.msra.mxu0 %v2793
        %2872 = vmatprep.subr.mxu0 %v2796
        %2873 = vmatpush1.msra.mxu0 %v2795
        %2874 = vmatprep.subr.mxu0 %v2798
        %2875 = vmatpush1.msra.mxu0 %v2797
        %2876 = vmatprep.mubr.f32.mxu0 %v2703
        %2877 = vmatmul.mubr.f32.gmra.mrb[0].mxu0 %v2702
        %v2878 = vpop.f32.mrb[0].mxu0
        %v2879 = vadd.f32 %v2805, %v2878
        %v2880 = vpop.f32.mrb[0].mxu0
        %v2881 = vadd.f32 %v2809, %v2880
        %2882 = vmatprep.mubr.f32.mxu0 %v2705
        %2883 = vmatmul.mubr.f32.gmra.mrb[0].mxu0 %v2704
        %v2884 = vpop.f32.mrb[0].mxu0
        %v2885 = vadd.f32 %v2805, %v2884
        %v2886 = vpop.f32.mrb[0].mxu0
        %v2887 = vadd.f32 %v2809, %v2886
        %2888 = vmatprep.mubr.f32.mxu0 %v2707
        %2889 = vmatmul.mubr.f32.gmra.mrb[0].mxu0 %v2706
        %v2890 = vpop.f32.mrb[0].mxu0
        %v2891 = vadd.f32 %v2805, %v2890
        %v2892 = vpop.f32.mrb[0].mxu0
        %v2893 = vadd.f32 %v2809, %v2892
        %2894 = vmatprep.mubr.f32.mxu0 %v2709
        %2895 = vmatmul.mubr.f32.gmra.mrb[0].mxu0 %v2708
        %v2896 = vpop.f32.mrb[0].mxu0
        %v2897 = vadd.f32 %v2805, %v2896
        %v2898 = vpop.f32.mrb[0].mxu0
        %v2899 = vadd.f32 %v2809, %v2898
        %2900 = vmatprep.mubr.f32.mxu0 %v2711
        %2901 = vmatmul.mubr.f32.gmra.mrb[0].mxu0 %v2710
        %v2902 = vpop.f32.mrb[0].mxu0
        %v2903 = vadd.f32 %v2805, %v2902
        %v2904 = vpop.f32.mrb[0].mxu0
        %v2905 = vadd.f32 %v2809, %v2904
        %2906 = vmatprep.mubr.f32.mxu0 %v2713
        %2907 = vmatmul.mubr.f32.gmra.mrb[0].mxu0 %v2712
        %v2908 = vpop.f32.mrb[0].mxu0
        %v2909 = vadd.f32 %v2805, %v2908
        %v2910 = vpop.f32.mrb[0].mxu0
        %v2911 = vadd.f32 %v2809, %v2910
        %2912 = vmatprep.mubr.f32.mxu0 %v2715
        %2913 = vmatmul.mubr.f32.gmra.mrb[0].mxu0 %v2714
        %v2914 = vpop.f32.mrb[0].mxu0
        %v2915 = vadd.f32 %v2805, %v2914
        %v2916 = vpop.f32.mrb[0].mxu0
        %v2917 = vadd.f32 %v2809, %v2916
        %2918 = vmatprep.mubr.f32.mxu0 %v2717
        %2919 = vmatmul.mubr.f32.gmra.mrb[0].mxu0 %v2716
        %v2920 = vpop.f32.mrb[0].mxu0
        %v2921 = vadd.f32 %v2805, %v2920
        %v2922 = vpop.f32.mrb[0].mxu0
        %v2923 = vadd.f32 %v2809, %v2922
        %2924 = vmatprep.mubr.f32.mxu0 %v2719
        %2925 = vmatmul.mubr.f32.gmra.mrb[0].mxu0 %v2718
        %v2926 = vpop.f32.mrb[0].mxu0
        %v2927 = vadd.f32 %v2805, %v2926
        %v2928 = vpop.f32.mrb[0].mxu0
        %v2929 = vadd.f32 %v2809, %v2928
        %2930 = vmatprep.mubr.f32.mxu0 %v2721
        %2931 = vmatmul.mubr.f32.gmra.mrb[0].mxu0 %v2720
        %v2932 = vpop.f32.mrb[0].mxu0
        %v2933 = vadd.f32 %v2805, %v2932
        %v2934 = vpop.f32.mrb[0].mxu0
        %v2935 = vadd.f32 %v2809, %v2934
        %2936 = vmatprep.mubr.f32.mxu0 %v2723
        %2937 = vmatmul.mubr.f32.gmra.mrb[0].mxu0 %v2722
        %v2938 = vpop.f32.mrb[0].mxu0
        %v2939 = vadd.f32 %v2805, %v2938
        %v2940 = vpop.f32.mrb[0].mxu0
        %v2941 = vadd.f32 %v2809, %v2940
        %2942 = vmatprep.mubr.f32.mxu0 %v2725
        %2943 = vmatmul.mubr.f32.gmra.mrb[0].mxu0 %v2724
        %v2944 = vpop.f32.mrb[0].mxu0
        %v2945 = vadd.f32 %v2805, %v2944
        %v2946 = vpop.f32.mrb[0].mxu0
        %v2947 = vadd.f32 %v2809, %v2946
        %2948 = vmatprep.mubr.f32.mxu0 %v2727
        %2949 = vmatmul.mubr.f32.gmra.mrb[0].mxu0 %v2726
        %v2950 = vpop.f32.mrb[0].mxu0
        %v2951 = vadd.f32 %v2805, %v2950
        %v2952 = vpop.f32.mrb[0].mxu0
        %v2953 = vadd.f32 %v2809, %v2952
        %2954 = vmatprep.mubr.f32.mxu0 %v2729
        %2955 = vmatmul.mubr.f32.gmra.mrb[0].mxu0 %v2728
        %v2956 = vpop.f32.mrb[0].mxu0
        %v2957 = vadd.f32 %v2805, %v2956
        %v2958 = vpop.f32.mrb[0].mxu0
        %v2959 = vadd.f32 %v2809, %v2958
        %2960 = vmatprep.mubr.f32.mxu0 %v2731
        %2961 = vmatmul.mubr.f32.gmra.mrb[0].mxu0 %v2730
        %v2962 = vpop.f32.mrb[0].mxu0
        %v2963 = vadd.f32 %v2805, %v2962
        %v2964 = vpop.f32.mrb[0].mxu0
        %v2965 = vadd.f32 %v2809, %v2964
        %2966 = vmatprep.mubr.f32.mxu0 %v2733
        %2967 = vmatmul.mubr.f32.gmra.mrb[0].mxu0 %v2732
        %v2968 = vpop.f32.mrb[0].mxu0
        %v2969 = vadd.f32 %v2805, %v2968
        %v2970 = vpop.f32.mrb[0].mxu0
        %v2971 = vadd.f32 %v2809, %v2970
        %2972 = vdwg.mxu0
        %vm2973 = vcmp.gt.f32.partialorder %v2879, 0.0
        %vm2974 = vcmp.gt.f32.partialorder %v2881, 0.0
        %vm2975 = vcmp.gt.f32.partialorder %v2885, 0.0
        %vm2976 = vcmp.gt.f32.partialorder %v2887, 0.0
        %vm2977 = vcmp.gt.f32.partialorder %v2891, 0.0
        %vm2978 = vcmp.gt.f32.partialorder %v2893, 0.0
        %vm2979 = vcmp.gt.f32.partialorder %v2897, 0.0
        %vm2980 = vcmp.gt.f32.partialorder %v2899, 0.0
        %vm2981 = vcmp.gt.f32.partialorder %v2903, 0.0
        %vm2982 = vcmp.gt.f32.partialorder %v2905, 0.0
        %vm2983 = vcmp.gt.f32.partialorder %v2909, 0.0
        %vm2984 = vcmp.gt.f32.partialorder %v2911, 0.0
        %vm2985 = vcmp.gt.f32.partialorder %v2915, 0.0
        %vm2986 = vcmp.gt.f32.partialorder %v2917, 0.0
        %vm2987 = vcmp.gt.f32.partialorder %v2921, 0.0
        %vm2988 = vcmp.gt.f32.partialorder %v2923, 0.0
        %vm2989 = vcmp.gt.f32.partialorder %v2927, 0.0
        %vm2990 = vcmp.gt.f32.partialorder %v2929, 0.0
        %vm2991 = vcmp.gt.f32.partialorder %v2933, 0.0
        %vm2992 = vcmp.gt.f32.partialorder %v2935, 0.0
        %vm2993 = vcmp.gt.f32.partialorder %v2939, 0.0
        %vm2994 = vcmp.gt.f32.partialorder %v2941, 0.0
        %vm2995 = vcmp.gt.f32.partialorder %v2945, 0.0
        %vm2996 = vcmp.gt.f32.partialorder %v2947, 0.0
        %vm2997 = vcmp.gt.f32.partialorder %v2951, 0.0
        %vm2998 = vcmp.gt.f32.partialorder %v2953, 0.0
        %vm2999 = vcmp.gt.f32.partialorder %v2957, 0.0
        %vm3000 = vcmp.gt.f32.partialorder %v2959, 0.0
        %vm3001 = vcmp.gt.f32.partialorder %v2963, 0.0
        %vm3002 = vcmp.gt.f32.partialorder %v2965, 0.0
        %vm3003 = vcmp.gt.f32.partialorder %v2969, 0.0
        %vm3004 = vcmp.gt.f32.partialorder %v2971, 0.0
        %v3005 = vmul.f32 %v2879, 0.01
        %v3006 = vmul.f32 %v2881, 0.01
        %v3007 = vmul.f32 %v2885, 0.01
        %v3008 = vmul.f32 %v2887, 0.01
        %v3009 = vmul.f32 %v2891, 0.01
        %v3010 = vmul.f32 %v2893, 0.01
        %v3011 = vmul.f32 %v2897, 0.01
        %v3012 = vmul.f32 %v2899, 0.01
        %v3013 = vmul.f32 %v2903, 0.01
        %v3014 = vmul.f32 %v2905, 0.01
        %v3015 = vmul.f32 %v2909, 0.01
        %v3016 = vmul.f32 %v2911, 0.01
        %v3017 = vmul.f32 %v2915, 0.01
        %v3018 = vmul.f32 %v2917, 0.01
        %v3019 = vmul.f32 %v2921, 0.01
        %v3020 = vmul.f32 %v2923, 0.01
        %v3021 = vmul.f32 %v2927, 0.01
        %v3022 = vmul.f32 %v2929, 0.01
        %v3023 = vmul.f32 %v2933, 0.01
        %v3024 = vmul.f32 %v2935, 0.01
        %v3025 = vmul.f32 %v2939, 0.01
        %v3026 = vmul.f32 %v2941, 0.01
        %v3027 = vmul.f32 %v2945, 0.01
        %v3028 = vmul.f32 %v2947, 0.01
        %v3029 = vmul.f32 %v2951, 0.01
        %v3030 = vmul.f32 %v2953, 0.01
        %v3031 = vmul.f32 %v2957, 0.01
        %v3032 = vmul.f32 %v2959, 0.01
        %v3033 = vmul.f32 %v2963, 0.01
        %v3034 = vmul.f32 %v2965, 0.01
        %v3035 = vmul.f32 %v2969, 0.01
        %v3036 = vmul.f32 %v2971, 0.01
        %v3037 = vsel %vm2973, %v2879, %v3005
        %v3038 = vsel %vm2974, %v2881, %v3006
        %v3039 = vsel %vm2975, %v2885, %v3007
        %v3040 = vsel %vm2976, %v2887, %v3008
        %v3041 = vsel %vm2977, %v2891, %v3009
        %v3042 = vsel %vm2978, %v2893, %v3010
        %v3043 = vsel %vm2979, %v2897, %v3011
        %v3044 = vsel %vm2980, %v2899, %v3012
        %v3045 = vsel %vm2981, %v2903, %v3013
        %v3046 = vsel %vm2982, %v2905, %v3014
        %v3047 = vsel %vm2983, %v2909, %v3015
        %v3048 = vsel %vm2984, %v2911, %v3016
        %v3049 = vsel %vm2985, %v2915, %v3017
        %v3050 = vsel %vm2986, %v2917, %v3018
        %v3051 = vsel %vm2987, %v2921, %v3019
        %v3052 = vsel %vm2988, %v2923, %v3020
        %v3053 = vsel %vm2989, %v2927, %v3021
        %v3054 = vsel %vm2990, %v2929, %v3022
        %v3055 = vsel %vm2991, %v2933, %v3023
        %v3056 = vsel %vm2992, %v2935, %v3024
        %v3057 = vsel %vm2993, %v2939, %v3025
        %v3058 = vsel %vm2994, %v2941, %v3026
        %v3059 = vsel %vm2995, %v2945, %v3027
        %v3060 = vsel %vm2996, %v2947, %v3028
        %v3061 = vsel %vm2997, %v2951, %v3029
        %v3062 = vsel %vm2998, %v2953, %v3030
        %v3063 = vsel %vm2999, %v2957, %v3031
        %v3064 = vsel %vm3000, %v2959, %v3032
        %v3065 = vsel %vm3001, %v2963, %v3033
        %v3066 = vsel %vm3002, %v2965, %v3034
        %v3067 = vsel %vm3003, %v2969, %v3035
        %v3068 = vsel %vm3004, %v2971, %v3036
        %s3069 = scalar_lea.vmem %s4, 512
        %v3070 = vld [vmem:[%s3069] sm:$0xff]
        %v3071 = vld [vmem:[%s3069 + $0x8] sm:$0xff]
        %v3072 = vld [vmem:[%s3069 + $0x10] sm:$0xff]
        %v3073 = vld [vmem:[%s3069 + $0x18] sm:$0xff]
        %v3074 = vld [vmem:[%s3069 + $0x20] sm:$0xff]
        %v3075 = vld [vmem:[%s3069 + $0x28] sm:$0xff]
        %v3076 = vld [vmem:[%s3069 + $0x30] sm:$0xff]
        %v3077 = vld [vmem:[%s3069 + $0x38] sm:$0xff]
        %v3078 = vld [vmem:[%s3069 + $0x40] sm:$0xff]
        %v3079 = vld [vmem:[%s3069 + $0x48] sm:$0xff]
        %v3080 = vld [vmem:[%s3069 + $0x50] sm:$0xff]
        %v3081 = vld [vmem:[%s3069 + $0x58] sm:$0xff]
        %v3082 = vld [vmem:[%s3069 + $0x60] sm:$0xff]
        %v3083 = vld [vmem:[%s3069 + $0x68] sm:$0xff]
        %v3084 = vld [vmem:[%s3069 + $0x70] sm:$0xff]
        %v3085 = vld [vmem:[%s3069 + $0x78] sm:$0xff]
        %v3086 = vld [vmem:[%s3069 + $0x80] sm:$0xff]
        %v3087 = vld [vmem:[%s3069 + $0x88] sm:$0xff]
        %v3088 = vld [vmem:[%s3069 + $0x90] sm:$0xff]
        %v3089 = vld [vmem:[%s3069 + $0x98] sm:$0xff]
        %v3090 = vld [vmem:[%s3069 + $0xa0] sm:$0xff]
        %v3091 = vld [vmem:[%s3069 + $0xa8] sm:$0xff]
        %v3092 = vld [vmem:[%s3069 + $0xb0] sm:$0xff]
        %v3093 = vld [vmem:[%s3069 + $0xb8] sm:$0xff]
        %v3094 = vld [vmem:[%s3069 + $0xc0] sm:$0xff]
        %v3095 = vld [vmem:[%s3069 + $0xc8] sm:$0xff]
        %v3096 = vld [vmem:[%s3069 + $0xd0] sm:$0xff]
        %v3097 = vld [vmem:[%s3069 + $0xd8] sm:$0xff]
        %v3098 = vld [vmem:[%s3069 + $0xe0] sm:$0xff]
        %v3099 = vld [vmem:[%s3069 + $0xe8] sm:$0xff]
        %v3100 = vld [vmem:[%s3069 + $0xf0] sm:$0xff]
        %v3101 = vld [vmem:[%s3069 + $0xf8] sm:$0xff]
        %s3102 = scalar_lea.vmem %s5, 2
        %v3103 = vld [vmem:[%s3102] sm:$0x1]
        %v3105 = vlaneseq
        %v3106 = vshrl.u32 %v3105, 7
        %v3107 = vsub.s32 0, %v3106
        %v3108 = vrot.slane %v3103, %v3107
        %3110 = vmatprep.subr.mxu0 0.0
        %3111 = vmatpush1.msra.mxu0 %v3070
        %3112 = vmatprep.subr.mxu0 0.0
        %3113 = vmatpush1.msra.mxu0 %v3071
        %3114 = vmatprep.subr.mxu0 0.0
        %3115 = vmatpush1.msra.mxu0 %v3072
        %3116 = vmatprep.subr.mxu0 0.0
        %3117 = vmatpush1.msra.mxu0 %v3073
        %3118 = vmatprep.subr.mxu0 0.0
        %3119 = vmatpush1.msra.mxu0 %v3074
        %3120 = vmatprep.subr.mxu0 0.0
        %3121 = vmatpush1.msra.mxu0 %v3075
        %3122 = vmatprep.subr.mxu0 0.0
        %3123 = vmatpush1.msra.mxu0 %v3076
        %3124 = vmatprep.subr.mxu0 0.0
        %3125 = vmatpush1.msra.mxu0 %v3077
        %3126 = vmatprep.subr.mxu0 0.0
        %3127 = vmatpush1.msra.mxu0 %v3078
        %3128 = vmatprep.subr.mxu0 0.0
        %3129 = vmatpush1.msra.mxu0 %v3079
        %3130 = vmatprep.subr.mxu0 0.0
        %3131 = vmatpush1.msra.mxu0 %v3080
        %3132 = vmatprep.subr.mxu0 0.0
        %3133 = vmatpush1.msra.mxu0 %v3081
        %3134 = vmatprep.subr.mxu0 0.0
        %3135 = vmatpush1.msra.mxu0 %v3082
        %3136 = vmatprep.subr.mxu0 0.0
        %3137 = vmatpush1.msra.mxu0 %v3083
        %3138 = vmatprep.subr.mxu0 0.0
        %3139 = vmatpush1.msra.mxu0 %v3084
        %3140 = vmatprep.subr.mxu0 0.0
        %3141 = vmatpush1.msra.mxu0 %v3085
        %3142 = vmatprep.subr.mxu0 0.0
        %3143 = vmatpush1.msra.mxu0 %v3086
        %3144 = vmatprep.subr.mxu0 0.0
        %3145 = vmatpush1.msra.mxu0 %v3087
        %3146 = vmatprep.subr.mxu0 0.0
        %3147 = vmatpush1.msra.mxu0 %v3088
        %3148 = vmatprep.subr.mxu0 0.0
        %3149 = vmatpush1.msra.mxu0 %v3089
        %3150 = vmatprep.subr.mxu0 0.0
        %3151 = vmatpush1.msra.mxu0 %v3090
        %3152 = vmatprep.subr.mxu0 0.0
        %3153 = vmatpush1.msra.mxu0 %v3091
        %3154 = vmatprep.subr.mxu0 0.0
        %3155 = vmatpush1.msra.mxu0 %v3092
        %3156 = vmatprep.subr.mxu0 0.0
        %3157 = vmatpush1.msra.mxu0 %v3093
        %3158 = vmatprep.subr.mxu0 0.0
        %3159 = vmatpush1.msra.mxu0 %v3094
        %3160 = vmatprep.subr.mxu0 0.0
        %3161 = vmatpush1.msra.mxu0 %v3095
        %3162 = vmatprep.subr.mxu0 0.0
        %3163 = vmatpush1.msra.mxu0 %v3096
        %3164 = vmatprep.subr.mxu0 0.0
        %3165 = vmatpush1.msra.mxu0 %v3097
        %3166 = vmatprep.subr.mxu0 0.0
        %3167 = vmatpush1.msra.mxu0 %v3098
        %3168 = vmatprep.subr.mxu0 0.0
        %3169 = vmatpush1.msra.mxu0 %v3099
        %3170 = vmatprep.subr.mxu0 0.0
        %3171 = vmatpush1.msra.mxu0 %v3100
        %3172 = vmatprep.subr.mxu0 0.0
        %3173 = vmatpush1.msra.mxu0 %v3101
        %3174 = vmatprep.mubr.f32.mxu0 %v3038
        %3175 = vmatmul.mubr.f32.gmra.mrb[0].mxu0 %v3037
        %v3176 = vpop.f32.mrb[0].mxu0
        %v3177 = vadd.f32 %v3108, %v3176
        %v3178 = vpop.f32.mrb[0].mxu0
        %3179 = vmatprep.mubr.f32.mxu0 %v3040
        %3180 = vmatmul.mubr.f32.gmra.mrb[0].mxu0 %v3039
        %v3181 = vpop.f32.mrb[0].mxu0
        %v3182 = vadd.f32 %v3108, %v3181
        %v3183 = vpop.f32.mrb[0].mxu0
        %3184 = vmatprep.mubr.f32.mxu0 %v3042
        %3185 = vmatmul.mubr.f32.gmra.mrb[0].mxu0 %v3041
        %v3186 = vpop.f32.mrb[0].mxu0
        %v3187 = vadd.f32 %v3108, %v3186
        %v3188 = vpop.f32.mrb[0].mxu0
        %3189 = vmatprep.mubr.f32.mxu0 %v3044
        %3190 = vmatmul.mubr.f32.gmra.mrb[0].mxu0 %v3043
        %v3191 = vpop.f32.mrb[0].mxu0
        %v3192 = vadd.f32 %v3108, %v3191
        %v3193 = vpop.f32.mrb[0].mxu0
        %3194 = vmatprep.mubr.f32.mxu0 %v3046
        %3195 = vmatmul.mubr.f32.gmra.mrb[0].mxu0 %v3045
        %v3196 = vpop.f32.mrb[0].mxu0
        %v3197 = vadd.f32 %v3108, %v3196
        %v3198 = vpop.f32.mrb[0].mxu0
        %3199 = vmatprep.mubr.f32.mxu0 %v3048
        %3200 = vmatmul.mubr.f32.gmra.mrb[0].mxu0 %v3047
        %v3201 = vpop.f32.mrb[0].mxu0
        %v3202 = vadd.f32 %v3108, %v3201
        %v3203 = vpop.f32.mrb[0].mxu0
        %3204 = vmatprep.mubr.f32.mxu0 %v3050
        %3205 = vmatmul.mubr.f32.gmra.mrb[0].mxu0 %v3049
        %v3206 = vpop.f32.mrb[0].mxu0
        %v3207 = vadd.f32 %v3108, %v3206
        %v3208 = vpop.f32.mrb[0].mxu0
        %3209 = vmatprep.mubr.f32.mxu0 %v3052
        %3210 = vmatmul.mubr.f32.gmra.mrb[0].mxu0 %v3051
        %v3211 = vpop.f32.mrb[0].mxu0
        %v3212 = vadd.f32 %v3108, %v3211
        %v3213 = vpop.f32.mrb[0].mxu0
        %3214 = vmatprep.mubr.f32.mxu0 %v3054
        %3215 = vmatmul.mubr.f32.gmra.mrb[0].mxu0 %v3053
        %v3216 = vpop.f32.mrb[0].mxu0
        %v3217 = vadd.f32 %v3108, %v3216
        %v3218 = vpop.f32.mrb[0].mxu0
        %3219 = vmatprep.mubr.f32.mxu0 %v3056
        %3220 = vmatmul.mubr.f32.gmra.mrb[0].mxu0 %v3055
        %v3221 = vpop.f32.mrb[0].mxu0
        %v3222 = vadd.f32 %v3108, %v3221
        %v3223 = vpop.f32.mrb[0].mxu0
        %3224 = vmatprep.mubr.f32.mxu0 %v3058
        %3225 = vmatmul.mubr.f32.gmra.mrb[0].mxu0 %v3057
        %v3226 = vpop.f32.mrb[0].mxu0
        %v3227 = vadd.f32 %v3108, %v3226
        %v3228 = vpop.f32.mrb[0].mxu0
        %3229 = vmatprep.mubr.f32.mxu0 %v3060
        %3230 = vmatmul.mubr.f32.gmra.mrb[0].mxu0 %v3059
        %v3231 = vpop.f32.mrb[0].mxu0
        %v3232 = vadd.f32 %v3108, %v3231
        %v3233 = vpop.f32.mrb[0].mxu0
        %3234 = vmatprep.mubr.f32.mxu0 %v3062
        %3235 = vmatmul.mubr.f32.gmra.mrb[0].mxu0 %v3061
        %v3236 = vpop.f32.mrb[0].mxu0
        %v3237 = vadd.f32 %v3108, %v3236
        %v3238 = vpop.f32.mrb[0].mxu0
        %3239 = vmatprep.mubr.f32.mxu0 %v3064
        %3240 = vmatmul.mubr.f32.gmra.mrb[0].mxu0 %v3063
        %v3241 = vpop.f32.mrb[0].mxu0
        %v3242 = vadd.f32 %v3108, %v3241
        %v3243 = vpop.f32.mrb[0].mxu0
        %3244 = vmatprep.mubr.f32.mxu0 %v3066
        %3245 = vmatmul.mubr.f32.gmra.mrb[0].mxu0 %v3065
        %v3246 = vpop.f32.mrb[0].mxu0
        %v3247 = vadd.f32 %v3108, %v3246
        %v3248 = vpop.f32.mrb[0].mxu0
        %3249 = vmatprep.mubr.f32.mxu0 %v3068
        %3250 = vmatmul.mubr.f32.gmra.mrb[0].mxu0 %v3067
        %v3251 = vpop.f32.mrb[0].mxu0
        %v3252 = vadd.f32 %v3108, %v3251
        %v3253 = vpop.f32.mrb[0].mxu0
        %3254 = vdwg.mxu0
        %v3255 = vtanh.pop %v3177
        %v3256 = vtanh.pop %v3182
        %v3257 = vtanh.pop %v3187
        %v3258 = vtanh.pop %v3192
        %v3259 = vtanh.pop %v3197
        %v3260 = vtanh.pop %v3202
        %v3261 = vtanh.pop %v3207
        %v3262 = vtanh.pop %v3212
        %v3263 = vtanh.pop %v3217
        %v3264 = vtanh.pop %v3222
        %v3265 = vtanh.pop %v3227
        %v3266 = vtanh.pop %v3232
        %v3267 = vtanh.pop %v3237
        %v3268 = vtanh.pop %v3242
        %v3269 = vtanh.pop %v3247
        %v3270 = vtanh.pop %v3252
        %v3271 = vsub.f32 %v1285, %v3177
        %v3272 = vsub.f32 %v1286, %v3182
        %v3273 = vsub.f32 %v1287, %v3187
        %v3274 = vsub.f32 %v1288, %v3192
        %v3275 = vsub.f32 %v1289, %v3197
        %v3276 = vsub.f32 %v1290, %v3202
        %v3277 = vsub.f32 %v1291, %v3207
        %v3278 = vsub.f32 %v1292, %v3212
        %v3279 = vsub.f32 %v1293, %v3217
        %v3280 = vsub.f32 %v1294, %v3222
        %v3281 = vsub.f32 %v1295, %v3227
        %v3282 = vsub.f32 %v1296, %v3232
        %v3283 = vsub.f32 %v1297, %v3237
        %v3284 = vsub.f32 %v1298, %v3242
        %v3285 = vsub.f32 %v1299, %v3247
        %v3286 = vsub.f32 %v1300, %v3252
        %v3287 = vsub.f32 0.0, %v3255
        %v3288 = vsub.f32 0.0, %v3256
        %v3289 = vsub.f32 0.0, %v3257
        %v3290 = vsub.f32 0.0, %v3258
        %v3291 = vsub.f32 0.0, %v3259
        %v3292 = vsub.f32 0.0, %v3260
        %v3293 = vsub.f32 0.0, %v3261
        %v3294 = vsub.f32 0.0, %v3262
        %v3295 = vsub.f32 0.0, %v3263
        %v3296 = vsub.f32 0.0, %v3264
        %v3297 = vsub.f32 0.0, %v3265
        %v3298 = vsub.f32 0.0, %v3266
        %v3299 = vsub.f32 0.0, %v3267
        %v3300 = vsub.f32 0.0, %v3268
        %v3301 = vsub.f32 0.0, %v3269
        %v3302 = vsub.f32 0.0, %v3270
        %v3303 = vmul.f32 %v3287, 1.442695
        %v3304 = vpow.pop %v3303
        %v3305 = vmul.f32 %v3288, 1.442695
        %v3306 = vpow.pop %v3305
        %v3307 = vmul.f32 %v3289, 1.442695
        %v3308 = vpow.pop %v3307
        %v3309 = vmul.f32 %v3290, 1.442695
        %v3310 = vpow.pop %v3309
        %v3311 = vmul.f32 %v3291, 1.442695
        %v3312 = vpow.pop %v3311
        %v3313 = vmul.f32 %v3292, 1.442695
        %v3314 = vpow.pop %v3313
        %v3315 = vmul.f32 %v3293, 1.442695
        %v3316 = vpow.pop %v3315
        %v3317 = vmul.f32 %v3294, 1.442695
        %v3318 = vpow.pop %v3317
        %v3319 = vmul.f32 %v3295, 1.442695
        %v3320 = vpow.pop %v3319
        %v3321 = vmul.f32 %v3296, 1.442695
        %v3322 = vpow.pop %v3321
        %v3323 = vmul.f32 %v3297, 1.442695
        %v3324 = vpow.pop %v3323
        %v3325 = vmul.f32 %v3298, 1.442695
        %v3326 = vpow.pop %v3325
        %v3327 = vmul.f32 %v3299, 1.442695
        %v3328 = vpow.pop %v3327
        %v3329 = vmul.f32 %v3300, 1.442695
        %v3330 = vpow.pop %v3329
        %v3331 = vmul.f32 %v3301, 1.442695
        %v3332 = vpow.pop %v3331
        %v3333 = vmul.f32 %v3302, 1.442695
        %v3334 = vpow.pop %v3333
        %3351 = vrot.lane.b32.xlu0 %v3304, 1
        %v3352 = vpop.permute.xlu0 %3351
        %3353 = vrot.lane.b32.xlu0 %v3306, 1
        %v3354 = vpop.permute.xlu0 %3353
        %3355 = vrot.lane.b32.xlu0 %v3308, 1
        %v3356 = vpop.permute.xlu0 %3355
        %3357 = vrot.lane.b32.xlu0 %v3310, 1
        %v3358 = vpop.permute.xlu0 %3357
        %3359 = vrot.lane.b32.xlu0 %v3312, 1
        %v3360 = vpop.permute.xlu0 %3359
        %3361 = vrot.lane.b32.xlu0 %v3314, 1
        %v3362 = vpop.permute.xlu0 %3361
        %3363 = vrot.lane.b32.xlu0 %v3316, 1
        %v3364 = vpop.permute.xlu0 %3363
        %3365 = vrot.lane.b32.xlu0 %v3318, 1
        %v3366 = vpop.permute.xlu0 %3365
        %3367 = vrot.lane.b32.xlu0 %v3320, 1
        %v3368 = vpop.permute.xlu0 %3367
        %3369 = vrot.lane.b32.xlu0 %v3322, 1
        %v3370 = vpop.permute.xlu0 %3369
        %3371 = vrot.lane.b32.xlu0 %v3324, 1
        %v3372 = vpop.permute.xlu0 %3371
        %3373 = vrot.lane.b32.xlu0 %v3326, 1
        %v3374 = vpop.permute.xlu0 %3373
        %3375 = vrot.lane.b32.xlu0 %v3328, 1
        %v3376 = vpop.permute.xlu0 %3375
        %3377 = vrot.lane.b32.xlu0 %v3330, 1
        %v3378 = vpop.permute.xlu0 %3377
        %3379 = vrot.lane.b32.xlu0 %v3332, 1
        %v3380 = vpop.permute.xlu0 %3379
        %3381 = vrot.lane.b32.xlu0 %v3334, 1
        %v3382 = vpop.permute.xlu0 %3381
        %v3399 = vmul.f32 %v3271, %v3352
        %v3400 = vmul.f32 %v3272, %v3354
        %v3401 = vmul.f32 %v3273, %v3356
        %v3402 = vmul.f32 %v3274, %v3358
        %v3403 = vmul.f32 %v3275, %v3360
        %v3404 = vmul.f32 %v3276, %v3362
        %v3405 = vmul.f32 %v3277, %v3364
        %v3406 = vmul.f32 %v3278, %v3366
        %v3407 = vmul.f32 %v3279, %v3368
        %v3408 = vmul.f32 %v3280, %v3370
        %v3409 = vmul.f32 %v3281, %v3372
        %v3410 = vmul.f32 %v3282, %v3374
        %v3411 = vmul.f32 %v3283, %v3376
        %v3412 = vmul.f32 %v3284, %v3378
        %v3413 = vmul.f32 %v3285, %v3380
        %v3414 = vmul.f32 %v3286, %v3382
        %v3415 = vsub.f32 %v2382, %v3255
        %v3416 = vsub.f32 %v2383, %v3256
        %v3417 = vsub.f32 %v2384, %v3257
        %v3418 = vsub.f32 %v2385, %v3258
        %v3419 = vsub.f32 %v2386, %v3259
        %v3420 = vsub.f32 %v2387, %v3260
        %v3421 = vsub.f32 %v2388, %v3261
        %v3422 = vsub.f32 %v2389, %v3262
        %v3423 = vsub.f32 %v2390, %v3263
        %v3424 = vsub.f32 %v2391, %v3264
        %v3425 = vsub.f32 %v2392, %v3265
        %v3426 = vsub.f32 %v2393, %v3266
        %v3427 = vsub.f32 %v2394, %v3267
        %v3428 = vsub.f32 %v2395, %v3268
        %v3429 = vsub.f32 %v2396, %v3269
        %v3430 = vsub.f32 %v2397, %v3270
        %3447 = vrot.lane.b32.xlu0 %v3399, 127
        %v3448 = vpop.permute.xlu0 %3447
        %3449 = vrot.lane.b32.xlu0 %v3400, 127
        %v3450 = vpop.permute.xlu0 %3449
        %3451 = vrot.lane.b32.xlu0 %v3401, 127
        %v3452 = vpop.permute.xlu0 %3451
        %3453 = vrot.lane.b32.xlu0 %v3402, 127
        %v3454 = vpop.permute.xlu0 %3453
        %3455 = vrot.lane.b32.xlu0 %v3403, 127
        %v3456 = vpop.permute.xlu0 %3455
        %3457 = vrot.lane.b32.xlu0 %v3404, 127
        %v3458 = vpop.permute.xlu0 %3457
        %3459 = vrot.lane.b32.xlu0 %v3405, 127
        %v3460 = vpop.permute.xlu0 %3459
        %3461 = vrot.lane.b32.xlu0 %v3406, 127
        %v3462 = vpop.permute.xlu0 %3461
        %3463 = vrot.lane.b32.xlu0 %v3407, 127
        %v3464 = vpop.permute.xlu0 %3463
        %3465 = vrot.lane.b32.xlu0 %v3408, 127
        %v3466 = vpop.permute.xlu0 %3465
        %3467 = vrot.lane.b32.xlu0 %v3409, 127
        %v3468 = vpop.permute.xlu0 %3467
        %3469 = vrot.lane.b32.xlu0 %v3410, 127
        %v3470 = vpop.permute.xlu0 %3469
        %3471 = vrot.lane.b32.xlu0 %v3411, 127
        %v3472 = vpop.permute.xlu0 %3471
        %3473 = vrot.lane.b32.xlu0 %v3412, 127
        %v3474 = vpop.permute.xlu0 %3473
        %3475 = vrot.lane.b32.xlu0 %v3413, 127
        %v3476 = vpop.permute.xlu0 %3475
        %3477 = vrot.lane.b32.xlu0 %v3414, 127
        %v3478 = vpop.permute.xlu0 %3477
        %v3495 = vsel %vm286, %v3448, 1.0
        %v3496 = vsel %vm286, %v3450, 1.0
        %v3497 = vsel %vm286, %v3452, 1.0
        %v3498 = vsel %vm286, %v3454, 1.0
        %v3499 = vsel %vm286, %v3456, 1.0
        %v3500 = vsel %vm286, %v3458, 1.0
        %v3501 = vsel %vm286, %v3460, 1.0
        %v3502 = vsel %vm286, %v3462, 1.0
        %v3503 = vsel %vm286, %v3464, 1.0
        %v3504 = vsel %vm286, %v3466, 1.0
        %v3505 = vsel %vm286, %v3468, 1.0
        %v3506 = vsel %vm286, %v3470, 1.0
        %v3507 = vsel %vm286, %v3472, 1.0
        %v3508 = vsel %vm286, %v3474, 1.0
        %v3509 = vsel %vm286, %v3476, 1.0
        %v3510 = vsel %vm286, %v3478, 1.0
        %s3511 = scalar_lea.vmem %s1, 12
        %v3512 = vld [vmem:[%s3511] sm:$0xf]
        %v3515 = vunpack.c.l.s4 1983009808
        %v3516 = vunpack.c.0.s8 %v3515
        %v3517 = vlaneseq
        %v3518 = vshrl.u32 %v3517, 7
        %v3519 = vsub.s32 %v3516, %v3518
        %v3520 = vrot.slane %v3512, %v3519
        %v3521 = vcombine.high %v3520, %v3520
        %v3523 = vsel %vm313, %v3495, 0
        %v3526 = vsel %vm313, %v3496, 0
        %v3529 = vsel %vm313, %v3497, 0
        %v3532 = vsel %vm313, %v3498, 0
        %v3535 = vsel %vm313, %v3499, 0
        %v3538 = vsel %vm313, %v3500, 0
        %v3541 = vsel %vm313, %v3501, 0
        %v3544 = vsel %vm313, %v3502, 0
        %v3547 = vsel %vm313, %v3503, 0
        %v3550 = vsel %vm313, %v3504, 0
        %v3553 = vsel %vm313, %v3505, 0
        %v3556 = vsel %vm313, %v3506, 0
        %v3559 = vsel %vm313, %v3507, 0
        %v3562 = vsel %vm313, %v3508, 0
        %v3565 = vsel %vm313, %v3509, 0
        %v3568 = vsel %vm313, %v3510, 0
        %v3570 = vsel %vm362, %v3520, 0
        %v3572 = vsel %vm362, %v3521, 0
        %3574 = vmatprep.subr.mxu0 %v3572
        %3575 = vmatpush1.msra.mxu0 %v3570
        %3576 = vmatprep.subr.mxu0 0.0
        %3577 = vmatpush1.msra.mxu0 0.0
        %3578 = vmatprep.subr.mxu0 0.0
        %3579 = vmatpush1.msra.mxu0 0.0
        %3580 = vmatprep.subr.mxu0 0.0
        %3581 = vmatpush1.msra.mxu0 0.0
        %3582 = vmatprep.subr.mxu0 0.0
        %3583 = vmatpush1.msra.mxu0 0.0
        %3584 = vmatprep.subr.mxu0 0.0
        %3585 = vmatpush1.msra.mxu0 0.0
        %3586 = vmatprep.subr.mxu0 0.0
        %3587 = vmatpush1.msra.mxu0 0.0
        %3588 = vmatprep.subr.mxu0 0.0
        %3589 = vmatpush1.msra.mxu0 0.0
        %3590 = vmatprep.subr.mxu0 0.0
        %3591 = vmatpush1.msra.mxu0 0.0
        %3592 = vmatprep.subr.mxu0 0.0
        %3593 = vmatpush1.msra.mxu0 0.0
        %3594 = vmatprep.subr.mxu0 0.0
        %3595 = vmatpush1.msra.mxu0 0.0
        %3596 = vmatprep.subr.mxu0 0.0
        %3597 = vmatpush1.msra.mxu0 0.0
        %3598 = vmatprep.subr.mxu0 0.0
        %3599 = vmatpush1.msra.mxu0 0.0
        %3600 = vmatprep.subr.mxu0 0.0
        %3601 = vmatpush1.msra.mxu0 0.0
        %3602 = vmatprep.subr.mxu0 0.0
        %3603 = vmatpush1.msra.mxu0 0.0
        %3604 = vmatprep.subr.mxu0 0.0
        %3605 = vmatpush1.msra.mxu0 0.0
        %3606 = vmatprep.subr.mxu0 0.0
        %3607 = vmatpush1.msra.mxu0 0.0
        %3608 = vmatprep.subr.mxu0 0.0
        %3609 = vmatpush1.msra.mxu0 0.0
        %3610 = vmatprep.subr.mxu0 0.0
        %3611 = vmatpush1.msra.mxu0 0.0
        %3612 = vmatprep.subr.mxu0 0.0
        %3613 = vmatpush1.msra.mxu0 0.0
        %3614 = vmatprep.subr.mxu0 0.0
        %3615 = vmatpush1.msra.mxu0 0.0
        %3616 = vmatprep.subr.mxu0 0.0
        %3617 = vmatpush1.msra.mxu0 0.0
        %3618 = vmatprep.subr.mxu0 0.0
        %3619 = vmatpush1.msra.mxu0 0.0
        %3620 = vmatprep.subr.mxu0 0.0
        %3621 = vmatpush1.msra.mxu0 0.0
        %3622 = vmatprep.subr.mxu0 0.0
        %3623 = vmatpush1.msra.mxu0 0.0
        %3624 = vmatprep.subr.mxu0 0.0
        %3625 = vmatpush1.msra.mxu0 0.0
        %3626 = vmatprep.subr.mxu0 0.0
        %3627 = vmatpush1.msra.mxu0 0.0
        %3628 = vmatprep.subr.mxu0 0.0
        %3629 = vmatpush1.msra.mxu0 0.0
        %3630 = vmatprep.subr.mxu0 0.0
        %3631 = vmatpush1.msra.mxu0 0.0
        %3632 = vmatprep.subr.mxu0 0.0
        %3633 = vmatpush1.msra.mxu0 0.0
        %3634 = vmatprep.subr.mxu0 0.0
        %3635 = vmatpush1.msra.mxu0 0.0
        %3636 = vmatprep.subr.mxu0 0.0
        %3637 = vmatpush1.msra.mxu0 0.0
        %3638 = vmatprep.mubr.f32.mxu0 0.0
        %3639 = vmatmul.mubr.f32.gmra.mrb[0].mxu0 %v3523
        %v3640 = vpop.f32.mrb[0].mxu0
        %v3641 = vadd.f32 0.0, %v3640
        %v3642 = vpop.f32.mrb[0].mxu0
        %v3643 = vadd.f32 0.0, %v3642
        %3644 = vmatprep.mubr.f32.mxu0 0.0
        %3645 = vmatmul.mubr.f32.gmra.mrb[0].mxu0 %v3526
        %v3646 = vpop.f32.mrb[0].mxu0
        %v3647 = vadd.f32 0.0, %v3646
        %v3648 = vpop.f32.mrb[0].mxu0
        %v3649 = vadd.f32 0.0, %v3648
        %3650 = vmatprep.mubr.f32.mxu0 0.0
        %3651 = vmatmul.mubr.f32.gmra.mrb[0].mxu0 %v3529
        %v3652 = vpop.f32.mrb[0].mxu0
        %v3653 = vadd.f32 0.0, %v3652
        %v3654 = vpop.f32.mrb[0].mxu0
        %v3655 = vadd.f32 0.0, %v3654
        %3656 = vmatprep.mubr.f32.mxu0 0.0
        %3657 = vmatmul.mubr.f32.gmra.mrb[0].mxu0 %v3532
        %v3658 = vpop.f32.mrb[0].mxu0
        %v3659 = vadd.f32 0.0, %v3658
        %v3660 = vpop.f32.mrb[0].mxu0
        %v3661 = vadd.f32 0.0, %v3660
        %3662 = vmatprep.mubr.f32.mxu0 0.0
        %3663 = vmatmul.mubr.f32.gmra.mrb[0].mxu0 %v3535
        %v3664 = vpop.f32.mrb[0].mxu0
        %v3665 = vadd.f32 0.0, %v3664
        %v3666 = vpop.f32.mrb[0].mxu0
        %v3667 = vadd.f32 0.0, %v3666
        %3668 = vmatprep.mubr.f32.mxu0 0.0
        %3669 = vmatmul.mubr.f32.gmra.mrb[0].mxu0 %v3538
        %v3670 = vpop.f32.mrb[0].mxu0
        %v3671 = vadd.f32 0.0, %v3670
        %v3672 = vpop.f32.mrb[0].mxu0
        %v3673 = vadd.f32 0.0, %v3672
        %3674 = vmatprep.mubr.f32.mxu0 0.0
        %3675 = vmatmul.mubr.f32.gmra.mrb[0].mxu0 %v3541
        %v3676 = vpop.f32.mrb[0].mxu0
        %v3677 = vadd.f32 0.0, %v3676
        %v3678 = vpop.f32.mrb[0].mxu0
        %v3679 = vadd.f32 0.0, %v3678
        %3680 = vmatprep.mubr.f32.mxu0 0.0
        %3681 = vmatmul.mubr.f32.gmra.mrb[0].mxu0 %v3544
        %v3682 = vpop.f32.mrb[0].mxu0
        %v3683 = vadd.f32 0.0, %v3682
        %v3684 = vpop.f32.mrb[0].mxu0
        %v3685 = vadd.f32 0.0, %v3684
        %3686 = vmatprep.mubr.f32.mxu0 0.0
        %3687 = vmatmul.mubr.f32.gmra.mrb[0].mxu0 %v3547
        %v3688 = vpop.f32.mrb[0].mxu0
        %v3689 = vadd.f32 0.0, %v3688
        %v3690 = vpop.f32.mrb[0].mxu0
        %v3691 = vadd.f32 0.0, %v3690
        %3692 = vmatprep.mubr.f32.mxu0 0.0
        %3693 = vmatmul.mubr.f32.gmra.mrb[0].mxu0 %v3550
        %v3694 = vpop.f32.mrb[0].mxu0
        %v3695 = vadd.f32 0.0, %v3694
        %v3696 = vpop.f32.mrb[0].mxu0
        %v3697 = vadd.f32 0.0, %v3696
        %3698 = vmatprep.mubr.f32.mxu0 0.0
        %3699 = vmatmul.mubr.f32.gmra.mrb[0].mxu0 %v3553
        %v3700 = vpop.f32.mrb[0].mxu0
        %v3701 = vadd.f32 0.0, %v3700
        %v3702 = vpop.f32.mrb[0].mxu0
        %v3703 = vadd.f32 0.0, %v3702
        %3704 = vmatprep.mubr.f32.mxu0 0.0
        %3705 = vmatmul.mubr.f32.gmra.mrb[0].mxu0 %v3556
        %v3706 = vpop.f32.mrb[0].mxu0
        %v3707 = vadd.f32 0.0, %v3706
        %v3708 = vpop.f32.mrb[0].mxu0
        %v3709 = vadd.f32 0.0, %v3708
        %3710 = vmatprep.mubr.f32.mxu0 0.0
        %3711 = vmatmul.mubr.f32.gmra.mrb[0].mxu0 %v3559
        %v3712 = vpop.f32.mrb[0].mxu0
        %v3713 = vadd.f32 0.0, %v3712
        %v3714 = vpop.f32.mrb[0].mxu0
        %v3715 = vadd.f32 0.0, %v3714
        %3716 = vmatprep.mubr.f32.mxu0 0.0
        %3717 = vmatmul.mubr.f32.gmra.mrb[0].mxu0 %v3562
        %v3718 = vpop.f32.mrb[0].mxu0
        %v3719 = vadd.f32 0.0, %v3718
        %v3720 = vpop.f32.mrb[0].mxu0
        %v3721 = vadd.f32 0.0, %v3720
        %3722 = vmatprep.mubr.f32.mxu0 0.0
        %3723 = vmatmul.mubr.f32.gmra.mrb[0].mxu0 %v3565
        %v3724 = vpop.f32.mrb[0].mxu0
        %v3725 = vadd.f32 0.0, %v3724
        %v3726 = vpop.f32.mrb[0].mxu0
        %v3727 = vadd.f32 0.0, %v3726
        %3728 = vmatprep.mubr.f32.mxu0 0.0
        %3729 = vmatmul.mubr.f32.gmra.mrb[0].mxu0 %v3568
        %v3730 = vpop.f32.mrb[0].mxu0
        %v3731 = vadd.f32 0.0, %v3730
        %v3732 = vpop.f32.mrb[0].mxu0
        %v3733 = vadd.f32 0.0, %v3732
        %3734 = vdwg.mxu0
        %vm3735 = vcmp.gt.f32.partialorder %v3641, 0.0
        %vm3736 = vcmp.gt.f32.partialorder %v3643, 0.0
        %vm3737 = vcmp.gt.f32.partialorder %v3647, 0.0
        %vm3738 = vcmp.gt.f32.partialorder %v3649, 0.0
        %vm3739 = vcmp.gt.f32.partialorder %v3653, 0.0
        %vm3740 = vcmp.gt.f32.partialorder %v3655, 0.0
        %vm3741 = vcmp.gt.f32.partialorder %v3659, 0.0
        %vm3742 = vcmp.gt.f32.partialorder %v3661, 0.0
        %vm3743 = vcmp.gt.f32.partialorder %v3665, 0.0
        %vm3744 = vcmp.gt.f32.partialorder %v3667, 0.0
        %vm3745 = vcmp.gt.f32.partialorder %v3671, 0.0
        %vm3746 = vcmp.gt.f32.partialorder %v3673, 0.0
        %vm3747 = vcmp.gt.f32.partialorder %v3677, 0.0
        %vm3748 = vcmp.gt.f32.partialorder %v3679, 0.0
        %vm3749 = vcmp.gt.f32.partialorder %v3683, 0.0
        %vm3750 = vcmp.gt.f32.partialorder %v3685, 0.0
        %vm3751 = vcmp.gt.f32.partialorder %v3689, 0.0
        %vm3752 = vcmp.gt.f32.partialorder %v3691, 0.0
        %vm3753 = vcmp.gt.f32.partialorder %v3695, 0.0
        %vm3754 = vcmp.gt.f32.partialorder %v3697, 0.0
        %vm3755 = vcmp.gt.f32.partialorder %v3701, 0.0
        %vm3756 = vcmp.gt.f32.partialorder %v3703, 0.0
        %vm3757 = vcmp.gt.f32.partialorder %v3707, 0.0
        %vm3758 = vcmp.gt.f32.partialorder %v3709, 0.0
        %vm3759 = vcmp.gt.f32.partialorder %v3713, 0.0
        %vm3760 = vcmp.gt.f32.partialorder %v3715, 0.0
        %vm3761 = vcmp.gt.f32.partialorder %v3719, 0.0
        %vm3762 = vcmp.gt.f32.partialorder %v3721, 0.0
        %vm3763 = vcmp.gt.f32.partialorder %v3725, 0.0
        %vm3764 = vcmp.gt.f32.partialorder %v3727, 0.0
        %vm3765 = vcmp.gt.f32.partialorder %v3731, 0.0
        %vm3766 = vcmp.gt.f32.partialorder %v3733, 0.0
        %v3767 = vmul.f32 %v3641, 0.01
        %v3768 = vmul.f32 %v3643, 0.01
        %v3769 = vmul.f32 %v3647, 0.01
        %v3770 = vmul.f32 %v3649, 0.01
        %v3771 = vmul.f32 %v3653, 0.01
        %v3772 = vmul.f32 %v3655, 0.01
        %v3773 = vmul.f32 %v3659, 0.01
        %v3774 = vmul.f32 %v3661, 0.01
        %v3775 = vmul.f32 %v3665, 0.01
        %v3776 = vmul.f32 %v3667, 0.01
        %v3777 = vmul.f32 %v3671, 0.01
        %v3778 = vmul.f32 %v3673, 0.01
        %v3779 = vmul.f32 %v3677, 0.01
        %v3780 = vmul.f32 %v3679, 0.01
        %v3781 = vmul.f32 %v3683, 0.01
        %v3782 = vmul.f32 %v3685, 0.01
        %v3783 = vmul.f32 %v3689, 0.01
        %v3784 = vmul.f32 %v3691, 0.01
        %v3785 = vmul.f32 %v3695, 0.01
        %v3786 = vmul.f32 %v3697, 0.01
        %v3787 = vmul.f32 %v3701, 0.01
        %v3788 = vmul.f32 %v3703, 0.01
        %v3789 = vmul.f32 %v3707, 0.01
        %v3790 = vmul.f32 %v3709, 0.01
        %v3791 = vmul.f32 %v3713, 0.01
        %v3792 = vmul.f32 %v3715, 0.01
        %v3793 = vmul.f32 %v3719, 0.01
        %v3794 = vmul.f32 %v3721, 0.01
        %v3795 = vmul.f32 %v3725, 0.01
        %v3796 = vmul.f32 %v3727, 0.01
        %v3797 = vmul.f32 %v3731, 0.01
        %v3798 = vmul.f32 %v3733, 0.01
        %v3799 = vsel %vm3735, %v3641, %v3767
        %v3800 = vsel %vm3736, %v3643, %v3768
        %v3801 = vsel %vm3737, %v3647, %v3769
        %v3802 = vsel %vm3738, %v3649, %v3770
        %v3803 = vsel %vm3739, %v3653, %v3771
        %v3804 = vsel %vm3740, %v3655, %v3772
        %v3805 = vsel %vm3741, %v3659, %v3773
        %v3806 = vsel %vm3742, %v3661, %v3774
        %v3807 = vsel %vm3743, %v3665, %v3775
        %v3808 = vsel %vm3744, %v3667, %v3776
        %v3809 = vsel %vm3745, %v3671, %v3777
        %v3810 = vsel %vm3746, %v3673, %v3778
        %v3811 = vsel %vm3747, %v3677, %v3779
        %v3812 = vsel %vm3748, %v3679, %v3780
        %v3813 = vsel %vm3749, %v3683, %v3781
        %v3814 = vsel %vm3750, %v3685, %v3782
        %v3815 = vsel %vm3751, %v3689, %v3783
        %v3816 = vsel %vm3752, %v3691, %v3784
        %v3817 = vsel %vm3753, %v3695, %v3785
        %v3818 = vsel %vm3754, %v3697, %v3786
        %v3819 = vsel %vm3755, %v3701, %v3787
        %v3820 = vsel %vm3756, %v3703, %v3788
        %v3821 = vsel %vm3757, %v3707, %v3789
        %v3822 = vsel %vm3758, %v3709, %v3790
        %v3823 = vsel %vm3759, %v3713, %v3791
        %v3824 = vsel %vm3760, %v3715, %v3792
        %v3825 = vsel %vm3761, %v3719, %v3793
        %v3826 = vsel %vm3762, %v3721, %v3794
        %v3827 = vsel %vm3763, %v3725, %v3795
        %v3828 = vsel %vm3764, %v3727, %v3796
        %v3829 = vsel %vm3765, %v3731, %v3797
        %v3830 = vsel %vm3766, %v3733, %v3798
        %s3831 = scalar_lea.vmem [#allocation2], 1536
        %v3832 = vld [vmem:[%s3831] sm:$0xff]
        %v3833 = vld [vmem:[%s3831 + $0x8] sm:$0xff]
        %v3834 = vld [vmem:[%s3831 + $0x10] sm:$0xff]
        %v3835 = vld [vmem:[%s3831 + $0x18] sm:$0xff]
        %v3836 = vld [vmem:[%s3831 + $0x20] sm:$0xff]
        %v3837 = vld [vmem:[%s3831 + $0x28] sm:$0xff]
        %v3838 = vld [vmem:[%s3831 + $0x30] sm:$0xff]
        %v3839 = vld [vmem:[%s3831 + $0x38] sm:$0xff]
        %v3840 = vld [vmem:[%s3831 + $0x40] sm:$0xff]
        %v3841 = vld [vmem:[%s3831 + $0x48] sm:$0xff]
        %v3842 = vld [vmem:[%s3831 + $0x50] sm:$0xff]
        %v3843 = vld [vmem:[%s3831 + $0x58] sm:$0xff]
        %v3844 = vld [vmem:[%s3831 + $0x60] sm:$0xff]
        %v3845 = vld [vmem:[%s3831 + $0x68] sm:$0xff]
        %v3846 = vld [vmem:[%s3831 + $0x70] sm:$0xff]
        %v3847 = vld [vmem:[%s3831 + $0x78] sm:$0xff]
        %v3848 = vld [vmem:[%s3831 + $0x80] sm:$0xff]
        %v3849 = vld [vmem:[%s3831 + $0x88] sm:$0xff]
        %v3850 = vld [vmem:[%s3831 + $0x90] sm:$0xff]
        %v3851 = vld [vmem:[%s3831 + $0x98] sm:$0xff]
        %v3852 = vld [vmem:[%s3831 + $0xa0] sm:$0xff]
        %v3853 = vld [vmem:[%s3831 + $0xa8] sm:$0xff]
        %v3854 = vld [vmem:[%s3831 + $0xb0] sm:$0xff]
        %v3855 = vld [vmem:[%s3831 + $0xb8] sm:$0xff]
        %v3856 = vld [vmem:[%s3831 + $0xc0] sm:$0xff]
        %v3857 = vld [vmem:[%s3831 + $0xc8] sm:$0xff]
        %v3858 = vld [vmem:[%s3831 + $0xd0] sm:$0xff]
        %v3859 = vld [vmem:[%s3831 + $0xd8] sm:$0xff]
        %v3860 = vld [vmem:[%s3831 + $0xe0] sm:$0xff]
        %v3861 = vld [vmem:[%s3831 + $0xe8] sm:$0xff]
        %v3862 = vld [vmem:[%s3831 + $0xf0] sm:$0xff]
        %v3863 = vld [vmem:[%s3831 + $0xf8] sm:$0xff]
        %v3864 = vld [vmem:[%s3831 + $0x100] sm:$0xff]
        %v3865 = vld [vmem:[%s3831 + $0x108] sm:$0xff]
        %v3866 = vld [vmem:[%s3831 + $0x110] sm:$0xff]
        %v3867 = vld [vmem:[%s3831 + $0x118] sm:$0xff]
        %v3868 = vld [vmem:[%s3831 + $0x120] sm:$0xff]
        %v3869 = vld [vmem:[%s3831 + $0x128] sm:$0xff]
        %v3870 = vld [vmem:[%s3831 + $0x130] sm:$0xff]
        %v3871 = vld [vmem:[%s3831 + $0x138] sm:$0xff]
        %v3872 = vld [vmem:[%s3831 + $0x140] sm:$0xff]
        %v3873 = vld [vmem:[%s3831 + $0x148] sm:$0xff]
        %v3874 = vld [vmem:[%s3831 + $0x150] sm:$0xff]
        %v3875 = vld [vmem:[%s3831 + $0x158] sm:$0xff]
        %v3876 = vld [vmem:[%s3831 + $0x160] sm:$0xff]
        %v3877 = vld [vmem:[%s3831 + $0x168] sm:$0xff]
        %v3878 = vld [vmem:[%s3831 + $0x170] sm:$0xff]
        %v3879 = vld [vmem:[%s3831 + $0x178] sm:$0xff]
        %v3880 = vld [vmem:[%s3831 + $0x180] sm:$0xff]
        %v3881 = vld [vmem:[%s3831 + $0x188] sm:$0xff]
        %v3882 = vld [vmem:[%s3831 + $0x190] sm:$0xff]
        %v3883 = vld [vmem:[%s3831 + $0x198] sm:$0xff]
        %v3884 = vld [vmem:[%s3831 + $0x1a0] sm:$0xff]
        %v3885 = vld [vmem:[%s3831 + $0x1a8] sm:$0xff]
        %v3886 = vld [vmem:[%s3831 + $0x1b0] sm:$0xff]
        %v3887 = vld [vmem:[%s3831 + $0x1b8] sm:$0xff]
        %v3888 = vld [vmem:[%s3831 + $0x1c0] sm:$0xff]
        %v3889 = vld [vmem:[%s3831 + $0x1c8] sm:$0xff]
        %v3890 = vld [vmem:[%s3831 + $0x1d0] sm:$0xff]
        %v3891 = vld [vmem:[%s3831 + $0x1d8] sm:$0xff]
        %v3892 = vld [vmem:[%s3831 + $0x1e0] sm:$0xff]
        %v3893 = vld [vmem:[%s3831 + $0x1e8] sm:$0xff]
        %v3894 = vld [vmem:[%s3831 + $0x1f0] sm:$0xff]
        %v3895 = vld [vmem:[%s3831 + $0x1f8] sm:$0xff]
        %s3896 = scalar_lea.vmem %s3, 6
        %v3897 = vld [vmem:[%s3896] sm:$0x3]
        %v3899 = vlaneseq
        %v3900 = vshrl.u32 %v3899, 7
        %v3901 = vsub.s32 0, %v3900
        %v3902 = vrot.slane %v3897, %v3901
        %v3903 = vlaneseq
        %v3904 = vshrl.u32 %v3903, 7
        %v3905 = vsub.s32 1, %v3904
        %v3906 = vrot.slane %v3897, %v3905
        %3909 = vmatprep.subr.mxu0 %v3833
        %3910 = vmatpush1.msra.mxu0 %v3832
        %3911 = vmatprep.subr.mxu0 %v3835
        %3912 = vmatpush1.msra.mxu0 %v3834
        %3913 = vmatprep.subr.mxu0 %v3837
        %3914 = vmatpush1.msra.mxu0 %v3836
        %3915 = vmatprep.subr.mxu0 %v3839
        %3916 = vmatpush1.msra.mxu0 %v3838
        %3917 = vmatprep.subr.mxu0 %v3841
        %3918 = vmatpush1.msra.mxu0 %v3840
        %3919 = vmatprep.subr.mxu0 %v3843
        %3920 = vmatpush1.msra.mxu0 %v3842
        %3921 = vmatprep.subr.mxu0 %v3845
        %3922 = vmatpush1.msra.mxu0 %v3844
        %3923 = vmatprep.subr.mxu0 %v3847
        %3924 = vmatpush1.msra.mxu0 %v3846
        %3925 = vmatprep.subr.mxu0 %v3849
        %3926 = vmatpush1.msra.mxu0 %v3848
        %3927 = vmatprep.subr.mxu0 %v3851
        %3928 = vmatpush1.msra.mxu0 %v3850
        %3929 = vmatprep.subr.mxu0 %v3853
        %3930 = vmatpush1.msra.mxu0 %v3852
        %3931 = vmatprep.subr.mxu0 %v3855
        %3932 = vmatpush1.msra.mxu0 %v3854
        %3933 = vmatprep.subr.mxu0 %v3857
        %3934 = vmatpush1.msra.mxu0 %v3856
        %3935 = vmatprep.subr.mxu0 %v3859
        %3936 = vmatpush1.msra.mxu0 %v3858
        %3937 = vmatprep.subr.mxu0 %v3861
        %3938 = vmatpush1.msra.mxu0 %v3860
        %3939 = vmatprep.subr.mxu0 %v3863
        %3940 = vmatpush1.msra.mxu0 %v3862
        %3941 = vmatprep.subr.mxu0 %v3865
        %3942 = vmatpush1.msra.mxu0 %v3864
        %3943 = vmatprep.subr.mxu0 %v3867
        %3944 = vmatpush1.msra.mxu0 %v3866
        %3945 = vmatprep.subr.mxu0 %v3869
        %3946 = vmatpush1.msra.mxu0 %v3868
        %3947 = vmatprep.subr.mxu0 %v3871
        %3948 = vmatpush1.msra.mxu0 %v3870
        %3949 = vmatprep.subr.mxu0 %v3873
        %3950 = vmatpush1.msra.mxu0 %v3872
        %3951 = vmatprep.subr.mxu0 %v3875
        %3952 = vmatpush1.msra.mxu0 %v3874
        %3953 = vmatprep.subr.mxu0 %v3877
        %3954 = vmatpush1.msra.mxu0 %v3876
        %3955 = vmatprep.subr.mxu0 %v3879
        %3956 = vmatpush1.msra.mxu0 %v3878
        %3957 = vmatprep.subr.mxu0 %v3881
        %3958 = vmatpush1.msra.mxu0 %v3880
        %3959 = vmatprep.subr.mxu0 %v3883
        %3960 = vmatpush1.msra.mxu0 %v3882
        %3961 = vmatprep.subr.mxu0 %v3885
        %3962 = vmatpush1.msra.mxu0 %v3884
        %3963 = vmatprep.subr.mxu0 %v3887
        %3964 = vmatpush1.msra.mxu0 %v3886
        %3965 = vmatprep.subr.mxu0 %v3889
        %3966 = vmatpush1.msra.mxu0 %v3888
        %3967 = vmatprep.subr.mxu0 %v3891
        %3968 = vmatpush1.msra.mxu0 %v3890
        %3969 = vmatprep.subr.mxu0 %v3893
        %3970 = vmatpush1.msra.mxu0 %v3892
        %3971 = vmatprep.subr.mxu0 %v3895
        %3972 = vmatpush1.msra.mxu0 %v3894
        %3973 = vmatprep.mubr.f32.mxu0 %v3800
        %3974 = vmatmul.mubr.f32.gmra.mrb[0].mxu0 %v3799
        %v3975 = vpop.f32.mrb[0].mxu0
        %v3976 = vadd.f32 %v3902, %v3975
        %v3977 = vpop.f32.mrb[0].mxu0
        %v3978 = vadd.f32 %v3906, %v3977
        %3979 = vmatprep.mubr.f32.mxu0 %v3802
        %3980 = vmatmul.mubr.f32.gmra.mrb[0].mxu0 %v3801
        %v3981 = vpop.f32.mrb[0].mxu0
        %v3982 = vadd.f32 %v3902, %v3981
        %v3983 = vpop.f32.mrb[0].mxu0
        %v3984 = vadd.f32 %v3906, %v3983
        %3985 = vmatprep.mubr.f32.mxu0 %v3804
        %3986 = vmatmul.mubr.f32.gmra.mrb[0].mxu0 %v3803
        %v3987 = vpop.f32.mrb[0].mxu0
        %v3988 = vadd.f32 %v3902, %v3987
        %v3989 = vpop.f32.mrb[0].mxu0
        %v3990 = vadd.f32 %v3906, %v3989
        %3991 = vmatprep.mubr.f32.mxu0 %v3806
        %3992 = vmatmul.mubr.f32.gmra.mrb[0].mxu0 %v3805
        %v3993 = vpop.f32.mrb[0].mxu0
        %v3994 = vadd.f32 %v3902, %v3993
        %v3995 = vpop.f32.mrb[0].mxu0
        %v3996 = vadd.f32 %v3906, %v3995
        %3997 = vmatprep.mubr.f32.mxu0 %v3808
        %3998 = vmatmul.mubr.f32.gmra.mrb[0].mxu0 %v3807
        %v3999 = vpop.f32.mrb[0].mxu0
        %v4000 = vadd.f32 %v3902, %v3999
        %v4001 = vpop.f32.mrb[0].mxu0
        %v4002 = vadd.f32 %v3906, %v4001
        %4003 = vmatprep.mubr.f32.mxu0 %v3810
        %4004 = vmatmul.mubr.f32.gmra.mrb[0].mxu0 %v3809
        %v4005 = vpop.f32.mrb[0].mxu0
        %v4006 = vadd.f32 %v3902, %v4005
        %v4007 = vpop.f32.mrb[0].mxu0
        %v4008 = vadd.f32 %v3906, %v4007
        %4009 = vmatprep.mubr.f32.mxu0 %v3812
        %4010 = vmatmul.mubr.f32.gmra.mrb[0].mxu0 %v3811
        %v4011 = vpop.f32.mrb[0].mxu0
        %v4012 = vadd.f32 %v3902, %v4011
        %v4013 = vpop.f32.mrb[0].mxu0
        %v4014 = vadd.f32 %v3906, %v4013
        %4015 = vmatprep.mubr.f32.mxu0 %v3814
        %4016 = vmatmul.mubr.f32.gmra.mrb[0].mxu0 %v3813
        %v4017 = vpop.f32.mrb[0].mxu0
        %v4018 = vadd.f32 %v3902, %v4017
        %v4019 = vpop.f32.mrb[0].mxu0
        %v4020 = vadd.f32 %v3906, %v4019
        %4021 = vmatprep.mubr.f32.mxu0 %v3816
        %4022 = vmatmul.mubr.f32.gmra.mrb[0].mxu0 %v3815
        %v4023 = vpop.f32.mrb[0].mxu0
        %v4024 = vadd.f32 %v3902, %v4023
        %v4025 = vpop.f32.mrb[0].mxu0
        %v4026 = vadd.f32 %v3906, %v4025
        %4027 = vmatprep.mubr.f32.mxu0 %v3818
        %4028 = vmatmul.mubr.f32.gmra.mrb[0].mxu0 %v3817
        %v4029 = vpop.f32.mrb[0].mxu0
        %v4030 = vadd.f32 %v3902, %v4029
        %v4031 = vpop.f32.mrb[0].mxu0
        %v4032 = vadd.f32 %v3906, %v4031
        %4033 = vmatprep.mubr.f32.mxu0 %v3820
        %4034 = vmatmul.mubr.f32.gmra.mrb[0].mxu0 %v3819
        %v4035 = vpop.f32.mrb[0].mxu0
        %v4036 = vadd.f32 %v3902, %v4035
        %v4037 = vpop.f32.mrb[0].mxu0
        %v4038 = vadd.f32 %v3906, %v4037
        %4039 = vmatprep.mubr.f32.mxu0 %v3822
        %4040 = vmatmul.mubr.f32.gmra.mrb[0].mxu0 %v3821
        %v4041 = vpop.f32.mrb[0].mxu0
        %v4042 = vadd.f32 %v3902, %v4041
        %v4043 = vpop.f32.mrb[0].mxu0
        %v4044 = vadd.f32 %v3906, %v4043
        %4045 = vmatprep.mubr.f32.mxu0 %v3824
        %4046 = vmatmul.mubr.f32.gmra.mrb[0].mxu0 %v3823
        %v4047 = vpop.f32.mrb[0].mxu0
        %v4048 = vadd.f32 %v3902, %v4047
        %v4049 = vpop.f32.mrb[0].mxu0
        %v4050 = vadd.f32 %v3906, %v4049
        %4051 = vmatprep.mubr.f32.mxu0 %v3826
        %4052 = vmatmul.mubr.f32.gmra.mrb[0].mxu0 %v3825
        %v4053 = vpop.f32.mrb[0].mxu0
        %v4054 = vadd.f32 %v3902, %v4053
        %v4055 = vpop.f32.mrb[0].mxu0
        %v4056 = vadd.f32 %v3906, %v4055
        %4057 = vmatprep.mubr.f32.mxu0 %v3828
        %4058 = vmatmul.mubr.f32.gmra.mrb[0].mxu0 %v3827
        %v4059 = vpop.f32.mrb[0].mxu0
        %v4060 = vadd.f32 %v3902, %v4059
        %v4061 = vpop.f32.mrb[0].mxu0
        %v4062 = vadd.f32 %v3906, %v4061
        %4063 = vmatprep.mubr.f32.mxu0 %v3830
        %4064 = vmatmul.mubr.f32.gmra.mrb[0].mxu0 %v3829
        %v4065 = vpop.f32.mrb[0].mxu0
        %v4066 = vadd.f32 %v3902, %v4065
        %v4067 = vpop.f32.mrb[0].mxu0
        %v4068 = vadd.f32 %v3906, %v4067
        %4069 = vdwg.mxu0
        %vm4070 = vcmp.gt.f32.partialorder %v3976, 0.0
        %vm4071 = vcmp.gt.f32.partialorder %v3978, 0.0
        %vm4072 = vcmp.gt.f32.partialorder %v3982, 0.0
        %vm4073 = vcmp.gt.f32.partialorder %v3984, 0.0
        %vm4074 = vcmp.gt.f32.partialorder %v3988, 0.0
        %vm4075 = vcmp.gt.f32.partialorder %v3990, 0.0
        %vm4076 = vcmp.gt.f32.partialorder %v3994, 0.0
        %vm4077 = vcmp.gt.f32.partialorder %v3996, 0.0
        %vm4078 = vcmp.gt.f32.partialorder %v4000, 0.0
        %vm4079 = vcmp.gt.f32.partialorder %v4002, 0.0
        %vm4080 = vcmp.gt.f32.partialorder %v4006, 0.0
        %vm4081 = vcmp.gt.f32.partialorder %v4008, 0.0
        %vm4082 = vcmp.gt.f32.partialorder %v4012, 0.0
        %vm4083 = vcmp.gt.f32.partialorder %v4014, 0.0
        %vm4084 = vcmp.gt.f32.partialorder %v4018, 0.0
        %vm4085 = vcmp.gt.f32.partialorder %v4020, 0.0
        %vm4086 = vcmp.gt.f32.partialorder %v4024, 0.0
        %vm4087 = vcmp.gt.f32.partialorder %v4026, 0.0
        %vm4088 = vcmp.gt.f32.partialorder %v4030, 0.0
        %vm4089 = vcmp.gt.f32.partialorder %v4032, 0.0
        %vm4090 = vcmp.gt.f32.partialorder %v4036, 0.0
        %vm4091 = vcmp.gt.f32.partialorder %v4038, 0.0
        %vm4092 = vcmp.gt.f32.partialorder %v4042, 0.0
        %vm4093 = vcmp.gt.f32.partialorder %v4044, 0.0
        %vm4094 = vcmp.gt.f32.partialorder %v4048, 0.0
        %vm4095 = vcmp.gt.f32.partialorder %v4050, 0.0
        %vm4096 = vcmp.gt.f32.partialorder %v4054, 0.0
        %vm4097 = vcmp.gt.f32.partialorder %v4056, 0.0
        %vm4098 = vcmp.gt.f32.partialorder %v4060, 0.0
        %vm4099 = vcmp.gt.f32.partialorder %v4062, 0.0
        %vm4100 = vcmp.gt.f32.partialorder %v4066, 0.0
        %vm4101 = vcmp.gt.f32.partialorder %v4068, 0.0
        %v4102 = vmul.f32 %v3976, 0.01
        %v4103 = vmul.f32 %v3978, 0.01
        %v4104 = vmul.f32 %v3982, 0.01
        %v4105 = vmul.f32 %v3984, 0.01
        %v4106 = vmul.f32 %v3988, 0.01
        %v4107 = vmul.f32 %v3990, 0.01
        %v4108 = vmul.f32 %v3994, 0.01
        %v4109 = vmul.f32 %v3996, 0.01
        %v4110 = vmul.f32 %v4000, 0.01
        %v4111 = vmul.f32 %v4002, 0.01
        %v4112 = vmul.f32 %v4006, 0.01
        %v4113 = vmul.f32 %v4008, 0.01
        %v4114 = vmul.f32 %v4012, 0.01
        %v4115 = vmul.f32 %v4014, 0.01
        %v4116 = vmul.f32 %v4018, 0.01
        %v4117 = vmul.f32 %v4020, 0.01
        %v4118 = vmul.f32 %v4024, 0.01
        %v4119 = vmul.f32 %v4026, 0.01
        %v4120 = vmul.f32 %v4030, 0.01
        %v4121 = vmul.f32 %v4032, 0.01
        %v4122 = vmul.f32 %v4036, 0.01
        %v4123 = vmul.f32 %v4038, 0.01
        %v4124 = vmul.f32 %v4042, 0.01
        %v4125 = vmul.f32 %v4044, 0.01
        %v4126 = vmul.f32 %v4048, 0.01
        %v4127 = vmul.f32 %v4050, 0.01
        %v4128 = vmul.f32 %v4054, 0.01
        %v4129 = vmul.f32 %v4056, 0.01
        %v4130 = vmul.f32 %v4060, 0.01
        %v4131 = vmul.f32 %v4062, 0.01
        %v4132 = vmul.f32 %v4066, 0.01
        %v4133 = vmul.f32 %v4068, 0.01
        %v4134 = vsel %vm4070, %v3976, %v4102
        %v4135 = vsel %vm4071, %v3978, %v4103
        %v4136 = vsel %vm4072, %v3982, %v4104
        %v4137 = vsel %vm4073, %v3984, %v4105
        %v4138 = vsel %vm4074, %v3988, %v4106
        %v4139 = vsel %vm4075, %v3990, %v4107
        %v4140 = vsel %vm4076, %v3994, %v4108
        %v4141 = vsel %vm4077, %v3996, %v4109
        %v4142 = vsel %vm4078, %v4000, %v4110
        %v4143 = vsel %vm4079, %v4002, %v4111
        %v4144 = vsel %vm4080, %v4006, %v4112
        %v4145 = vsel %vm4081, %v4008, %v4113
        %v4146 = vsel %vm4082, %v4012, %v4114
        %v4147 = vsel %vm4083, %v4014, %v4115
        %v4148 = vsel %vm4084, %v4018, %v4116
        %v4149 = vsel %vm4085, %v4020, %v4117
        %v4150 = vsel %vm4086, %v4024, %v4118
        %v4151 = vsel %vm4087, %v4026, %v4119
        %v4152 = vsel %vm4088, %v4030, %v4120
        %v4153 = vsel %vm4089, %v4032, %v4121
        %v4154 = vsel %vm4090, %v4036, %v4122
        %v4155 = vsel %vm4091, %v4038, %v4123
        %v4156 = vsel %vm4092, %v4042, %v4124
        %v4157 = vsel %vm4093, %v4044, %v4125
        %v4158 = vsel %vm4094, %v4048, %v4126
        %v4159 = vsel %vm4095, %v4050, %v4127
        %v4160 = vsel %vm4096, %v4054, %v4128
        %v4161 = vsel %vm4097, %v4056, %v4129
        %v4162 = vsel %vm4098, %v4060, %v4130
        %v4163 = vsel %vm4099, %v4062, %v4131
        %v4164 = vsel %vm4100, %v4066, %v4132
        %v4165 = vsel %vm4101, %v4068, %v4133
        %s4166 = scalar_lea.vmem %s4, 768
        %v4167 = vld [vmem:[%s4166] sm:$0xff]
        %v4168 = vld [vmem:[%s4166 + $0x8] sm:$0xff]
        %v4169 = vld [vmem:[%s4166 + $0x10] sm:$0xff]
        %v4170 = vld [vmem:[%s4166 + $0x18] sm:$0xff]
        %v4171 = vld [vmem:[%s4166 + $0x20] sm:$0xff]
        %v4172 = vld [vmem:[%s4166 + $0x28] sm:$0xff]
        %v4173 = vld [vmem:[%s4166 + $0x30] sm:$0xff]
        %v4174 = vld [vmem:[%s4166 + $0x38] sm:$0xff]
        %v4175 = vld [vmem:[%s4166 + $0x40] sm:$0xff]
        %v4176 = vld [vmem:[%s4166 + $0x48] sm:$0xff]
        %v4177 = vld [vmem:[%s4166 + $0x50] sm:$0xff]
        %v4178 = vld [vmem:[%s4166 + $0x58] sm:$0xff]
        %v4179 = vld [vmem:[%s4166 + $0x60] sm:$0xff]
        %v4180 = vld [vmem:[%s4166 + $0x68] sm:$0xff]
        %v4181 = vld [vmem:[%s4166 + $0x70] sm:$0xff]
        %v4182 = vld [vmem:[%s4166 + $0x78] sm:$0xff]
        %v4183 = vld [vmem:[%s4166 + $0x80] sm:$0xff]
        %v4184 = vld [vmem:[%s4166 + $0x88] sm:$0xff]
        %v4185 = vld [vmem:[%s4166 + $0x90] sm:$0xff]
        %v4186 = vld [vmem:[%s4166 + $0x98] sm:$0xff]
        %v4187 = vld [vmem:[%s4166 + $0xa0] sm:$0xff]
        %v4188 = vld [vmem:[%s4166 + $0xa8] sm:$0xff]
        %v4189 = vld [vmem:[%s4166 + $0xb0] sm:$0xff]
        %v4190 = vld [vmem:[%s4166 + $0xb8] sm:$0xff]
        %v4191 = vld [vmem:[%s4166 + $0xc0] sm:$0xff]
        %v4192 = vld [vmem:[%s4166 + $0xc8] sm:$0xff]
        %v4193 = vld [vmem:[%s4166 + $0xd0] sm:$0xff]
        %v4194 = vld [vmem:[%s4166 + $0xd8] sm:$0xff]
        %v4195 = vld [vmem:[%s4166 + $0xe0] sm:$0xff]
        %v4196 = vld [vmem:[%s4166 + $0xe8] sm:$0xff]
        %v4197 = vld [vmem:[%s4166 + $0xf0] sm:$0xff]
        %v4198 = vld [vmem:[%s4166 + $0xf8] sm:$0xff]
        %s4199 = scalar_lea.vmem %s5, 3
        %v4200 = vld [vmem:[%s4199] sm:$0x1]
        %v4202 = vlaneseq
        %v4203 = vshrl.u32 %v4202, 7
        %v4204 = vsub.s32 0, %v4203
        %v4205 = vrot.slane %v4200, %v4204
        %4207 = vmatprep.subr.mxu0 0.0
        %4208 = vmatpush1.msra.mxu0 %v4167
        %4209 = vmatprep.subr.mxu0 0.0
        %4210 = vmatpush1.msra.mxu0 %v4168
        %4211 = vmatprep.subr.mxu0 0.0
        %4212 = vmatpush1.msra.mxu0 %v4169
        %4213 = vmatprep.subr.mxu0 0.0
        %4214 = vmatpush1.msra.mxu0 %v4170
        %4215 = vmatprep.subr.mxu0 0.0
        %4216 = vmatpush1.msra.mxu0 %v4171
        %4217 = vmatprep.subr.mxu0 0.0
        %4218 = vmatpush1.msra.mxu0 %v4172
        %4219 = vmatprep.subr.mxu0 0.0
        %4220 = vmatpush1.msra.mxu0 %v4173
        %4221 = vmatprep.subr.mxu0 0.0
        %4222 = vmatpush1.msra.mxu0 %v4174
        %4223 = vmatprep.subr.mxu0 0.0
        %4224 = vmatpush1.msra.mxu0 %v4175
        %4225 = vmatprep.subr.mxu0 0.0
        %4226 = vmatpush1.msra.mxu0 %v4176
        %4227 = vmatprep.subr.mxu0 0.0
        %4228 = vmatpush1.msra.mxu0 %v4177
        %4229 = vmatprep.subr.mxu0 0.0
        %4230 = vmatpush1.msra.mxu0 %v4178
        %4231 = vmatprep.subr.mxu0 0.0
        %4232 = vmatpush1.msra.mxu0 %v4179
        %4233 = vmatprep.subr.mxu0 0.0
        %4234 = vmatpush1.msra.mxu0 %v4180
        %4235 = vmatprep.subr.mxu0 0.0
        %4236 = vmatpush1.msra.mxu0 %v4181
        %4237 = vmatprep.subr.mxu0 0.0
        %4238 = vmatpush1.msra.mxu0 %v4182
        %4239 = vmatprep.subr.mxu0 0.0
        %4240 = vmatpush1.msra.mxu0 %v4183
        %4241 = vmatprep.subr.mxu0 0.0
        %4242 = vmatpush1.msra.mxu0 %v4184
        %4243 = vmatprep.subr.mxu0 0.0
        %4244 = vmatpush1.msra.mxu0 %v4185
        %4245 = vmatprep.subr.mxu0 0.0
        %4246 = vmatpush1.msra.mxu0 %v4186
        %4247 = vmatprep.subr.mxu0 0.0
        %4248 = vmatpush1.msra.mxu0 %v4187
        %4249 = vmatprep.subr.mxu0 0.0
        %4250 = vmatpush1.msra.mxu0 %v4188
        %4251 = vmatprep.subr.mxu0 0.0
        %4252 = vmatpush1.msra.mxu0 %v4189
        %4253 = vmatprep.subr.mxu0 0.0
        %4254 = vmatpush1.msra.mxu0 %v4190
        %4255 = vmatprep.subr.mxu0 0.0
        %4256 = vmatpush1.msra.mxu0 %v4191
        %4257 = vmatprep.subr.mxu0 0.0
        %4258 = vmatpush1.msra.mxu0 %v4192
        %4259 = vmatprep.subr.mxu0 0.0
        %4260 = vmatpush1.msra.mxu0 %v4193
        %4261 = vmatprep.subr.mxu0 0.0
        %4262 = vmatpush1.msra.mxu0 %v4194
        %4263 = vmatprep.subr.mxu0 0.0
        %4264 = vmatpush1.msra.mxu0 %v4195
        %4265 = vmatprep.subr.mxu0 0.0
        %4266 = vmatpush1.msra.mxu0 %v4196
        %4267 = vmatprep.subr.mxu0 0.0
        %4268 = vmatpush1.msra.mxu0 %v4197
        %4269 = vmatprep.subr.mxu0 0.0
        %4270 = vmatpush1.msra.mxu0 %v4198
        %4271 = vmatprep.mubr.f32.mxu0 %v4135
        %4272 = vmatmul.mubr.f32.gmra.mrb[0].mxu0 %v4134
        %v4273 = vpop.f32.mrb[0].mxu0
        %v4274 = vadd.f32 %v4205, %v4273
        %v4275 = vpop.f32.mrb[0].mxu0
        %4276 = vmatprep.mubr.f32.mxu0 %v4137
        %4277 = vmatmul.mubr.f32.gmra.mrb[0].mxu0 %v4136
        %v4278 = vpop.f32.mrb[0].mxu0
        %v4279 = vadd.f32 %v4205, %v4278
        %v4280 = vpop.f32.mrb[0].mxu0
        %4281 = vmatprep.mubr.f32.mxu0 %v4139
        %4282 = vmatmul.mubr.f32.gmra.mrb[0].mxu0 %v4138
        %v4283 = vpop.f32.mrb[0].mxu0
        %v4284 = vadd.f32 %v4205, %v4283
        %v4285 = vpop.f32.mrb[0].mxu0
        %4286 = vmatprep.mubr.f32.mxu0 %v4141
        %4287 = vmatmul.mubr.f32.gmra.mrb[0].mxu0 %v4140
        %v4288 = vpop.f32.mrb[0].mxu0
        %v4289 = vadd.f32 %v4205, %v4288
        %v4290 = vpop.f32.mrb[0].mxu0
        %4291 = vmatprep.mubr.f32.mxu0 %v4143
        %4292 = vmatmul.mubr.f32.gmra.mrb[0].mxu0 %v4142
        %v4293 = vpop.f32.mrb[0].mxu0
        %v4294 = vadd.f32 %v4205, %v4293
        %v4295 = vpop.f32.mrb[0].mxu0
        %4296 = vmatprep.mubr.f32.mxu0 %v4145
        %4297 = vmatmul.mubr.f32.gmra.mrb[0].mxu0 %v4144
        %v4298 = vpop.f32.mrb[0].mxu0
        %v4299 = vadd.f32 %v4205, %v4298
        %v4300 = vpop.f32.mrb[0].mxu0
        %4301 = vmatprep.mubr.f32.mxu0 %v4147
        %4302 = vmatmul.mubr.f32.gmra.mrb[0].mxu0 %v4146
        %v4303 = vpop.f32.mrb[0].mxu0
        %v4304 = vadd.f32 %v4205, %v4303
        %v4305 = vpop.f32.mrb[0].mxu0
        %4306 = vmatprep.mubr.f32.mxu0 %v4149
        %4307 = vmatmul.mubr.f32.gmra.mrb[0].mxu0 %v4148
        %v4308 = vpop.f32.mrb[0].mxu0
        %v4309 = vadd.f32 %v4205, %v4308
        %v4310 = vpop.f32.mrb[0].mxu0
        %4311 = vmatprep.mubr.f32.mxu0 %v4151
        %4312 = vmatmul.mubr.f32.gmra.mrb[0].mxu0 %v4150
        %v4313 = vpop.f32.mrb[0].mxu0
        %v4314 = vadd.f32 %v4205, %v4313
        %v4315 = vpop.f32.mrb[0].mxu0
        %4316 = vmatprep.mubr.f32.mxu0 %v4153
        %4317 = vmatmul.mubr.f32.gmra.mrb[0].mxu0 %v4152
        %v4318 = vpop.f32.mrb[0].mxu0
        %v4319 = vadd.f32 %v4205, %v4318
        %v4320 = vpop.f32.mrb[0].mxu0
        %4321 = vmatprep.mubr.f32.mxu0 %v4155
        %4322 = vmatmul.mubr.f32.gmra.mrb[0].mxu0 %v4154
        %v4323 = vpop.f32.mrb[0].mxu0
        %v4324 = vadd.f32 %v4205, %v4323
        %v4325 = vpop.f32.mrb[0].mxu0
        %4326 = vmatprep.mubr.f32.mxu0 %v4157
        %4327 = vmatmul.mubr.f32.gmra.mrb[0].mxu0 %v4156
        %v4328 = vpop.f32.mrb[0].mxu0
        %v4329 = vadd.f32 %v4205, %v4328
        %v4330 = vpop.f32.mrb[0].mxu0
        %4331 = vmatprep.mubr.f32.mxu0 %v4159
        %4332 = vmatmul.mubr.f32.gmra.mrb[0].mxu0 %v4158
        %v4333 = vpop.f32.mrb[0].mxu0
        %v4334 = vadd.f32 %v4205, %v4333
        %v4335 = vpop.f32.mrb[0].mxu0
        %4336 = vmatprep.mubr.f32.mxu0 %v4161
        %4337 = vmatmul.mubr.f32.gmra.mrb[0].mxu0 %v4160
        %v4338 = vpop.f32.mrb[0].mxu0
        %v4339 = vadd.f32 %v4205, %v4338
        %v4340 = vpop.f32.mrb[0].mxu0
        %4341 = vmatprep.mubr.f32.mxu0 %v4163
        %4342 = vmatmul.mubr.f32.gmra.mrb[0].mxu0 %v4162
        %v4343 = vpop.f32.mrb[0].mxu0
        %v4344 = vadd.f32 %v4205, %v4343
        %v4345 = vpop.f32.mrb[0].mxu0
        %4346 = vmatprep.mubr.f32.mxu0 %v4165
        %4347 = vmatmul.mubr.f32.gmra.mrb[0].mxu0 %v4164
        %v4348 = vpop.f32.mrb[0].mxu0
        %v4349 = vadd.f32 %v4205, %v4348
        %v4350 = vpop.f32.mrb[0].mxu0
        %4351 = vdwg.mxu0
        %v4352 = vtanh.pop %v4274
        %v4353 = vtanh.pop %v4279
        %v4354 = vtanh.pop %v4284
        %v4355 = vtanh.pop %v4289
        %v4356 = vtanh.pop %v4294
        %v4357 = vtanh.pop %v4299
        %v4358 = vtanh.pop %v4304
        %v4359 = vtanh.pop %v4309
        %v4360 = vtanh.pop %v4314
        %v4361 = vtanh.pop %v4319
        %v4362 = vtanh.pop %v4324
        %v4363 = vtanh.pop %v4329
        %v4364 = vtanh.pop %v4334
        %v4365 = vtanh.pop %v4339
        %v4366 = vtanh.pop %v4344
        %v4367 = vtanh.pop %v4349
        %4384 = vrot.lane.b32.xlu0 %v4274, 127
        %v4385 = vpop.permute.xlu0 %4384
        %4386 = vrot.lane.b32.xlu0 %v4279, 127
        %v4387 = vpop.permute.xlu0 %4386
        %4388 = vrot.lane.b32.xlu0 %v4284, 127
        %v4389 = vpop.permute.xlu0 %4388
        %4390 = vrot.lane.b32.xlu0 %v4289, 127
        %v4391 = vpop.permute.xlu0 %4390
        %4392 = vrot.lane.b32.xlu0 %v4294, 127
        %v4393 = vpop.permute.xlu0 %4392
        %4394 = vrot.lane.b32.xlu0 %v4299, 127
        %v4395 = vpop.permute.xlu0 %4394
        %4396 = vrot.lane.b32.xlu0 %v4304, 127
        %v4397 = vpop.permute.xlu0 %4396
        %4398 = vrot.lane.b32.xlu0 %v4309, 127
        %v4399 = vpop.permute.xlu0 %4398
        %4400 = vrot.lane.b32.xlu0 %v4314, 127
        %v4401 = vpop.permute.xlu0 %4400
        %4402 = vrot.lane.b32.xlu0 %v4319, 127
        %v4403 = vpop.permute.xlu0 %4402
        %4404 = vrot.lane.b32.xlu0 %v4324, 127
        %v4405 = vpop.permute.xlu0 %4404
        %4406 = vrot.lane.b32.xlu0 %v4329, 127
        %v4407 = vpop.permute.xlu0 %4406
        %4408 = vrot.lane.b32.xlu0 %v4334, 127
        %v4409 = vpop.permute.xlu0 %4408
        %4410 = vrot.lane.b32.xlu0 %v4339, 127
        %v4411 = vpop.permute.xlu0 %4410
        %4412 = vrot.lane.b32.xlu0 %v4344, 127
        %v4413 = vpop.permute.xlu0 %4412
        %4414 = vrot.lane.b32.xlu0 %v4349, 127
        %v4415 = vpop.permute.xlu0 %4414
        %v4432 = vsub.f32 %v2366, %v4385
        %v4433 = vsub.f32 %v2367, %v4387
        %v4434 = vsub.f32 %v2368, %v4389
        %v4435 = vsub.f32 %v2369, %v4391
        %v4436 = vsub.f32 %v2370, %v4393
        %v4437 = vsub.f32 %v2371, %v4395
        %v4438 = vsub.f32 %v2372, %v4397
        %v4439 = vsub.f32 %v2373, %v4399
        %v4440 = vsub.f32 %v2374, %v4401
        %v4441 = vsub.f32 %v2375, %v4403
        %v4442 = vsub.f32 %v2376, %v4405
        %v4443 = vsub.f32 %v2377, %v4407
        %v4444 = vsub.f32 %v2378, %v4409
        %v4445 = vsub.f32 %v2379, %v4411
        %v4446 = vsub.f32 %v2380, %v4413
        %v4447 = vsub.f32 %v2381, %v4415
        %v4448 = vsub.f32 0.0, %v4352
        %v4449 = vsub.f32 0.0, %v4353
        %v4450 = vsub.f32 0.0, %v4354
        %v4451 = vsub.f32 0.0, %v4355
        %v4452 = vsub.f32 0.0, %v4356
        %v4453 = vsub.f32 0.0, %v4357
        %v4454 = vsub.f32 0.0, %v4358
        %v4455 = vsub.f32 0.0, %v4359
        %v4456 = vsub.f32 0.0, %v4360
        %v4457 = vsub.f32 0.0, %v4361
        %v4458 = vsub.f32 0.0, %v4362
        %v4459 = vsub.f32 0.0, %v4363
        %v4460 = vsub.f32 0.0, %v4364
        %v4461 = vsub.f32 0.0, %v4365
        %v4462 = vsub.f32 0.0, %v4366
        %v4463 = vsub.f32 0.0, %v4367
        %v4464 = vmul.f32 %v4448, 1.442695
        %v4465 = vpow.pop %v4464
        %v4466 = vmul.f32 %v4449, 1.442695
        %v4467 = vpow.pop %v4466
        %v4468 = vmul.f32 %v4450, 1.442695
        %v4469 = vpow.pop %v4468
        %v4470 = vmul.f32 %v4451, 1.442695
        %v4471 = vpow.pop %v4470
        %v4472 = vmul.f32 %v4452, 1.442695
        %v4473 = vpow.pop %v4472
        %v4474 = vmul.f32 %v4453, 1.442695
        %v4475 = vpow.pop %v4474
        %v4476 = vmul.f32 %v4454, 1.442695
        %v4477 = vpow.pop %v4476
        %v4478 = vmul.f32 %v4455, 1.442695
        %v4479 = vpow.pop %v4478
        %v4480 = vmul.f32 %v4456, 1.442695
        %v4481 = vpow.pop %v4480
        %v4482 = vmul.f32 %v4457, 1.442695
        %v4483 = vpow.pop %v4482
        %v4484 = vmul.f32 %v4458, 1.442695
        %v4485 = vpow.pop %v4484
        %v4486 = vmul.f32 %v4459, 1.442695
        %v4487 = vpow.pop %v4486
        %v4488 = vmul.f32 %v4460, 1.442695
        %v4489 = vpow.pop %v4488
        %v4490 = vmul.f32 %v4461, 1.442695
        %v4491 = vpow.pop %v4490
        %v4492 = vmul.f32 %v4462, 1.442695
        %v4493 = vpow.pop %v4492
        %v4494 = vmul.f32 %v4463, 1.442695
        %v4495 = vpow.pop %v4494
        %v4496 = vmul.f32 %v4432, %v4465
        %v4497 = vmul.f32 %v4433, %v4467
        %v4498 = vmul.f32 %v4434, %v4469
        %v4499 = vmul.f32 %v4435, %v4471
        %v4500 = vmul.f32 %v4436, %v4473
        %v4501 = vmul.f32 %v4437, %v4475
        %v4502 = vmul.f32 %v4438, %v4477
        %v4503 = vmul.f32 %v4439, %v4479
        %v4504 = vmul.f32 %v4440, %v4481
        %v4505 = vmul.f32 %v4441, %v4483
        %v4506 = vmul.f32 %v4442, %v4485
        %v4507 = vmul.f32 %v4443, %v4487
        %v4508 = vmul.f32 %v4444, %v4489
        %v4509 = vmul.f32 %v4445, %v4491
        %v4510 = vmul.f32 %v4446, %v4493
        %v4511 = vmul.f32 %v4447, %v4495
        %v4512 = vsub.f32 %v3415, %v4352
        %v4513 = vsub.f32 %v3416, %v4353
        %v4514 = vsub.f32 %v3417, %v4354
        %v4515 = vsub.f32 %v3418, %v4355
        %v4516 = vsub.f32 %v3419, %v4356
        %v4517 = vsub.f32 %v3420, %v4357
        %v4518 = vsub.f32 %v3421, %v4358
        %v4519 = vsub.f32 %v3422, %v4359
        %v4520 = vsub.f32 %v3423, %v4360
        %v4521 = vsub.f32 %v3424, %v4361
        %v4522 = vsub.f32 %v3425, %v4362
        %v4523 = vsub.f32 %v3426, %v4363
        %v4524 = vsub.f32 %v3427, %v4364
        %v4525 = vsub.f32 %v3428, %v4365
        %v4526 = vsub.f32 %v3429, %v4366
        %v4527 = vsub.f32 %v3430, %v4367
        %v4528 = vmul.f32 %v4496, %v4496
        %v4529 = vmul.f32 %v4497, %v4497
        %v4530 = vmul.f32 %v4498, %v4498
        %v4531 = vmul.f32 %v4499, %v4499
        %v4532 = vmul.f32 %v4500, %v4500
        %v4533 = vmul.f32 %v4501, %v4501
        %v4534 = vmul.f32 %v4502, %v4502
        %v4535 = vmul.f32 %v4503, %v4503
        %v4536 = vmul.f32 %v4504, %v4504
        %v4537 = vmul.f32 %v4505, %v4505
        %v4538 = vmul.f32 %v4506, %v4506
        %v4539 = vmul.f32 %v4507, %v4507
        %v4540 = vmul.f32 %v4508, %v4508
        %v4541 = vmul.f32 %v4509, %v4509
        %v4542 = vmul.f32 %v4510, %v4510
        %v4543 = vmul.f32 %v4511, %v4511
        %v4544 = vmul.f32 %v3399, %v3399
        %v4545 = vmul.f32 %v3400, %v3400
        %v4546 = vmul.f32 %v3401, %v3401
        %v4547 = vmul.f32 %v3402, %v3402
        %v4548 = vmul.f32 %v3403, %v3403
        %v4549 = vmul.f32 %v3404, %v3404
        %v4550 = vmul.f32 %v3405, %v3405
        %v4551 = vmul.f32 %v3406, %v3406
        %v4552 = vmul.f32 %v3407, %v3407
        %v4553 = vmul.f32 %v3408, %v3408
        %v4554 = vmul.f32 %v3409, %v3409
        %v4555 = vmul.f32 %v3410, %v3410
        %v4556 = vmul.f32 %v3411, %v3411
        %v4557 = vmul.f32 %v3412, %v3412
        %v4558 = vmul.f32 %v3413, %v3413
        %v4559 = vmul.f32 %v3414, %v3414
        %4576 = vrot.lane.b32.xlu0 %v4544, 127
        %v4577 = vpop.permute.xlu0 %4576
        %4578 = vrot.lane.b32.xlu0 %v4545, 127
        %v4579 = vpop.permute.xlu0 %4578
        %4580 = vrot.lane.b32.xlu0 %v4546, 127
        %v4581 = vpop.permute.xlu0 %4580
        %4582 = vrot.lane.b32.xlu0 %v4547, 127
        %v4583 = vpop.permute.xlu0 %4582
        %4584 = vrot.lane.b32.xlu0 %v4548, 127
        %v4585 = vpop.permute.xlu0 %4584
        %4586 = vrot.lane.b32.xlu0 %v4549, 127
        %v4587 = vpop.permute.xlu0 %4586
        %4588 = vrot.lane.b32.xlu0 %v4550, 127
        %v4589 = vpop.permute.xlu0 %4588
        %4590 = vrot.lane.b32.xlu0 %v4551, 127
        %v4591 = vpop.permute.xlu0 %4590
        %4592 = vrot.lane.b32.xlu0 %v4552, 127
        %v4593 = vpop.permute.xlu0 %4592
        %4594 = vrot.lane.b32.xlu0 %v4553, 127
        %v4595 = vpop.permute.xlu0 %4594
        %4596 = vrot.lane.b32.xlu0 %v4554, 127
        %v4597 = vpop.permute.xlu0 %4596
        %4598 = vrot.lane.b32.xlu0 %v4555, 127
        %v4599 = vpop.permute.xlu0 %4598
        %4600 = vrot.lane.b32.xlu0 %v4556, 127
        %v4601 = vpop.permute.xlu0 %4600
        %4602 = vrot.lane.b32.xlu0 %v4557, 127
        %v4603 = vpop.permute.xlu0 %4602
        %4604 = vrot.lane.b32.xlu0 %v4558, 127
        %v4605 = vpop.permute.xlu0 %4604
        %4606 = vrot.lane.b32.xlu0 %v4559, 127
        %v4607 = vpop.permute.xlu0 %4606
        %v4624 = vadd.f32 %v4528, %v4577
        %v4625 = vadd.f32 %v4529, %v4579
        %v4626 = vadd.f32 %v4530, %v4581
        %v4627 = vadd.f32 %v4531, %v4583
        %v4628 = vadd.f32 %v4532, %v4585
        %v4629 = vadd.f32 %v4533, %v4587
        %v4630 = vadd.f32 %v4534, %v4589
        %v4631 = vadd.f32 %v4535, %v4591
        %v4632 = vadd.f32 %v4536, %v4593
        %v4633 = vadd.f32 %v4537, %v4595
        %v4634 = vadd.f32 %v4538, %v4597
        %v4635 = vadd.f32 %v4539, %v4599
        %v4636 = vadd.f32 %v4540, %v4601
        %v4637 = vadd.f32 %v4541, %v4603
        %v4638 = vadd.f32 %v4542, %v4605
        %v4639 = vadd.f32 %v4543, %v4607
        %v4640 = vmul.f32 %v4624, -0.5
        %v4641 = vmul.f32 %v4625, -0.5
        %v4642 = vmul.f32 %v4626, -0.5
        %v4643 = vmul.f32 %v4627, -0.5
        %v4644 = vmul.f32 %v4628, -0.5
        %v4645 = vmul.f32 %v4629, -0.5
        %v4646 = vmul.f32 %v4630, -0.5
        %v4647 = vmul.f32 %v4631, -0.5
        %v4648 = vmul.f32 %v4632, -0.5
        %v4649 = vmul.f32 %v4633, -0.5
        %v4650 = vmul.f32 %v4634, -0.5
        %v4651 = vmul.f32 %v4635, -0.5
        %v4652 = vmul.f32 %v4636, -0.5
        %v4653 = vmul.f32 %v4637, -0.5
        %v4654 = vmul.f32 %v4638, -0.5
        %v4655 = vmul.f32 %v4639, -0.5
        %v4656 = vsub.f32 %v4640, 1.837877
        %v4657 = vsub.f32 %v4641, 1.837877
        %v4658 = vsub.f32 %v4642, 1.837877
        %v4659 = vsub.f32 %v4643, 1.837877
        %v4660 = vsub.f32 %v4644, 1.837877
        %v4661 = vsub.f32 %v4645, 1.837877
        %v4662 = vsub.f32 %v4646, 1.837877
        %v4663 = vsub.f32 %v4647, 1.837877
        %v4664 = vsub.f32 %v4648, 1.837877
        %v4665 = vsub.f32 %v4649, 1.837877
        %v4666 = vsub.f32 %v4650, 1.837877
        %v4667 = vsub.f32 %v4651, 1.837877
        %v4668 = vsub.f32 %v4652, 1.837877
        %v4669 = vsub.f32 %v4653, 1.837877
        %v4670 = vsub.f32 %v4654, 1.837877
        %v4671 = vsub.f32 %v4655, 1.837877
        %v4672 = vadd.f32 %v4656, %v4512
        %v4673 = vadd.f32 %v4657, %v4513
        %v4674 = vadd.f32 %v4658, %v4514
        %v4675 = vadd.f32 %v4659, %v4515
        %v4676 = vadd.f32 %v4660, %v4516
        %v4677 = vadd.f32 %v4661, %v4517
        %v4678 = vadd.f32 %v4662, %v4518
        %v4679 = vadd.f32 %v4663, %v4519
        %v4680 = vadd.f32 %v4664, %v4520
        %v4681 = vadd.f32 %v4665, %v4521
        %v4682 = vadd.f32 %v4666, %v4522
        %v4683 = vadd.f32 %v4667, %v4523
        %v4684 = vadd.f32 %v4668, %v4524
        %v4685 = vadd.f32 %v4669, %v4525
        %v4686 = vadd.f32 %v4670, %v4526
        %v4687 = vadd.f32 %v4671, %v4527
        %v4688 = vsub.f32 0.0, %v4672
        %v4689 = vsub.f32 0.0, %v4673
        %v4690 = vsub.f32 0.0, %v4674
        %v4691 = vsub.f32 0.0, %v4675
        %v4692 = vsub.f32 0.0, %v4676
        %v4693 = vsub.f32 0.0, %v4677
        %v4694 = vsub.f32 0.0, %v4678
        %v4695 = vsub.f32 0.0, %v4679
        %v4696 = vsub.f32 0.0, %v4680
        %v4697 = vsub.f32 0.0, %v4681
        %v4698 = vsub.f32 0.0, %v4682
        %v4699 = vsub.f32 0.0, %v4683
        %v4700 = vsub.f32 0.0, %v4684
        %v4701 = vsub.f32 0.0, %v4685
        %v4702 = vsub.f32 0.0, %v4686
        %v4703 = vsub.f32 0.0, %v4687
        %4704 = vst.msk [vmem:[%s268] sm:$0xff] %vm286, %v4688
        %4705 = vst.msk [vmem:[%s268 + $0x8] sm:$0xff] %vm286, %v4689
        %4706 = vst.msk [vmem:[%s268 + $0x10] sm:$0xff] %vm286, %v4690
        %4707 = vst.msk [vmem:[%s268 + $0x18] sm:$0xff] %vm286, %v4691
        %4708 = vst.msk [vmem:[%s268 + $0x20] sm:$0xff] %vm286, %v4692
        %4709 = vst.msk [vmem:[%s268 + $0x28] sm:$0xff] %vm286, %v4693
        %4710 = vst.msk [vmem:[%s268 + $0x30] sm:$0xff] %vm286, %v4694
        %4711 = vst.msk [vmem:[%s268 + $0x38] sm:$0xff] %vm286, %v4695
        %4712 = vst.msk [vmem:[%s268 + $0x40] sm:$0xff] %vm286, %v4696
        %4713 = vst.msk [vmem:[%s268 + $0x48] sm:$0xff] %vm286, %v4697
        %4714 = vst.msk [vmem:[%s268 + $0x50] sm:$0xff] %vm286, %v4698
        %4715 = vst.msk [vmem:[%s268 + $0x58] sm:$0xff] %vm286, %v4699
        %4716 = vst.msk [vmem:[%s268 + $0x60] sm:$0xff] %vm286, %v4700
        %4717 = vst.msk [vmem:[%s268 + $0x68] sm:$0xff] %vm286, %v4701
        %4718 = vst.msk [vmem:[%s268 + $0x70] sm:$0xff] %vm286, %v4702
        %4719 = vst.msk [vmem:[%s268 + $0x78] sm:$0xff] %vm286, %v4703
        %s4720 = smul.u32 16, %s18
        %p4721 = scmp.lt.s32.totalorder %s4720, 31
        %s4722 = scalar_select %p4721, %s4720, 31
        %s4723 = smul.addr %s4722, 8
        %s4724 = scalar_lea.vmem %s6, %s4723
        // Predicated region
        $region49: #{tpu_custom_call.1} parent=43 // pred_check
          %p4725 = pneg %p167
        $region50: #{tpu_custom_call.1} parent=43 // pred_check_branch
          %4727 = sbr.rel (%p4725) target = $region52
        $region51: #{tpu_custom_call.1} parent=43 // pred_region
          %s4728 = smul.u32 16, %s18
        $region52: #{tpu_custom_call.1} parent=43 // pred_fallthru
          _
      $region44: #{tpu_custom_call.1} parent=5 // pred_fallthru
        _
      %p4729 = scmp.le.s32.totalorder 2, %s13
      // Predicated region
      $region53: #{tpu_custom_call.1} parent=5 // pred_check
        %p4730 = pneg %p4729
      $region54: #{tpu_custom_call.1} parent=5 // pred_check_branch
        %4732 = sbr.rel (%p4730) target = $region56
      $region55: #{tpu_custom_call.1} parent=5 // pred_region
        %s4733 = ssub.s32 %s13, 2
        // Predicated region
        $region57: #{tpu_custom_call.1} parent=55 // pred_check
          %p4734 = pneg %p173
        $region58: #{tpu_custom_call.1} parent=55 // pred_check_branch
          %4736 = sbr.rel (%p4734) target = $region60
        $region59: #{tpu_custom_call.1} parent=55 // pred_region
          %s4737 = smul.u32 16, %s19
          %p4738 = scmp.lt.s32.totalorder %s4737, 31
          %s4739 = scalar_select %p4738, %s4737, 31
          %s4740 = smul.addr %s4739, 8
          %s4741 = scalar_lea.vmem %s6, %s4740
        $region60: #{tpu_custom_call.1} parent=55 // pred_fallthru
          _
      $region56: #{tpu_custom_call.1} parent=5 // pred_fallthru
        _
    $region6: #{tpu_custom_call.1} parent=1 // loop_footer
      %s17 = sadd.s32 1, %s13
    $region7: #{tpu_custom_call.1} parent=1 // loop_footer_branch
      %12 = sbr.rel target = $region3
    $region8: #{tpu_custom_call.1} parent=1 // loop_exit
      _
    %4742 = vsyncpa [#allocation3], 1
    %s4743 = scalar_lea.sflag [#allocation3], 1
    %4744 = vsyncpa %s4743, 1

</llo_original>
